<compile_context>
chip_gen: v7x
topology: tpu7x:2x2x1
jax: 0.10.0
libtpu: 0.0.40
codegen_flags: <defaults>
</compile_context>

<pallas_src>
import jax
import jax.numpy as jnp
from jax.experimental import pallas as pl
from jax.experimental.pallas import tpu as pltpu

# ------------------------- small synthetic config -------------------------
B = 2
AUDIO_PATCH = 32
AUDIO_SEQ = 8
AUDIO_LEN = AUDIO_SEQ * AUDIO_PATCH      # 256 raw samples
AUDIO_HIDDEN = 128                        # lane-dense
TEXT_SEQ = 8
TOTAL_SEQ = AUDIO_SEQ + TEXT_SEQ          # 16
LM_HIDDEN = 128                           # lane-dense
N_HEADS = 2                               # head dim 64
VOCAB = 128                               # lane-dense
MLP_MULT = 4


# --------------------------- in-kernel helpers -----------------------------
def _layer_norm(x, g, b):
    mu = jnp.mean(x, axis=-1, keepdims=True)
    var = jnp.mean(jnp.square(x - mu), axis=-1, keepdims=True)
    return (x - mu) * jax.lax.rsqrt(var + 1e-5) * g + b


def _transformer_block(xf, batch, seq, key_mask, causal, blk_refs):
    """Pre-LN transformer block on flattened activations xf: [batch*seq, d]."""
    (ln1g, ln1b, wqkv, bqkv, wo, bo,
     ln2g, ln2b, wfc1, bfc1, wfc2, bfc2) = [r[...] for r in blk_refs]
    d = xf.shape[-1]
    dh = d // N_HEADS
    scale = 1.0 / (dh ** 0.5)

    h = _layer_norm(xf, ln1g, ln1b)
    qkv = jnp.dot(h, wqkv, preferred_element_type=jnp.float32) + bqkv  # [B*T, 3d]

    if causal:
        r = jax.lax.broadcasted_iota(jnp.int32, (seq, seq), 0)
        c = jax.lax.broadcasted_iota(jnp.int32, (seq, seq), 1)
        cmask = (c <= r)[None, :, :]                       # [1, seq, seq]
    if key_mask is not None:
        kvalid = key_mask[:, None, :] > 0.5                # [batch, 1, seq]

    # Accumulate attention output projection per head: attn @ Wo = sum_h o_h @ Wo_h
    attn_out = jnp.zeros((batch * seq, d), jnp.float32) + bo
    for hd in range(N_HEADS):                              # static unroll
        lo, hi = hd * dh, (hd + 1) * dh
        qh = qkv[:, lo:hi].reshape(batch, seq, dh)
        kh = qkv[:, d + lo:d + hi].reshape(batch, seq, dh)
        vh = qkv[:, 2 * d + lo:2 * d + hi].reshape(batch, seq, dh)
        s = jnp.einsum("bqd,bkd->bqk", qh, kh,
                       preferred_element_type=jnp.float32) * scale    # [b, T, T]
        if key_mask is not None:
            s = jnp.where(kvalid, s, -1e30)
        if causal:
            s = jnp.where(cmask, s, -1e30)
        s = s - jnp.max(s, axis=-1, keepdims=True)
        p = jnp.exp(s)
        if key_mask is not None:                           # fully-masked-row guard
            p = jnp.where(kvalid, p, 0.0)
        if causal:
            p = jnp.where(cmask, p, 0.0)
        denom = jnp.maximum(jnp.sum(p, axis=-1, keepdims=True), 1e-20)
        p = p * pl.reciprocal(denom, approx=True)          # EUP reciprocal
        oh = jnp.einsum("bqk,bkd->bqd", p, vh,
                        preferred_element_type=jnp.float32)            # [b, T, dh]
        attn_out = attn_out + jnp.dot(oh.reshape(batch * seq, dh), wo[lo:hi, :],
                                      preferred_element_type=jnp.float32)

    x1 = xf + attn_out
    h2 = _layer_norm(x1, ln2g, ln2b)
    m = jax.nn.gelu(jnp.dot(h2, wfc1, preferred_element_type=jnp.float32) + bfc1)
    m = jnp.dot(m, wfc2, preferred_element_type=jnp.float32) + bfc2
    return x1 + m


# ------------------------------ fused kernel -------------------------------
def _alm_kernel(*refs):
    (frames_ref, ids_ref, kmask_ref,
     patch_w_ref, patch_b_ref, apos_ref) = refs[:6]
    a_blk = refs[6:18]
    a_lnfg_ref, a_lnfb_ref, mp_w_ref, mp_b_ref = refs[18:22]
    tok_ref, dpos_ref = refs[22:24]
    d_blk = refs[24:36]
    d_lnfg_ref, d_lnfb_ref, head_w_ref, head_b_ref = refs[36:40]
    out_ref = refs[40]
    dec_buf = refs[41]                                     # VMEM scratch [B, T, D]

    # ---- audio_encoder(audio): patch embed + pos + transformer block + LN ----
    frames = frames_ref[...]                               # [B*AS, PATCH]
    x = jnp.dot(frames, patch_w_ref[...],
                preferred_element_type=jnp.float32) + patch_b_ref[...]
    x = (x.reshape(B, AUDIO_SEQ, AUDIO_HIDDEN)
         + apos_ref[...][None, :, :]).reshape(B * AUDIO_SEQ, AUDIO_HIDDEN)
    x = _transformer_block(x, B, AUDIO_SEQ, None, False, a_blk)
    x = _layer_norm(x, a_lnfg_ref[...], a_lnfb_ref[...])

    # ---- ModalityProjector ----
    audio_embeds = jnp.dot(x, mp_w_ref[...],
                           preferred_element_type=jnp.float32) + mp_b_ref[...]

    # ---- decoder.token_embedding via one-hot MXU matmul ----
    ids = ids_ref[...]                                     # [B, S] int32
    iota_v = jax.lax.broadcasted_iota(jnp.int32, (B, TEXT_SEQ, VOCAB), 2)
    onehot = (iota_v == ids[:, :, None]).astype(jnp.float32).reshape(B * TEXT_SEQ, VOCAB)
    text_embeds = jnp.dot(onehot, tok_ref[...],
                          preferred_element_type=jnp.float32)           # [B*S, D]

    # ---- concat [audio_embeds, text_embeds] along sequence (via VMEM scratch) ----
    dec_buf[:, 0:AUDIO_SEQ, :] = audio_embeds.reshape(B, AUDIO_SEQ, LM_HIDDEN)
    dec_buf[:, AUDIO_SEQ:TOTAL_SEQ, :] = text_embeds.reshape(B, TEXT_SEQ, LM_HIDDEN)
    dec_x = (dec_buf[...] + dpos_ref[...][None, :, :]).reshape(B * TOTAL_SEQ, LM_HIDDEN)

    # ---- causal decoder block + final LN + LM head ----
    kmask = kmask_ref[...]                                 # [B, T] (1 = keep key)
    y = _transformer_block(dec_x, B, TOTAL_SEQ, kmask, True, d_blk)
    y = _layer_norm(y, d_lnfg_ref[...], d_lnfb_ref[...])
    logits = jnp.dot(y, head_w_ref[...],
                     preferred_element_type=jnp.float32) + head_b_ref[...]
    out_ref[...] = logits.reshape(B, TOTAL_SEQ, VOCAB)


# ------------------------------ host wrapper --------------------------------
def alm_forward(params, input_ids, audio, attention_mask):
    """Mirrors AudioLanguageModel.forward with targets=None -> logits."""
    frames = audio.reshape(B * AUDIO_SEQ, AUDIO_PATCH)
    audio_attention_mask = jnp.ones((B, AUDIO_SEQ), attention_mask.dtype)
    combined_mask = jnp.concatenate([audio_attention_mask, attention_mask],
                                    axis=1).astype(jnp.float32)          # [B, T]

    def row(v):
        return v.reshape(1, -1)

    def blk(p):
        return [row(p["ln1_g"]), row(p["ln1_b"]), p["wqkv"], row(p["bqkv"]),
                p["wo"], row(p["bo"]), row(p["ln2_g"]), row(p["ln2_b"]),
                p["wfc1"], row(p["bfc1"]), p["wfc2"], row(p["bfc2"])]

    inputs = [frames, input_ids.astype(jnp.int32), combined_mask,
              params["patch_w"], row(params["patch_b"]), params["audio_pos"],
              *blk(params["audio_block"]),
              row(params["audio_lnf_g"]), row(params["audio_lnf_b"]),
              params["mp_w"], row(params["mp_b"]),
              params["token_emb"], params["dec_pos"],
              *blk(params["dec_block"]),
              row(params["dec_lnf_g"]), row(params["dec_lnf_b"]),
              params["head_w"], row(params["head_b"])]

    in_specs = [pl.BlockSpec(x.shape, lambda i, nd=x.ndim: (0,) * nd) for x in inputs]

    return pl.pallas_call(
        _alm_kernel,
        out_shape=jax.ShapeDtypeStruct((B, TOTAL_SEQ, VOCAB), jnp.float32),
        grid=(1,),
        in_specs=in_specs,
        out_specs=pl.BlockSpec((B, TOTAL_SEQ, VOCAB), lambda i: (0, 0, 0)),
        scratch_shapes=[pltpu.VMEM((B, TOTAL_SEQ, LM_HIDDEN), jnp.float32)],
        compiler_params=pltpu.CompilerParams(
            dimension_semantics=("arbitrary",),
            vmem_limit_bytes=32 * 1024 * 1024),
    )(*inputs)


# ------------------------------ parameter init -----------------------------
def init_params(key):
    keys = iter(jax.random.split(key, 32))

    def nrm(shape):
        return 0.02 * jax.random.normal(next(keys), shape, jnp.float32)

    def block(d):
        return dict(
            ln1_g=jnp.ones((d,), jnp.float32), ln1_b=jnp.zeros((d,), jnp.float32),
            wqkv=nrm((d, 3 * d)), bqkv=jnp.zeros((3 * d,), jnp.float32),
            wo=nrm((d, d)), bo=jnp.zeros((d,), jnp.float32),
            ln2_g=jnp.ones((d,), jnp.float32), ln2_b=jnp.zeros((d,), jnp.float32),
            wfc1=nrm((d, MLP_MULT * d)), bfc1=jnp.zeros((MLP_MULT * d,), jnp.float32),
            wfc2=nrm((MLP_MULT * d, d)), bfc2=jnp.zeros((d,), jnp.float32),
        )

    return dict(
        patch_w=nrm((AUDIO_PATCH, AUDIO_HIDDEN)),
        patch_b=jnp.zeros((AUDIO_HIDDEN,), jnp.float32),
        audio_pos=nrm((AUDIO_SEQ, AUDIO_HIDDEN)),
        audio_block=block(AUDIO_HIDDEN),
        audio_lnf_g=jnp.ones((AUDIO_HIDDEN,), jnp.float32),
        audio_lnf_b=jnp.zeros((AUDIO_HIDDEN,), jnp.float32),
        mp_w=nrm((AUDIO_HIDDEN, LM_HIDDEN)),
        mp_b=jnp.zeros((LM_HIDDEN,), jnp.float32),
        token_emb=nrm((VOCAB, LM_HIDDEN)),
        dec_pos=nrm((TOTAL_SEQ, LM_HIDDEN)),
        dec_block=block(LM_HIDDEN),
        dec_lnf_g=jnp.ones((LM_HIDDEN,), jnp.float32),
        dec_lnf_b=jnp.zeros((LM_HIDDEN,), jnp.float32),
        head_w=nrm((LM_HIDDEN, VOCAB)),
        head_b=jnp.zeros((VOCAB,), jnp.float32),
    )


# ---------------------------------- main ------------------------------------
if __name__ == "__main__":
    root = jax.random.PRNGKey(0)
    k_params, k_ids, k_audio = jax.random.split(root, 3)

    params = init_params(k_params)
    input_ids = jax.random.randint(k_ids, (B, TEXT_SEQ), 0, VOCAB, dtype=jnp.int32)
    audio = jax.random.normal(k_audio, (B, AUDIO_LEN), jnp.float32)
    attention_mask = jnp.ones((B, TEXT_SEQ), jnp.int32)

    logits = jax.jit(alm_forward)(params, input_ids, audio, attention_mask)
    logits = jax.block_until_ready(logits)

    assert logits.shape == (B, TOTAL_SEQ, VOCAB), logits.shape
    assert bool(jnp.all(jnp.isfinite(logits)))
    print("KERNEL_OK")
</pallas_src>

<mosaic_0001>
module attributes {stable_mosaic.version = 11 : i64} {
  func.func @_alm_kernel(%arg0: i32, %arg1: memref<16x32xf32, #tpu.memory_space<vmem>>, %arg2: memref<2x8xi32, #tpu.memory_space<vmem>>, %arg3: memref<2x16xf32, #tpu.memory_space<vmem>>, %arg4: memref<32x128xf32, #tpu.memory_space<vmem>>, %arg5: memref<1x128xf32, #tpu.memory_space<vmem>>, %arg6: memref<8x128xf32, #tpu.memory_space<vmem>>, %arg7: memref<1x128xf32, #tpu.memory_space<vmem>>, %arg8: memref<1x128xf32, #tpu.memory_space<vmem>>, %arg9: memref<128x384xf32, #tpu.memory_space<vmem>>, %arg10: memref<1x384xf32, #tpu.memory_space<vmem>>, %arg11: memref<128x128xf32, #tpu.memory_space<vmem>>, %arg12: memref<1x128xf32, #tpu.memory_space<vmem>>, %arg13: memref<1x128xf32, #tpu.memory_space<vmem>>, %arg14: memref<1x128xf32, #tpu.memory_space<vmem>>, %arg15: memref<128x512xf32, #tpu.memory_space<vmem>>, %arg16: memref<1x512xf32, #tpu.memory_space<vmem>>, %arg17: memref<512x128xf32, #tpu.memory_space<vmem>>, %arg18: memref<1x128xf32, #tpu.memory_space<vmem>>, %arg19: memref<1x128xf32, #tpu.memory_space<vmem>>, %arg20: memref<1x128xf32, #tpu.memory_space<vmem>>, %arg21: memref<128x128xf32, #tpu.memory_space<vmem>>, %arg22: memref<1x128xf32, #tpu.memory_space<vmem>>, %arg23: memref<128x128xf32, #tpu.memory_space<vmem>>, %arg24: memref<16x128xf32, #tpu.memory_space<vmem>>, %arg25: memref<1x128xf32, #tpu.memory_space<vmem>>, %arg26: memref<1x128xf32, #tpu.memory_space<vmem>>, %arg27: memref<128x384xf32, #tpu.memory_space<vmem>>, %arg28: memref<1x384xf32, #tpu.memory_space<vmem>>, %arg29: memref<128x128xf32, #tpu.memory_space<vmem>>, %arg30: memref<1x128xf32, #tpu.memory_space<vmem>>, %arg31: memref<1x128xf32, #tpu.memory_space<vmem>>, %arg32: memref<1x128xf32, #tpu.memory_space<vmem>>, %arg33: memref<128x512xf32, #tpu.memory_space<vmem>>, %arg34: memref<1x512xf32, #tpu.memory_space<vmem>>, %arg35: memref<512x128xf32, #tpu.memory_space<vmem>>, %arg36: memref<1x128xf32, #tpu.memory_space<vmem>>, %arg37: memref<1x128xf32, #tpu.memory_space<vmem>>, %arg38: memref<1x128xf32, #tpu.memory_space<vmem>>, %arg39: memref<128x128xf32, #tpu.memory_space<vmem>>, %arg40: memref<1x128xf32, #tpu.memory_space<vmem>>, %arg41: memref<2x16x128xf32, #tpu.memory_space<vmem>>, %arg42: memref<2x16x128xf32, #tpu.memory_space<vmem>>) attributes {dimension_semantics = [#tpu.dimension_semantics<arbitrary>], iteration_bounds = array<i64: 1>, scalar_prefetch = 0 : i64, scratch_operands = 1 : i64, tpu.core_type = #tpu.core_type<tc>, window_params = [{pipeline_mode = #tpu.pipeline_mode<synchronous>, transform_indices = @transform_0, window_bounds = array<i64: 16, 32>}, {pipeline_mode = #tpu.pipeline_mode<synchronous>, transform_indices = @transform_1, window_bounds = array<i64: 2, 8>}, {pipeline_mode = #tpu.pipeline_mode<synchronous>, transform_indices = @transform_2, window_bounds = array<i64: 2, 16>}, {pipeline_mode = #tpu.pipeline_mode<synchronous>, transform_indices = @transform_3, window_bounds = array<i64: 32, 128>}, {pipeline_mode = #tpu.pipeline_mode<synchronous>, transform_indices = @transform_4, window_bounds = array<i64: 1, 128>}, {pipeline_mode = #tpu.pipeline_mode<synchronous>, transform_indices = @transform_5, window_bounds = array<i64: 8, 128>}, {pipeline_mode = #tpu.pipeline_mode<synchronous>, transform_indices = @transform_6, window_bounds = array<i64: 1, 128>}, {pipeline_mode = #tpu.pipeline_mode<synchronous>, transform_indices = @transform_7, window_bounds = array<i64: 1, 128>}, {pipeline_mode = #tpu.pipeline_mode<synchronous>, transform_indices = @transform_8, window_bounds = array<i64: 128, 384>}, {pipeline_mode = #tpu.pipeline_mode<synchronous>, transform_indices = @transform_9, window_bounds = array<i64: 1, 384>}, {pipeline_mode = #tpu.pipeline_mode<synchronous>, transform_indices = @transform_10, window_bounds = array<i64: 128, 128>}, {pipeline_mode = #tpu.pipeline_mode<synchronous>, transform_indices = @transform_11, window_bounds = array<i64: 1, 128>}, {pipeline_mode = #tpu.pipeline_mode<synchronous>, transform_indices = @transform_12, window_bounds = array<i64: 1, 128>}, {pipeline_mode = #tpu.pipeline_mode<synchronous>, transform_indices = @transform_13, window_bounds = array<i64: 1, 128>}, {pipeline_mode = #tpu.pipeline_mode<synchronous>, transform_indices = @transform_14, window_bounds = array<i64: 128, 512>}, {pipeline_mode = #tpu.pipeline_mode<synchronous>, transform_indices = @transform_15, window_bounds = array<i64: 1, 512>}, {pipeline_mode = #tpu.pipeline_mode<synchronous>, transform_indices = @transform_16, window_bounds = array<i64: 512, 128>}, {pipeline_mode = #tpu.pipeline_mode<synchronous>, transform_indices = @transform_17, window_bounds = array<i64: 1, 128>}, {pipeline_mode = #tpu.pipeline_mode<synchronous>, transform_indices = @transform_18, window_bounds = array<i64: 1, 128>}, {pipeline_mode = #tpu.pipeline_mode<synchronous>, transform_indices = @transform_19, window_bounds = array<i64: 1, 128>}, {pipeline_mode = #tpu.pipeline_mode<synchronous>, transform_indices = @transform_20, window_bounds = array<i64: 128, 128>}, {pipeline_mode = #tpu.pipeline_mode<synchronous>, transform_indices = @transform_21, window_bounds = array<i64: 1, 128>}, {pipeline_mode = #tpu.pipeline_mode<synchronous>, transform_indices = @transform_22, window_bounds = array<i64: 128, 128>}, {pipeline_mode = #tpu.pipeline_mode<synchronous>, transform_indices = @transform_23, window_bounds = array<i64: 16, 128>}, {pipeline_mode = #tpu.pipeline_mode<synchronous>, transform_indices = @transform_24, window_bounds = array<i64: 1, 128>}, {pipeline_mode = #tpu.pipeline_mode<synchronous>, transform_indices = @transform_25, window_bounds = array<i64: 1, 128>}, {pipeline_mode = #tpu.pipeline_mode<synchronous>, transform_indices = @transform_26, window_bounds = array<i64: 128, 384>}, {pipeline_mode = #tpu.pipeline_mode<synchronous>, transform_indices = @transform_27, window_bounds = array<i64: 1, 384>}, {pipeline_mode = #tpu.pipeline_mode<synchronous>, transform_indices = @transform_28, window_bounds = array<i64: 128, 128>}, {pipeline_mode = #tpu.pipeline_mode<synchronous>, transform_indices = @transform_29, window_bounds = array<i64: 1, 128>}, {pipeline_mode = #tpu.pipeline_mode<synchronous>, transform_indices = @transform_30, window_bounds = array<i64: 1, 128>}, {pipeline_mode = #tpu.pipeline_mode<synchronous>, transform_indices = @transform_31, window_bounds = array<i64: 1, 128>}, {pipeline_mode = #tpu.pipeline_mode<synchronous>, transform_indices = @transform_32, window_bounds = array<i64: 128, 512>}, {pipeline_mode = #tpu.pipeline_mode<synchronous>, transform_indices = @transform_33, window_bounds = array<i64: 1, 512>}, {pipeline_mode = #tpu.pipeline_mode<synchronous>, transform_indices = @transform_34, window_bounds = array<i64: 512, 128>}, {pipeline_mode = #tpu.pipeline_mode<synchronous>, transform_indices = @transform_35, window_bounds = array<i64: 1, 128>}, {pipeline_mode = #tpu.pipeline_mode<synchronous>, transform_indices = @transform_36, window_bounds = array<i64: 1, 128>}, {pipeline_mode = #tpu.pipeline_mode<synchronous>, transform_indices = @transform_37, window_bounds = array<i64: 1, 128>}, {pipeline_mode = #tpu.pipeline_mode<synchronous>, transform_indices = @transform_38, window_bounds = array<i64: 128, 128>}, {pipeline_mode = #tpu.pipeline_mode<synchronous>, transform_indices = @transform_39, window_bounds = array<i64: 1, 128>}, {pipeline_mode = #tpu.pipeline_mode<synchronous>, transform_indices = @transform_40, window_bounds = array<i64: 2, 16, 128>}]} {
    %c0 = arith.constant 0 : index
    %c0_0 = arith.constant 0 : index
    %0 = vector.load %arg1[%c0, %c0_0] : memref<16x32xf32, #tpu.memory_space<vmem>>, vector<16x32xf32>
    %c0_1 = arith.constant 0 : index
    %c0_2 = arith.constant 0 : index
    %1 = vector.load %arg4[%c0_1, %c0_2] : memref<32x128xf32, #tpu.memory_space<vmem>>, vector<32x128xf32>
    %cst = arith.constant dense<0.000000e+00> : vector<16x128xf32>
    %2 = tpu.matmul %0, %1, %cst {dimension_numbers = #tpu.dot_dimension_numbers<[1], [0], [0], [1], [0, 0, 1, 1], [], []>} : vector<16x32xf32>, vector<32x128xf32>, vector<16x128xf32> -> vector<16x128xf32>
    %c0_3 = arith.constant 0 : index
    %c0_4 = arith.constant 0 : index
    %3 = vector.load %arg5[%c0_3, %c0_4] : memref<1x128xf32, #tpu.memory_space<vmem>>, vector<1x128xf32>
    %4 = vector.broadcast %3 : vector<1x128xf32> to vector<16x128xf32>
    %5 = arith.addf %2, %4 : vector<16x128xf32>
    %6 = vector.shape_cast %5 : vector<16x128xf32> to vector<2x8x128xf32>
    %c0_5 = arith.constant 0 : index
    %c0_6 = arith.constant 0 : index
    %7 = vector.load %arg6[%c0_5, %c0_6] : memref<8x128xf32, #tpu.memory_space<vmem>>, vector<8x128xf32>
    %8 = vector.shape_cast %7 : vector<8x128xf32> to vector<1x8x128xf32>
    %9 = vector.broadcast %8 : vector<1x8x128xf32> to vector<2x8x128xf32>
    %10 = arith.addf %6, %9 : vector<2x8x128xf32>
    %11 = vector.shape_cast %10 : vector<2x8x128xf32> to vector<16x128xf32>
    %c0_7 = arith.constant 0 : index
    %c0_8 = arith.constant 0 : index
    %12 = vector.load %arg7[%c0_7, %c0_8] : memref<1x128xf32, #tpu.memory_space<vmem>>, vector<1x128xf32>
    %c0_9 = arith.constant 0 : index
    %c0_10 = arith.constant 0 : index
    %13 = vector.load %arg8[%c0_9, %c0_10] : memref<1x128xf32, #tpu.memory_space<vmem>>, vector<1x128xf32>
    %c0_11 = arith.constant 0 : index
    %c0_12 = arith.constant 0 : index
    %14 = vector.load %arg9[%c0_11, %c0_12] : memref<128x384xf32, #tpu.memory_space<vmem>>, vector<128x384xf32>
    %c0_13 = arith.constant 0 : index
    %c0_14 = arith.constant 0 : index
    %15 = vector.load %arg10[%c0_13, %c0_14] : memref<1x384xf32, #tpu.memory_space<vmem>>, vector<1x384xf32>
    %c0_15 = arith.constant 0 : index
    %c0_16 = arith.constant 0 : index
    %16 = vector.load %arg11[%c0_15, %c0_16] : memref<128x128xf32, #tpu.memory_space<vmem>>, vector<128x128xf32>
    %c0_17 = arith.constant 0 : index
    %c0_18 = arith.constant 0 : index
    %17 = vector.load %arg12[%c0_17, %c0_18] : memref<1x128xf32, #tpu.memory_space<vmem>>, vector<1x128xf32>
    %c0_19 = arith.constant 0 : index
    %c0_20 = arith.constant 0 : index
    %18 = vector.load %arg13[%c0_19, %c0_20] : memref<1x128xf32, #tpu.memory_space<vmem>>, vector<1x128xf32>
    %c0_21 = arith.constant 0 : index
    %c0_22 = arith.constant 0 : index
    %19 = vector.load %arg14[%c0_21, %c0_22] : memref<1x128xf32, #tpu.memory_space<vmem>>, vector<1x128xf32>
    %c0_23 = arith.constant 0 : index
    %c0_24 = arith.constant 0 : index
    %20 = vector.load %arg15[%c0_23, %c0_24] : memref<128x512xf32, #tpu.memory_space<vmem>>, vector<128x512xf32>
    %c0_25 = arith.constant 0 : index
    %c0_26 = arith.constant 0 : index
    %21 = vector.load %arg16[%c0_25, %c0_26] : memref<1x512xf32, #tpu.memory_space<vmem>>, vector<1x512xf32>
    %c0_27 = arith.constant 0 : index
    %c0_28 = arith.constant 0 : index
    %22 = vector.load %arg17[%c0_27, %c0_28] : memref<512x128xf32, #tpu.memory_space<vmem>>, vector<512x128xf32>
    %c0_29 = arith.constant 0 : index
    %c0_30 = arith.constant 0 : index
    %23 = vector.load %arg18[%c0_29, %c0_30] : memref<1x128xf32, #tpu.memory_space<vmem>>, vector<1x128xf32>
    %cst_31 = arith.constant dense<0.000000e+00> : vector<16xf32>
    %24 = vector.multi_reduction <add>, %11, %cst_31 [1] : vector<16x128xf32> to vector<16xf32>
    %25 = vector.shape_cast %24 : vector<16xf32> to vector<16x1xf32>
    %cst_32 = arith.constant 1.280000e+02 : f32
    %26 = vector.broadcast %cst_32 : f32 to vector<16x1xf32>
    %27 = arith.divf %25, %26 : vector<16x1xf32>
    %28 = vector.broadcast %27 : vector<16x1xf32> to vector<16x128xf32>
    %29 = arith.subf %11, %28 : vector<16x128xf32>
    %30 = arith.mulf %29, %29 : vector<16x128xf32>
    %cst_33 = arith.constant dense<0.000000e+00> : vector<16xf32>
    %31 = vector.multi_reduction <add>, %30, %cst_33 [1] : vector<16x128xf32> to vector<16xf32>
    %32 = vector.shape_cast %31 : vector<16xf32> to vector<16x1xf32>
    %cst_34 = arith.constant 1.280000e+02 : f32
    %33 = vector.broadcast %cst_34 : f32 to vector<16x1xf32>
    %34 = arith.divf %32, %33 : vector<16x1xf32>
    %35 = vector.broadcast %27 : vector<16x1xf32> to vector<16x128xf32>
    %36 = arith.subf %11, %35 : vector<16x128xf32>
    %cst_35 = arith.constant 9.99999974E-6 : f32
    %37 = vector.broadcast %cst_35 : f32 to vector<16x1xf32>
    %38 = arith.addf %34, %37 : vector<16x1xf32>
    %39 = math.rsqrt %38 : vector<16x1xf32>
    %40 = vector.broadcast %39 : vector<16x1xf32> to vector<16x128xf32>
    %41 = arith.mulf %36, %40 : vector<16x128xf32>
    %42 = vector.broadcast %12 : vector<1x128xf32> to vector<16x128xf32>
    %43 = arith.mulf %41, %42 : vector<16x128xf32>
    %44 = vector.broadcast %13 : vector<1x128xf32> to vector<16x128xf32>
    %45 = arith.addf %43, %44 : vector<16x128xf32>
    %cst_36 = arith.constant dense<0.000000e+00> : vector<16x384xf32>
    %46 = tpu.matmul %45, %14, %cst_36 {dimension_numbers = #tpu.dot_dimension_numbers<[1], [0], [0], [1], [0, 0, 1, 1], [], []>} : vector<16x128xf32>, vector<128x384xf32>, vector<16x384xf32> -> vector<16x384xf32>
    %47 = vector.broadcast %15 : vector<1x384xf32> to vector<16x384xf32>
    %48 = arith.addf %46, %47 : vector<16x384xf32>
    %cst_37 = arith.constant 0.000000e+00 : f32
    %49 = vector.broadcast %cst_37 : f32 to vector<16x128xf32>
    %50 = vector.broadcast %17 : vector<1x128xf32> to vector<16x128xf32>
    %51 = arith.addf %49, %50 : vector<16x128xf32>
    %52 = vector.extract_strided_slice %48 {offsets = [0, 0], sizes = [16, 64], strides = [1, 1]} : vector<16x384xf32> to vector<16x64xf32>
    %53 = vector.shape_cast %52 : vector<16x64xf32> to vector<2x8x64xf32>
    %54 = vector.extract_strided_slice %48 {offsets = [0, 128], sizes = [16, 64], strides = [1, 1]} : vector<16x384xf32> to vector<16x64xf32>
    %55 = vector.shape_cast %54 : vector<16x64xf32> to vector<2x8x64xf32>
    %56 = vector.extract_strided_slice %48 {offsets = [0, 256], sizes = [16, 64], strides = [1, 1]} : vector<16x384xf32> to vector<16x64xf32>
    %57 = vector.shape_cast %56 : vector<16x64xf32> to vector<2x8x64xf32>
    "tpu.trace_start"() <{level = 10 : i32, message = "bqd,bkd->bqk"}> : () -> ()
    %cst_38 = arith.constant dense<0.000000e+00> : vector<2x8x8xf32>
    %58 = tpu.matmul %53, %55, %cst_38 {dimension_numbers = #tpu.dot_dimension_numbers<[2], [2], [1], [1], [0, 0, 0, 1, 1, 1], [0], [0]>} : vector<2x8x64xf32>, vector<2x8x64xf32>, vector<2x8x8xf32> -> vector<2x8x8xf32>
    "tpu.trace_stop"() : () -> ()
    %cst_39 = arith.constant 1.250000e-01 : f32
    %59 = vector.broadcast %cst_39 : f32 to vector<2x8x8xf32>
    %60 = arith.mulf %58, %59 : vector<2x8x8xf32>
    %cst_40 = arith.constant dense<0xFF800000> : vector<2x8xf32>
    %61 = vector.multi_reduction <maximumf>, %60, %cst_40 [2] : vector<2x8x8xf32> to vector<2x8xf32>
    %62 = vector.shape_cast %61 : vector<2x8xf32> to vector<2x8x1xf32>
    %63 = vector.broadcast %62 : vector<2x8x1xf32> to vector<2x8x8xf32>
    %64 = arith.subf %60, %63 : vector<2x8x8xf32>
    %65 = math.exp %64 : vector<2x8x8xf32>
    %cst_41 = arith.constant dense<0.000000e+00> : vector<2x8xf32>
    %66 = vector.multi_reduction <add>, %65, %cst_41 [2] : vector<2x8x8xf32> to vector<2x8xf32>
    %67 = vector.shape_cast %66 : vector<2x8xf32> to vector<2x8x1xf32>
    %cst_42 = arith.constant 9.99999968E-21 : f32
    %68 = vector.broadcast %cst_42 : f32 to vector<2x8x1xf32>
    %69 = arith.maximumf %67, %68 : vector<2x8x1xf32>
    %70 = tpu.reciprocal %69 {approx = true} : vector<2x8x1xf32> -> vector<2x8x1xf32>
    %71 = vector.broadcast %70 : vector<2x8x1xf32> to vector<2x8x8xf32>
    %72 = arith.mulf %65, %71 : vector<2x8x8xf32>
    "tpu.trace_start"() <{level = 10 : i32, message = "bqk,bkd->bqd"}> : () -> ()
    %cst_43 = arith.constant dense<0.000000e+00> : vector<2x8x64xf32>
    %73 = tpu.matmul %72, %57, %cst_43 {dimension_numbers = #tpu.dot_dimension_numbers<[2], [1], [1], [2], [0, 0, 0, 1, 1, 2], [0], [0]>} : vector<2x8x8xf32>, vector<2x8x64xf32>, vector<2x8x64xf32> -> vector<2x8x64xf32>
    "tpu.trace_stop"() : () -> ()
    %74 = vector.shape_cast %73 : vector<2x8x64xf32> to vector<16x64xf32>
    %75 = vector.extract_strided_slice %16 {offsets = [0, 0], sizes = [64, 128], strides = [1, 1]} : vector<128x128xf32> to vector<64x128xf32>
    %cst_44 = arith.constant dense<0.000000e+00> : vector<16x128xf32>
    %76 = tpu.matmul %74, %75, %cst_44 {dimension_numbers = #tpu.dot_dimension_numbers<[1], [0], [0], [1], [0, 0, 1, 1], [], []>} : vector<16x64xf32>, vector<64x128xf32>, vector<16x128xf32> -> vector<16x128xf32>
    %77 = arith.addf %51, %76 : vector<16x128xf32>
    %78 = vector.extract_strided_slice %48 {offsets = [0, 64], sizes = [16, 64], strides = [1, 1]} : vector<16x384xf32> to vector<16x64xf32>
    %79 = vector.shape_cast %78 : vector<16x64xf32> to vector<2x8x64xf32>
    %80 = vector.extract_strided_slice %48 {offsets = [0, 192], sizes = [16, 64], strides = [1, 1]} : vector<16x384xf32> to vector<16x64xf32>
    %81 = vector.shape_cast %80 : vector<16x64xf32> to vector<2x8x64xf32>
    %82 = vector.extract_strided_slice %48 {offsets = [0, 320], sizes = [16, 64], strides = [1, 1]} : vector<16x384xf32> to vector<16x64xf32>
    %83 = vector.shape_cast %82 : vector<16x64xf32> to vector<2x8x64xf32>
    "tpu.trace_start"() <{level = 10 : i32, message = "bqd,bkd->bqk"}> : () -> ()
    %cst_45 = arith.constant dense<0.000000e+00> : vector<2x8x8xf32>
    %84 = tpu.matmul %79, %81, %cst_45 {dimension_numbers = #tpu.dot_dimension_numbers<[2], [2], [1], [1], [0, 0, 0, 1, 1, 1], [0], [0]>} : vector<2x8x64xf32>, vector<2x8x64xf32>, vector<2x8x8xf32> -> vector<2x8x8xf32>
    "tpu.trace_stop"() : () -> ()
    %cst_46 = arith.constant 1.250000e-01 : f32
    %85 = vector.broadcast %cst_46 : f32 to vector<2x8x8xf32>
    %86 = arith.mulf %84, %85 : vector<2x8x8xf32>
    %cst_47 = arith.constant dense<0xFF800000> : vector<2x8xf32>
    %87 = vector.multi_reduction <maximumf>, %86, %cst_47 [2] : vector<2x8x8xf32> to vector<2x8xf32>
    %88 = vector.shape_cast %87 : vector<2x8xf32> to vector<2x8x1xf32>
    %89 = vector.broadcast %88 : vector<2x8x1xf32> to vector<2x8x8xf32>
    %90 = arith.subf %86, %89 : vector<2x8x8xf32>
    %91 = math.exp %90 : vector<2x8x8xf32>
    %cst_48 = arith.constant dense<0.000000e+00> : vector<2x8xf32>
    %92 = vector.multi_reduction <add>, %91, %cst_48 [2] : vector<2x8x8xf32> to vector<2x8xf32>
    %93 = vector.shape_cast %92 : vector<2x8xf32> to vector<2x8x1xf32>
    %cst_49 = arith.constant 9.99999968E-21 : f32
    %94 = vector.broadcast %cst_49 : f32 to vector<2x8x1xf32>
    %95 = arith.maximumf %93, %94 : vector<2x8x1xf32>
    %96 = tpu.reciprocal %95 {approx = true} : vector<2x8x1xf32> -> vector<2x8x1xf32>
    %97 = vector.broadcast %96 : vector<2x8x1xf32> to vector<2x8x8xf32>
    %98 = arith.mulf %91, %97 : vector<2x8x8xf32>
    "tpu.trace_start"() <{level = 10 : i32, message = "bqk,bkd->bqd"}> : () -> ()
    %cst_50 = arith.constant dense<0.000000e+00> : vector<2x8x64xf32>
    %99 = tpu.matmul %98, %83, %cst_50 {dimension_numbers = #tpu.dot_dimension_numbers<[2], [1], [1], [2], [0, 0, 0, 1, 1, 2], [0], [0]>} : vector<2x8x8xf32>, vector<2x8x64xf32>, vector<2x8x64xf32> -> vector<2x8x64xf32>
    "tpu.trace_stop"() : () -> ()
    %100 = vector.shape_cast %99 : vector<2x8x64xf32> to vector<16x64xf32>
    %101 = vector.extract_strided_slice %16 {offsets = [64, 0], sizes = [64, 128], strides = [1, 1]} : vector<128x128xf32> to vector<64x128xf32>
    %cst_51 = arith.constant dense<0.000000e+00> : vector<16x128xf32>
    %102 = tpu.matmul %100, %101, %cst_51 {dimension_numbers = #tpu.dot_dimension_numbers<[1], [0], [0], [1], [0, 0, 1, 1], [], []>} : vector<16x64xf32>, vector<64x128xf32>, vector<16x128xf32> -> vector<16x128xf32>
    %103 = arith.addf %77, %102 : vector<16x128xf32>
    %104 = arith.addf %11, %103 : vector<16x128xf32>
    %cst_52 = arith.constant dense<0.000000e+00> : vector<16xf32>
    %105 = vector.multi_reduction <add>, %104, %cst_52 [1] : vector<16x128xf32> to vector<16xf32>
    %106 = vector.shape_cast %105 : vector<16xf32> to vector<16x1xf32>
    %cst_53 = arith.constant 1.280000e+02 : f32
    %107 = vector.broadcast %cst_53 : f32 to vector<16x1xf32>
    %108 = arith.divf %106, %107 : vector<16x1xf32>
    %109 = vector.broadcast %108 : vector<16x1xf32> to vector<16x128xf32>
    %110 = arith.subf %104, %109 : vector<16x128xf32>
    %111 = arith.mulf %110, %110 : vector<16x128xf32>
    %cst_54 = arith.constant dense<0.000000e+00> : vector<16xf32>
    %112 = vector.multi_reduction <add>, %111, %cst_54 [1] : vector<16x128xf32> to vector<16xf32>
    %113 = vector.shape_cast %112 : vector<16xf32> to vector<16x1xf32>
    %cst_55 = arith.constant 1.280000e+02 : f32
    %114 = vector.broadcast %cst_55 : f32 to vector<16x1xf32>
    %115 = arith.divf %113, %114 : vector<16x1xf32>
    %116 = vector.broadcast %108 : vector<16x1xf32> to vector<16x128xf32>
    %117 = arith.subf %104, %116 : vector<16x128xf32>
    %cst_56 = arith.constant 9.99999974E-6 : f32
    %118 = vector.broadcast %cst_56 : f32 to vector<16x1xf32>
    %119 = arith.addf %115, %118 : vector<16x1xf32>
    %120 = math.rsqrt %119 : vector<16x1xf32>
    %121 = vector.broadcast %120 : vector<16x1xf32> to vector<16x128xf32>
    %122 = arith.mulf %117, %121 : vector<16x128xf32>
    %123 = vector.broadcast %18 : vector<1x128xf32> to vector<16x128xf32>
    %124 = arith.mulf %122, %123 : vector<16x128xf32>
    %125 = vector.broadcast %19 : vector<1x128xf32> to vector<16x128xf32>
    %126 = arith.addf %124, %125 : vector<16x128xf32>
    %cst_57 = arith.constant dense<0.000000e+00> : vector<16x512xf32>
    %127 = tpu.matmul %126, %20, %cst_57 {dimension_numbers = #tpu.dot_dimension_numbers<[1], [0], [0], [1], [0, 0, 1, 1], [], []>} : vector<16x128xf32>, vector<128x512xf32>, vector<16x512xf32> -> vector<16x512xf32>
    %128 = vector.broadcast %21 : vector<1x512xf32> to vector<16x512xf32>
    %129 = arith.addf %127, %128 : vector<16x512xf32>
    %130 = arith.mulf %129, %129 : vector<16x512xf32>
    %131 = arith.mulf %129, %130 : vector<16x512xf32>
    %cst_58 = arith.constant 4.471500e-02 : f32
    %132 = vector.broadcast %cst_58 : f32 to vector<16x512xf32>
    %133 = arith.mulf %132, %131 : vector<16x512xf32>
    %134 = arith.addf %129, %133 : vector<16x512xf32>
    %cst_59 = arith.constant 0.797884583 : f32
    %135 = vector.broadcast %cst_59 : f32 to vector<16x512xf32>
    %136 = arith.mulf %135, %134 : vector<16x512xf32>
    %137 = math.tanh %136 : vector<16x512xf32>
    %cst_60 = arith.constant 1.000000e+00 : f32
    %138 = vector.broadcast %cst_60 : f32 to vector<16x512xf32>
    %139 = arith.addf %138, %137 : vector<16x512xf32>
    %cst_61 = arith.constant 5.000000e-01 : f32
    %140 = vector.broadcast %cst_61 : f32 to vector<16x512xf32>
    %141 = arith.mulf %140, %139 : vector<16x512xf32>
    %142 = arith.mulf %129, %141 : vector<16x512xf32>
    %cst_62 = arith.constant dense<0.000000e+00> : vector<16x128xf32>
    %143 = tpu.matmul %142, %22, %cst_62 {dimension_numbers = #tpu.dot_dimension_numbers<[1], [0], [0], [1], [0, 0, 1, 1], [], []>} : vector<16x512xf32>, vector<512x128xf32>, vector<16x128xf32> -> vector<16x128xf32>
    %144 = vector.broadcast %23 : vector<1x128xf32> to vector<16x128xf32>
    %145 = arith.addf %143, %144 : vector<16x128xf32>
    %146 = arith.addf %104, %145 : vector<16x128xf32>
    %c0_63 = arith.constant 0 : index
    %c0_64 = arith.constant 0 : index
    %147 = vector.load %arg19[%c0_63, %c0_64] : memref<1x128xf32, #tpu.memory_space<vmem>>, vector<1x128xf32>
    %c0_65 = arith.constant 0 : index
    %c0_66 = arith.constant 0 : index
    %148 = vector.load %arg20[%c0_65, %c0_66] : memref<1x128xf32, #tpu.memory_space<vmem>>, vector<1x128xf32>
    %cst_67 = arith.constant dense<0.000000e+00> : vector<16xf32>
    %149 = vector.multi_reduction <add>, %146, %cst_67 [1] : vector<16x128xf32> to vector<16xf32>
    %150 = vector.shape_cast %149 : vector<16xf32> to vector<16x1xf32>
    %cst_68 = arith.constant 1.280000e+02 : f32
    %151 = vector.broadcast %cst_68 : f32 to vector<16x1xf32>
    %152 = arith.divf %150, %151 : vector<16x1xf32>
    %153 = vector.broadcast %152 : vector<16x1xf32> to vector<16x128xf32>
    %154 = arith.subf %146, %153 : vector<16x128xf32>
    %155 = arith.mulf %154, %154 : vector<16x128xf32>
    %cst_69 = arith.constant dense<0.000000e+00> : vector<16xf32>
    %156 = vector.multi_reduction <add>, %155, %cst_69 [1] : vector<16x128xf32> to vector<16xf32>
    %157 = vector.shape_cast %156 : vector<16xf32> to vector<16x1xf32>
    %cst_70 = arith.constant 1.280000e+02 : f32
    %158 = vector.broadcast %cst_70 : f32 to vector<16x1xf32>
    %159 = arith.divf %157, %158 : vector<16x1xf32>
    %160 = vector.broadcast %152 : vector<16x1xf32> to vector<16x128xf32>
    %161 = arith.subf %146, %160 : vector<16x128xf32>
    %cst_71 = arith.constant 9.99999974E-6 : f32
    %162 = vector.broadcast %cst_71 : f32 to vector<16x1xf32>
    %163 = arith.addf %159, %162 : vector<16x1xf32>
    %164 = math.rsqrt %163 : vector<16x1xf32>
    %165 = vector.broadcast %164 : vector<16x1xf32> to vector<16x128xf32>
    %166 = arith.mulf %161, %165 : vector<16x128xf32>
    %167 = vector.broadcast %147 : vector<1x128xf32> to vector<16x128xf32>
    %168 = arith.mulf %166, %167 : vector<16x128xf32>
    %169 = vector.broadcast %148 : vector<1x128xf32> to vector<16x128xf32>
    %170 = arith.addf %168, %169 : vector<16x128xf32>
    %c0_72 = arith.constant 0 : index
    %c0_73 = arith.constant 0 : index
    %171 = vector.load %arg21[%c0_72, %c0_73] : memref<128x128xf32, #tpu.memory_space<vmem>>, vector<128x128xf32>
    %cst_74 = arith.constant dense<0.000000e+00> : vector<16x128xf32>
    %172 = tpu.matmul %170, %171, %cst_74 {dimension_numbers = #tpu.dot_dimension_numbers<[1], [0], [0], [1], [0, 0, 1, 1], [], []>} : vector<16x128xf32>, vector<128x128xf32>, vector<16x128xf32> -> vector<16x128xf32>
    %c0_75 = arith.constant 0 : index
    %c0_76 = arith.constant 0 : index
    %173 = vector.load %arg22[%c0_75, %c0_76] : memref<1x128xf32, #tpu.memory_space<vmem>>, vector<1x128xf32>
    %174 = vector.broadcast %173 : vector<1x128xf32> to vector<16x128xf32>
    %175 = arith.addf %172, %174 : vector<16x128xf32>
    %c0_77 = arith.constant 0 : index
    %c0_78 = arith.constant 0 : index
    %176 = vector.load %arg2[%c0_77, %c0_78] : memref<2x8xi32, #tpu.memory_space<vmem>>, vector<2x8xi32>
    %177 = tpu.iota {dimensions = array<i32: 2>} : vector<2x8x128xi32>
    %178 = vector.shape_cast %176 : vector<2x8xi32> to vector<2x8x1xi32>
    %179 = vector.broadcast %178 : vector<2x8x1xi32> to vector<2x8x128xi32>
    %180 = arith.cmpi eq, %177, %179 : vector<2x8x128xi32>
    %181 = arith.extui %180 : vector<2x8x128xi1> to vector<2x8x128xi32>
    %182 = arith.sitofp %181 : vector<2x8x128xi32> to vector<2x8x128xf32>
    %183 = vector.shape_cast %182 : vector<2x8x128xf32> to vector<16x128xf32>
    %c0_79 = arith.constant 0 : index
    %c0_80 = arith.constant 0 : index
    %184 = vector.load %arg23[%c0_79, %c0_80] : memref<128x128xf32, #tpu.memory_space<vmem>>, vector<128x128xf32>
    %cst_81 = arith.constant dense<0.000000e+00> : vector<16x128xf32>
    %185 = tpu.matmul %183, %184, %cst_81 {dimension_numbers = #tpu.dot_dimension_numbers<[1], [0], [0], [1], [0, 0, 1, 1], [], []>} : vector<16x128xf32>, vector<128x128xf32>, vector<16x128xf32> -> vector<16x128xf32>
    %186 = vector.shape_cast %175 : vector<16x128xf32> to vector<2x8x128xf32>
    %c0_82 = arith.constant 0 : index
    %c0_83 = arith.constant 0 : index
    %c0_84 = arith.constant 0 : index
    %187 = vector.load %arg42[%c0_82, %c0_83, %c0_84] : memref<2x16x128xf32, #tpu.memory_space<vmem>>, vector<2x8x128xf32>
    tpu.vector_store %arg42[%c0_82, %c0_83, %c0_84], %186 {strides = array<i32>} : memref<2x16x128xf32, #tpu.memory_space<vmem>>, vector<2x8x128xf32>,
    %188 = vector.shape_cast %185 : vector<16x128xf32> to vector<2x8x128xf32>
    %c0_85 = arith.constant 0 : index
    %c8 = arith.constant 8 : index
    %c0_86 = arith.constant 0 : index
    %189 = vector.load %arg42[%c0_85, %c8, %c0_86] : memref<2x16x128xf32, #tpu.memory_space<vmem>>, vector<2x8x128xf32>
    tpu.vector_store %arg42[%c0_85, %c8, %c0_86], %188 {strides = array<i32>} : memref<2x16x128xf32, #tpu.memory_space<vmem>>, vector<2x8x128xf32>,
    %c0_87 = arith.constant 0 : index
    %c0_88 = arith.constant 0 : index
    %c0_89 = arith.constant 0 : index
    %190 = vector.load %arg42[%c0_87, %c0_88, %c0_89] : memref<2x16x128xf32, #tpu.memory_space<vmem>>, vector<2x16x128xf32>
    %c0_90 = arith.constant 0 : index
    %c0_91 = arith.constant 0 : index
    %191 = vector.load %arg24[%c0_90, %c0_91] : memref<16x128xf32, #tpu.memory_space<vmem>>, vector<16x128xf32>
    %192 = vector.shape_cast %191 : vector<16x128xf32> to vector<1x16x128xf32>
    %193 = vector.broadcast %192 : vector<1x16x128xf32> to vector<2x16x128xf32>
    %194 = arith.addf %190, %193 : vector<2x16x128xf32>
    %195 = vector.shape_cast %194 : vector<2x16x128xf32> to vector<32x128xf32>
    %c0_92 = arith.constant 0 : index
    %c0_93 = arith.constant 0 : index
    %196 = vector.load %arg3[%c0_92, %c0_93] : memref<2x16xf32, #tpu.memory_space<vmem>>, vector<2x16xf32>
    %c0_94 = arith.constant 0 : index
    %c0_95 = arith.constant 0 : index
    %197 = vector.load %arg25[%c0_94, %c0_95] : memref<1x128xf32, #tpu.memory_space<vmem>>, vector<1x128xf32>
    %c0_96 = arith.constant 0 : index
    %c0_97 = arith.constant 0 : index
    %198 = vector.load %arg26[%c0_96, %c0_97] : memref<1x128xf32, #tpu.memory_space<vmem>>, vector<1x128xf32>
    %c0_98 = arith.constant 0 : index
    %c0_99 = arith.constant 0 : index
    %199 = vector.load %arg27[%c0_98, %c0_99] : memref<128x384xf32, #tpu.memory_space<vmem>>, vector<128x384xf32>
    %c0_100 = arith.constant 0 : index
    %c0_101 = arith.constant 0 : index
    %200 = vector.load %arg28[%c0_100, %c0_101] : memref<1x384xf32, #tpu.memory_space<vmem>>, vector<1x384xf32>
    %c0_102 = arith.constant 0 : index
    %c0_103 = arith.constant 0 : index
    %201 = vector.load %arg29[%c0_102, %c0_103] : memref<128x128xf32, #tpu.memory_space<vmem>>, vector<128x128xf32>
    %c0_104 = arith.constant 0 : index
    %c0_105 = arith.constant 0 : index
    %202 = vector.load %arg30[%c0_104, %c0_105] : memref<1x128xf32, #tpu.memory_space<vmem>>, vector<1x128xf32>
    %c0_106 = arith.constant 0 : index
    %c0_107 = arith.constant 0 : index
    %203 = vector.load %arg31[%c0_106, %c0_107] : memref<1x128xf32, #tpu.memory_space<vmem>>, vector<1x128xf32>
    %c0_108 = arith.constant 0 : index
    %c0_109 = arith.constant 0 : index
    %204 = vector.load %arg32[%c0_108, %c0_109] : memref<1x128xf32, #tpu.memory_space<vmem>>, vector<1x128xf32>
    %c0_110 = arith.constant 0 : index
    %c0_111 = arith.constant 0 : index
    %205 = vector.load %arg33[%c0_110, %c0_111] : memref<128x512xf32, #tpu.memory_space<vmem>>, vector<128x512xf32>
    %c0_112 = arith.constant 0 : index
    %c0_113 = arith.constant 0 : index
    %206 = vector.load %arg34[%c0_112, %c0_113] : memref<1x512xf32, #tpu.memory_space<vmem>>, vector<1x512xf32>
    %c0_114 = arith.constant 0 : index
    %c0_115 = arith.constant 0 : index
    %207 = vector.load %arg35[%c0_114, %c0_115] : memref<512x128xf32, #tpu.memory_space<vmem>>, vector<512x128xf32>
    %c0_116 = arith.constant 0 : index
    %c0_117 = arith.constant 0 : index
    %208 = vector.load %arg36[%c0_116, %c0_117] : memref<1x128xf32, #tpu.memory_space<vmem>>, vector<1x128xf32>
    %cst_118 = arith.constant dense<0.000000e+00> : vector<32xf32>
    %209 = vector.multi_reduction <add>, %195, %cst_118 [1] : vector<32x128xf32> to vector<32xf32>
    %210 = vector.shape_cast %209 : vector<32xf32> to vector<32x1xf32>
    %cst_119 = arith.constant 1.280000e+02 : f32
    %211 = vector.broadcast %cst_119 : f32 to vector<32x1xf32>
    %212 = arith.divf %210, %211 : vector<32x1xf32>
    %213 = vector.broadcast %212 : vector<32x1xf32> to vector<32x128xf32>
    %214 = arith.subf %195, %213 : vector<32x128xf32>
    %215 = arith.mulf %214, %214 : vector<32x128xf32>
    %cst_120 = arith.constant dense<0.000000e+00> : vector<32xf32>
    %216 = vector.multi_reduction <add>, %215, %cst_120 [1] : vector<32x128xf32> to vector<32xf32>
    %217 = vector.shape_cast %216 : vector<32xf32> to vector<32x1xf32>
    %cst_121 = arith.constant 1.280000e+02 : f32
    %218 = vector.broadcast %cst_121 : f32 to vector<32x1xf32>
    %219 = arith.divf %217, %218 : vector<32x1xf32>
    %220 = vector.broadcast %212 : vector<32x1xf32> to vector<32x128xf32>
    %221 = arith.subf %195, %220 : vector<32x128xf32>
    %cst_122 = arith.constant 9.99999974E-6 : f32
    %222 = vector.broadcast %cst_122 : f32 to vector<32x1xf32>
    %223 = arith.addf %219, %222 : vector<32x1xf32>
    %224 = math.rsqrt %223 : vector<32x1xf32>
    %225 = vector.broadcast %224 : vector<32x1xf32> to vector<32x128xf32>
    %226 = arith.mulf %221, %225 : vector<32x128xf32>
    %227 = vector.broadcast %197 : vector<1x128xf32> to vector<32x128xf32>
    %228 = arith.mulf %226, %227 : vector<32x128xf32>
    %229 = vector.broadcast %198 : vector<1x128xf32> to vector<32x128xf32>
    %230 = arith.addf %228, %229 : vector<32x128xf32>
    %cst_123 = arith.constant dense<0.000000e+00> : vector<32x384xf32>
    %231 = tpu.matmul %230, %199, %cst_123 {dimension_numbers = #tpu.dot_dimension_numbers<[1], [0], [0], [1], [0, 0, 1, 1], [], []>} : vector<32x128xf32>, vector<128x384xf32>, vector<32x384xf32> -> vector<32x384xf32>
    %232 = vector.broadcast %200 : vector<1x384xf32> to vector<32x384xf32>
    %233 = arith.addf %231, %232 : vector<32x384xf32>
    %234 = tpu.iota {dimensions = array<i32: 0>} : vector<16x16xi32>
    %235 = tpu.iota {dimensions = array<i32: 1>} : vector<16x16xi32>
    %236 = arith.cmpi sle, %235, %234 : vector<16x16xi32>
    %237 = vector.shape_cast %236 : vector<16x16xi1> to vector<1x16x16xi1>
    %238 = vector.shape_cast %196 : vector<2x16xf32> to vector<2x1x16xf32>
    %cst_124 = arith.constant 5.000000e-01 : f32
    %239 = vector.broadcast %cst_124 : f32 to vector<2x1x16xf32>
    %240 = arith.cmpf ogt, %238, %239 : vector<2x1x16xf32>
    %cst_125 = arith.constant 0.000000e+00 : f32
    %241 = vector.broadcast %cst_125 : f32 to vector<32x128xf32>
    %242 = vector.broadcast %202 : vector<1x128xf32> to vector<32x128xf32>
    %243 = arith.addf %241, %242 : vector<32x128xf32>
    %244 = vector.extract_strided_slice %233 {offsets = [0, 0], sizes = [32, 64], strides = [1, 1]} : vector<32x384xf32> to vector<32x64xf32>
    %245 = vector.shape_cast %244 : vector<32x64xf32> to vector<2x16x64xf32>
    %246 = vector.extract_strided_slice %233 {offsets = [0, 128], sizes = [32, 64], strides = [1, 1]} : vector<32x384xf32> to vector<32x64xf32>
    %247 = vector.shape_cast %246 : vector<32x64xf32> to vector<2x16x64xf32>
    %248 = vector.extract_strided_slice %233 {offsets = [0, 256], sizes = [32, 64], strides = [1, 1]} : vector<32x384xf32> to vector<32x64xf32>
    %249 = vector.shape_cast %248 : vector<32x64xf32> to vector<2x16x64xf32>
    "tpu.trace_start"() <{level = 10 : i32, message = "bqd,bkd->bqk"}> : () -> ()
    %cst_126 = arith.constant dense<0.000000e+00> : vector<2x16x16xf32>
    %250 = tpu.matmul %245, %247, %cst_126 {dimension_numbers = #tpu.dot_dimension_numbers<[2], [2], [1], [1], [0, 0, 0, 1, 1, 1], [0], [0]>} : vector<2x16x64xf32>, vector<2x16x64xf32>, vector<2x16x16xf32> -> vector<2x16x16xf32>
    "tpu.trace_stop"() : () -> ()
    %cst_127 = arith.constant 1.250000e-01 : f32
    %251 = vector.broadcast %cst_127 : f32 to vector<2x16x16xf32>
    %252 = arith.mulf %250, %251 : vector<2x16x16xf32>
    %cst_128 = arith.constant -1.000000e+30 : f32
    %253 = vector.shape_cast %240 : vector<2x1x16xi1> to vector<2x1x16xi1>
    %254 = vector.broadcast %253 : vector<2x1x16xi1> to vector<2x16x16xi1>
    %255 = vector.broadcast %cst_128 : f32 to vector<2x16x16xf32>
    %256 = arith.select %254, %252, %255 : vector<2x16x16xi1>, vector<2x16x16xf32>
    %cst_129 = arith.constant -1.000000e+30 : f32
    %257 = vector.shape_cast %237 : vector<1x16x16xi1> to vector<1x16x16xi1>
    %258 = vector.broadcast %257 : vector<1x16x16xi1> to vector<2x16x16xi1>
    %259 = vector.broadcast %cst_129 : f32 to vector<2x16x16xf32>
    %260 = arith.select %258, %256, %259 : vector<2x16x16xi1>, vector<2x16x16xf32>
    %cst_130 = arith.constant dense<0xFF800000> : vector<2x16xf32>
    %261 = vector.multi_reduction <maximumf>, %260, %cst_130 [2] : vector<2x16x16xf32> to vector<2x16xf32>
    %262 = vector.shape_cast %261 : vector<2x16xf32> to vector<2x16x1xf32>
    %263 = vector.broadcast %262 : vector<2x16x1xf32> to vector<2x16x16xf32>
    %264 = arith.subf %260, %263 : vector<2x16x16xf32>
    %265 = math.exp %264 : vector<2x16x16xf32>
    %cst_131 = arith.constant 0.000000e+00 : f32
    %266 = vector.shape_cast %240 : vector<2x1x16xi1> to vector<2x1x16xi1>
    %267 = vector.broadcast %266 : vector<2x1x16xi1> to vector<2x16x16xi1>
    %268 = vector.broadcast %cst_131 : f32 to vector<2x16x16xf32>
    %269 = arith.select %267, %265, %268 : vector<2x16x16xi1>, vector<2x16x16xf32>
    %cst_132 = arith.constant 0.000000e+00 : f32
    %270 = vector.shape_cast %237 : vector<1x16x16xi1> to vector<1x16x16xi1>
    %271 = vector.broadcast %270 : vector<1x16x16xi1> to vector<2x16x16xi1>
    %272 = vector.broadcast %cst_132 : f32 to vector<2x16x16xf32>
    %273 = arith.select %271, %269, %272 : vector<2x16x16xi1>, vector<2x16x16xf32>
    %cst_133 = arith.constant dense<0.000000e+00> : vector<2x16xf32>
    %274 = vector.multi_reduction <add>, %273, %cst_133 [2] : vector<2x16x16xf32> to vector<2x16xf32>
    %275 = vector.shape_cast %274 : vector<2x16xf32> to vector<2x16x1xf32>
    %cst_134 = arith.constant 9.99999968E-21 : f32
    %276 = vector.broadcast %cst_134 : f32 to vector<2x16x1xf32>
    %277 = arith.maximumf %275, %276 : vector<2x16x1xf32>
    %278 = tpu.reciprocal %277 {approx = true} : vector<2x16x1xf32> -> vector<2x16x1xf32>
    %279 = vector.broadcast %278 : vector<2x16x1xf32> to vector<2x16x16xf32>
    %280 = arith.mulf %273, %279 : vector<2x16x16xf32>
    "tpu.trace_start"() <{level = 10 : i32, message = "bqk,bkd->bqd"}> : () -> ()
    %cst_135 = arith.constant dense<0.000000e+00> : vector<2x16x64xf32>
    %281 = tpu.matmul %280, %249, %cst_135 {dimension_numbers = #tpu.dot_dimension_numbers<[2], [1], [1], [2], [0, 0, 0, 1, 1, 2], [0], [0]>} : vector<2x16x16xf32>, vector<2x16x64xf32>, vector<2x16x64xf32> -> vector<2x16x64xf32>
    "tpu.trace_stop"() : () -> ()
    %282 = vector.shape_cast %281 : vector<2x16x64xf32> to vector<32x64xf32>
    %283 = vector.extract_strided_slice %201 {offsets = [0, 0], sizes = [64, 128], strides = [1, 1]} : vector<128x128xf32> to vector<64x128xf32>
    %cst_136 = arith.constant dense<0.000000e+00> : vector<32x128xf32>
    %284 = tpu.matmul %282, %283, %cst_136 {dimension_numbers = #tpu.dot_dimension_numbers<[1], [0], [0], [1], [0, 0, 1, 1], [], []>} : vector<32x64xf32>, vector<64x128xf32>, vector<32x128xf32> -> vector<32x128xf32>
    %285 = arith.addf %243, %284 : vector<32x128xf32>
    %286 = vector.extract_strided_slice %233 {offsets = [0, 64], sizes = [32, 64], strides = [1, 1]} : vector<32x384xf32> to vector<32x64xf32>
    %287 = vector.shape_cast %286 : vector<32x64xf32> to vector<2x16x64xf32>
    %288 = vector.extract_strided_slice %233 {offsets = [0, 192], sizes = [32, 64], strides = [1, 1]} : vector<32x384xf32> to vector<32x64xf32>
    %289 = vector.shape_cast %288 : vector<32x64xf32> to vector<2x16x64xf32>
    %290 = vector.extract_strided_slice %233 {offsets = [0, 320], sizes = [32, 64], strides = [1, 1]} : vector<32x384xf32> to vector<32x64xf32>
    %291 = vector.shape_cast %290 : vector<32x64xf32> to vector<2x16x64xf32>
    "tpu.trace_start"() <{level = 10 : i32, message = "bqd,bkd->bqk"}> : () -> ()
    %cst_137 = arith.constant dense<0.000000e+00> : vector<2x16x16xf32>
    %292 = tpu.matmul %287, %289, %cst_137 {dimension_numbers = #tpu.dot_dimension_numbers<[2], [2], [1], [1], [0, 0, 0, 1, 1, 1], [0], [0]>} : vector<2x16x64xf32>, vector<2x16x64xf32>, vector<2x16x16xf32> -> vector<2x16x16xf32>
    "tpu.trace_stop"() : () -> ()
    %cst_138 = arith.constant 1.250000e-01 : f32
    %293 = vector.broadcast %cst_138 : f32 to vector<2x16x16xf32>
    %294 = arith.mulf %292, %293 : vector<2x16x16xf32>
    %cst_139 = arith.constant -1.000000e+30 : f32
    %295 = vector.shape_cast %240 : vector<2x1x16xi1> to vector<2x1x16xi1>
    %296 = vector.broadcast %295 : vector<2x1x16xi1> to vector<2x16x16xi1>
    %297 = vector.broadcast %cst_139 : f32 to vector<2x16x16xf32>
    %298 = arith.select %296, %294, %297 : vector<2x16x16xi1>, vector<2x16x16xf32>
    %cst_140 = arith.constant -1.000000e+30 : f32
    %299 = vector.shape_cast %237 : vector<1x16x16xi1> to vector<1x16x16xi1>
    %300 = vector.broadcast %299 : vector<1x16x16xi1> to vector<2x16x16xi1>
    %301 = vector.broadcast %cst_140 : f32 to vector<2x16x16xf32>
    %302 = arith.select %300, %298, %301 : vector<2x16x16xi1>, vector<2x16x16xf32>
    %cst_141 = arith.constant dense<0xFF800000> : vector<2x16xf32>
    %303 = vector.multi_reduction <maximumf>, %302, %cst_141 [2] : vector<2x16x16xf32> to vector<2x16xf32>
    %304 = vector.shape_cast %303 : vector<2x16xf32> to vector<2x16x1xf32>
    %305 = vector.broadcast %304 : vector<2x16x1xf32> to vector<2x16x16xf32>
    %306 = arith.subf %302, %305 : vector<2x16x16xf32>
    %307 = math.exp %306 : vector<2x16x16xf32>
    %cst_142 = arith.constant 0.000000e+00 : f32
    %308 = vector.shape_cast %240 : vector<2x1x16xi1> to vector<2x1x16xi1>
    %309 = vector.broadcast %308 : vector<2x1x16xi1> to vector<2x16x16xi1>
    %310 = vector.broadcast %cst_142 : f32 to vector<2x16x16xf32>
    %311 = arith.select %309, %307, %310 : vector<2x16x16xi1>, vector<2x16x16xf32>
    %cst_143 = arith.constant 0.000000e+00 : f32
    %312 = vector.shape_cast %237 : vector<1x16x16xi1> to vector<1x16x16xi1>
    %313 = vector.broadcast %312 : vector<1x16x16xi1> to vector<2x16x16xi1>
    %314 = vector.broadcast %cst_143 : f32 to vector<2x16x16xf32>
    %315 = arith.select %313, %311, %314 : vector<2x16x16xi1>, vector<2x16x16xf32>
    %cst_144 = arith.constant dense<0.000000e+00> : vector<2x16xf32>
    %316 = vector.multi_reduction <add>, %315, %cst_144 [2] : vector<2x16x16xf32> to vector<2x16xf32>
    %317 = vector.shape_cast %316 : vector<2x16xf32> to vector<2x16x1xf32>
    %cst_145 = arith.constant 9.99999968E-21 : f32
    %318 = vector.broadcast %cst_145 : f32 to vector<2x16x1xf32>
    %319 = arith.maximumf %317, %318 : vector<2x16x1xf32>
    %320 = tpu.reciprocal %319 {approx = true} : vector<2x16x1xf32> -> vector<2x16x1xf32>
    %321 = vector.broadcast %320 : vector<2x16x1xf32> to vector<2x16x16xf32>
    %322 = arith.mulf %315, %321 : vector<2x16x16xf32>
    "tpu.trace_start"() <{level = 10 : i32, message = "bqk,bkd->bqd"}> : () -> ()
    %cst_146 = arith.constant dense<0.000000e+00> : vector<2x16x64xf32>
    %323 = tpu.matmul %322, %291, %cst_146 {dimension_numbers = #tpu.dot_dimension_numbers<[2], [1], [1], [2], [0, 0, 0, 1, 1, 2], [0], [0]>} : vector<2x16x16xf32>, vector<2x16x64xf32>, vector<2x16x64xf32> -> vector<2x16x64xf32>
    "tpu.trace_stop"() : () -> ()
    %324 = vector.shape_cast %323 : vector<2x16x64xf32> to vector<32x64xf32>
    %325 = vector.extract_strided_slice %201 {offsets = [64, 0], sizes = [64, 128], strides = [1, 1]} : vector<128x128xf32> to vector<64x128xf32>
    %cst_147 = arith.constant dense<0.000000e+00> : vector<32x128xf32>
    %326 = tpu.matmul %324, %325, %cst_147 {dimension_numbers = #tpu.dot_dimension_numbers<[1], [0], [0], [1], [0, 0, 1, 1], [], []>} : vector<32x64xf32>, vector<64x128xf32>, vector<32x128xf32> -> vector<32x128xf32>
    %327 = arith.addf %285, %326 : vector<32x128xf32>
    %328 = arith.addf %195, %327 : vector<32x128xf32>
    %cst_148 = arith.constant dense<0.000000e+00> : vector<32xf32>
    %329 = vector.multi_reduction <add>, %328, %cst_148 [1] : vector<32x128xf32> to vector<32xf32>
    %330 = vector.shape_cast %329 : vector<32xf32> to vector<32x1xf32>
    %cst_149 = arith.constant 1.280000e+02 : f32
    %331 = vector.broadcast %cst_149 : f32 to vector<32x1xf32>
    %332 = arith.divf %330, %331 : vector<32x1xf32>
    %333 = vector.broadcast %332 : vector<32x1xf32> to vector<32x128xf32>
    %334 = arith.subf %328, %333 : vector<32x128xf32>
    %335 = arith.mulf %334, %334 : vector<32x128xf32>
    %cst_150 = arith.constant dense<0.000000e+00> : vector<32xf32>
    %336 = vector.multi_reduction <add>, %335, %cst_150 [1] : vector<32x128xf32> to vector<32xf32>
    %337 = vector.shape_cast %336 : vector<32xf32> to vector<32x1xf32>
    %cst_151 = arith.constant 1.280000e+02 : f32
    %338 = vector.broadcast %cst_151 : f32 to vector<32x1xf32>
    %339 = arith.divf %337, %338 : vector<32x1xf32>
    %340 = vector.broadcast %332 : vector<32x1xf32> to vector<32x128xf32>
    %341 = arith.subf %328, %340 : vector<32x128xf32>
    %cst_152 = arith.constant 9.99999974E-6 : f32
    %342 = vector.broadcast %cst_152 : f32 to vector<32x1xf32>
    %343 = arith.addf %339, %342 : vector<32x1xf32>
    %344 = math.rsqrt %343 : vector<32x1xf32>
    %345 = vector.broadcast %344 : vector<32x1xf32> to vector<32x128xf32>
    %346 = arith.mulf %341, %345 : vector<32x128xf32>
    %347 = vector.broadcast %203 : vector<1x128xf32> to vector<32x128xf32>
    %348 = arith.mulf %346, %347 : vector<32x128xf32>
    %349 = vector.broadcast %204 : vector<1x128xf32> to vector<32x128xf32>
    %350 = arith.addf %348, %349 : vector<32x128xf32>
    %cst_153 = arith.constant dense<0.000000e+00> : vector<32x512xf32>
    %351 = tpu.matmul %350, %205, %cst_153 {dimension_numbers = #tpu.dot_dimension_numbers<[1], [0], [0], [1], [0, 0, 1, 1], [], []>} : vector<32x128xf32>, vector<128x512xf32>, vector<32x512xf32> -> vector<32x512xf32>
    %352 = vector.broadcast %206 : vector<1x512xf32> to vector<32x512xf32>
    %353 = arith.addf %351, %352 : vector<32x512xf32>
    %354 = arith.mulf %353, %353 : vector<32x512xf32>
    %355 = arith.mulf %353, %354 : vector<32x512xf32>
    %cst_154 = arith.constant 4.471500e-02 : f32
    %356 = vector.broadcast %cst_154 : f32 to vector<32x512xf32>
    %357 = arith.mulf %356, %355 : vector<32x512xf32>
    %358 = arith.addf %353, %357 : vector<32x512xf32>
    %cst_155 = arith.constant 0.797884583 : f32
    %359 = vector.broadcast %cst_155 : f32 to vector<32x512xf32>
    %360 = arith.mulf %359, %358 : vector<32x512xf32>
    %361 = math.tanh %360 : vector<32x512xf32>
    %cst_156 = arith.constant 1.000000e+00 : f32
    %362 = vector.broadcast %cst_156 : f32 to vector<32x512xf32>
    %363 = arith.addf %362, %361 : vector<32x512xf32>
    %cst_157 = arith.constant 5.000000e-01 : f32
    %364 = vector.broadcast %cst_157 : f32 to vector<32x512xf32>
    %365 = arith.mulf %364, %363 : vector<32x512xf32>
    %366 = arith.mulf %353, %365 : vector<32x512xf32>
    %cst_158 = arith.constant dense<0.000000e+00> : vector<32x128xf32>
    %367 = tpu.matmul %366, %207, %cst_158 {dimension_numbers = #tpu.dot_dimension_numbers<[1], [0], [0], [1], [0, 0, 1, 1], [], []>} : vector<32x512xf32>, vector<512x128xf32>, vector<32x128xf32> -> vector<32x128xf32>
    %368 = vector.broadcast %208 : vector<1x128xf32> to vector<32x128xf32>
    %369 = arith.addf %367, %368 : vector<32x128xf32>
    %370 = arith.addf %328, %369 : vector<32x128xf32>
    %c0_159 = arith.constant 0 : index
    %c0_160 = arith.constant 0 : index
    %371 = vector.load %arg37[%c0_159, %c0_160] : memref<1x128xf32, #tpu.memory_space<vmem>>, vector<1x128xf32>
    %c0_161 = arith.constant 0 : index
    %c0_162 = arith.constant 0 : index
    %372 = vector.load %arg38[%c0_161, %c0_162] : memref<1x128xf32, #tpu.memory_space<vmem>>, vector<1x128xf32>
    %cst_163 = arith.constant dense<0.000000e+00> : vector<32xf32>
    %373 = vector.multi_reduction <add>, %370, %cst_163 [1] : vector<32x128xf32> to vector<32xf32>
    %374 = vector.shape_cast %373 : vector<32xf32> to vector<32x1xf32>
    %cst_164 = arith.constant 1.280000e+02 : f32
    %375 = vector.broadcast %cst_164 : f32 to vector<32x1xf32>
    %376 = arith.divf %374, %375 : vector<32x1xf32>
    %377 = vector.broadcast %376 : vector<32x1xf32> to vector<32x128xf32>
    %378 = arith.subf %370, %377 : vector<32x128xf32>
    %379 = arith.mulf %378, %378 : vector<32x128xf32>
    %cst_165 = arith.constant dense<0.000000e+00> : vector<32xf32>
    %380 = vector.multi_reduction <add>, %379, %cst_165 [1] : vector<32x128xf32> to vector<32xf32>
    %381 = vector.shape_cast %380 : vector<32xf32> to vector<32x1xf32>
    %cst_166 = arith.constant 1.280000e+02 : f32
    %382 = vector.broadcast %cst_166 : f32 to vector<32x1xf32>
    %383 = arith.divf %381, %382 : vector<32x1xf32>
    %384 = vector.broadcast %376 : vector<32x1xf32> to vector<32x128xf32>
    %385 = arith.subf %370, %384 : vector<32x128xf32>
    %cst_167 = arith.constant 9.99999974E-6 : f32
    %386 = vector.broadcast %cst_167 : f32 to vector<32x1xf32>
    %387 = arith.addf %383, %386 : vector<32x1xf32>
    %388 = math.rsqrt %387 : vector<32x1xf32>
    %389 = vector.broadcast %388 : vector<32x1xf32> to vector<32x128xf32>
    %390 = arith.mulf %385, %389 : vector<32x128xf32>
    %391 = vector.broadcast %371 : vector<1x128xf32> to vector<32x128xf32>
    %392 = arith.mulf %390, %391 : vector<32x128xf32>
    %393 = vector.broadcast %372 : vector<1x128xf32> to vector<32x128xf32>
    %394 = arith.addf %392, %393 : vector<32x128xf32>
    %c0_168 = arith.constant 0 : index
    %c0_169 = arith.constant 0 : index
    %395 = vector.load %arg39[%c0_168, %c0_169] : memref<128x128xf32, #tpu.memory_space<vmem>>, vector<128x128xf32>
    %cst_170 = arith.constant dense<0.000000e+00> : vector<32x128xf32>
    %396 = tpu.matmul %394, %395, %cst_170 {dimension_numbers = #tpu.dot_dimension_numbers<[1], [0], [0], [1], [0, 0, 1, 1], [], []>} : vector<32x128xf32>, vector<128x128xf32>, vector<32x128xf32> -> vector<32x128xf32>
    %c0_171 = arith.constant 0 : index
    %c0_172 = arith.constant 0 : index
    %397 = vector.load %arg40[%c0_171, %c0_172] : memref<1x128xf32, #tpu.memory_space<vmem>>, vector<1x128xf32>
    %398 = vector.broadcast %397 : vector<1x128xf32> to vector<32x128xf32>
    %399 = arith.addf %396, %398 : vector<32x128xf32>
    %400 = vector.shape_cast %399 : vector<32x128xf32> to vector<2x16x128xf32>
    %c0_173 = arith.constant 0 : index
    %c0_174 = arith.constant 0 : index
    %c0_175 = arith.constant 0 : index
    %401 = vector.load %arg41[%c0_173, %c0_174, %c0_175] : memref<2x16x128xf32, #tpu.memory_space<vmem>>, vector<2x16x128xf32>
    tpu.vector_store %arg41[%c0_173, %c0_174, %c0_175], %400 {strides = array<i32>} : memref<2x16x128xf32, #tpu.memory_space<vmem>>, vector<2x16x128xf32>,
    return
  }
  func.func @transform_0(%arg0: i32) -> (i32, i32) {
    %c0_i32 = arith.constant 0 : i32
    %c0_i32_0 = arith.constant 0 : i32
    %c0_i32_1 = arith.constant 0 : i32
    return %c0_i32, %c0_i32_0 : i32, i32
  }
  func.func @transform_1(%arg0: i32) -> (i32, i32) {
    %c0_i32 = arith.constant 0 : i32
    %c0_i32_0 = arith.constant 0 : i32
    %c0_i32_1 = arith.constant 0 : i32
    return %c0_i32, %c0_i32_0 : i32, i32
  }
  func.func @transform_2(%arg0: i32) -> (i32, i32) {
    %c0_i32 = arith.constant 0 : i32
    %c0_i32_0 = arith.constant 0 : i32
    %c0_i32_1 = arith.constant 0 : i32
    return %c0_i32, %c0_i32_0 : i32, i32
  }
  func.func @transform_3(%arg0: i32) -> (i32, i32) {
    %c0_i32 = arith.constant 0 : i32
    %c0_i32_0 = arith.constant 0 : i32
    %c0_i32_1 = arith.constant 0 : i32
    return %c0_i32, %c0_i32_0 : i32, i32
  }
  func.func @transform_4(%arg0: i32) -> (i32, i32) {
    %c0_i32 = arith.constant 0 : i32
    %c0_i32_0 = arith.constant 0 : i32
    %c0_i32_1 = arith.constant 0 : i32
    return %c0_i32, %c0_i32_0 : i32, i32
  }
  func.func @transform_5(%arg0: i32) -> (i32, i32) {
    %c0_i32 = arith.constant 0 : i32
    %c0_i32_0 = arith.constant 0 : i32
    %c0_i32_1 = arith.constant 0 : i32
    return %c0_i32, %c0_i32_0 : i32, i32
  }
  func.func @transform_6(%arg0: i32) -> (i32, i32) {
    %c0_i32 = arith.constant 0 : i32
    %c0_i32_0 = arith.constant 0 : i32
    %c0_i32_1 = arith.constant 0 : i32
    return %c0_i32, %c0_i32_0 : i32, i32
  }
  func.func @transform_7(%arg0: i32) -> (i32, i32) {
    %c0_i32 = arith.constant 0 : i32
    %c0_i32_0 = arith.constant 0 : i32
    %c0_i32_1 = arith.constant 0 : i32
    return %c0_i32, %c0_i32_0 : i32, i32
  }
  func.func @transform_8(%arg0: i32) -> (i32, i32) {
    %c0_i32 = arith.constant 0 : i32
    %c0_i32_0 = arith.constant 0 : i32
    %c0_i32_1 = arith.constant 0 : i32
    return %c0_i32, %c0_i32_0 : i32, i32
  }
  func.func @transform_9(%arg0: i32) -> (i32, i32) {
    %c0_i32 = arith.constant 0 : i32
    %c0_i32_0 = arith.constant 0 : i32
    %c0_i32_1 = arith.constant 0 : i32
    return %c0_i32, %c0_i32_0 : i32, i32
  }
  func.func @transform_10(%arg0: i32) -> (i32, i32) {
    %c0_i32 = arith.constant 0 : i32
    %c0_i32_0 = arith.constant 0 : i32
    %c0_i32_1 = arith.constant 0 : i32
    return %c0_i32, %c0_i32_0 : i32, i32
  }
  func.func @transform_11(%arg0: i32) -> (i32, i32) {
    %c0_i32 = arith.constant 0 : i32
    %c0_i32_0 = arith.constant 0 : i32
    %c0_i32_1 = arith.constant 0 : i32
    return %c0_i32, %c0_i32_0 : i32, i32
  }
  func.func @transform_12(%arg0: i32) -> (i32, i32) {
    %c0_i32 = arith.constant 0 : i32
    %c0_i32_0 = arith.constant 0 : i32
    %c0_i32_1 = arith.constant 0 : i32
    return %c0_i32, %c0_i32_0 : i32, i32
  }
  func.func @transform_13(%arg0: i32) -> (i32, i32) {
    %c0_i32 = arith.constant 0 : i32
    %c0_i32_0 = arith.constant 0 : i32
    %c0_i32_1 = arith.constant 0 : i32
    return %c0_i32, %c0_i32_0 : i32, i32
  }
  func.func @transform_14(%arg0: i32) -> (i32, i32) {
    %c0_i32 = arith.constant 0 : i32
    %c0_i32_0 = arith.constant 0 : i32
    %c0_i32_1 = arith.constant 0 : i32
    return %c0_i32, %c0_i32_0 : i32, i32
  }
  func.func @transform_15(%arg0: i32) -> (i32, i32) {
    %c0_i32 = arith.constant 0 : i32
    %c0_i32_0 = arith.constant 0 : i32
    %c0_i32_1 = arith.constant 0 : i32
    return %c0_i32, %c0_i32_0 : i32, i32
  }
  func.func @transform_16(%arg0: i32) -> (i32, i32) {
    %c0_i32 = arith.constant 0 : i32
    %c0_i32_0 = arith.constant 0 : i32
    %c0_i32_1 = arith.constant 0 : i32
    return %c0_i32, %c0_i32_0 : i32, i32
  }
  func.func @transform_17(%arg0: i32) -> (i32, i32) {
    %c0_i32 = arith.constant 0 : i32
    %c0_i32_0 = arith.constant 0 : i32
    %c0_i32_1 = arith.constant 0 : i32
    return %c0_i32, %c0_i32_0 : i32, i32
  }
  func.func @transform_18(%arg0: i32) -> (i32, i32) {
    %c0_i32 = arith.constant 0 : i32
    %c0_i32_0 = arith.constant 0 : i32
    %c0_i32_1 = arith.constant 0 : i32
    return %c0_i32, %c0_i32_0 : i32, i32
  }
  func.func @transform_19(%arg0: i32) -> (i32, i32) {
    %c0_i32 = arith.constant 0 : i32
    %c0_i32_0 = arith.constant 0 : i32
    %c0_i32_1 = arith.constant 0 : i32
    return %c0_i32, %c0_i32_0 : i32, i32
  }
  func.func @transform_20(%arg0: i32) -> (i32, i32) {
    %c0_i32 = arith.constant 0 : i32
    %c0_i32_0 = arith.constant 0 : i32
    %c0_i32_1 = arith.constant 0 : i32
    return %c0_i32, %c0_i32_0 : i32, i32
  }
  func.func @transform_21(%arg0: i32) -> (i32, i32) {
    %c0_i32 = arith.constant 0 : i32
    %c0_i32_0 = arith.constant 0 : i32
    %c0_i32_1 = arith.constant 0 : i32
    return %c0_i32, %c0_i32_0 : i32, i32
  }
  func.func @transform_22(%arg0: i32) -> (i32, i32) {
    %c0_i32 = arith.constant 0 : i32
    %c0_i32_0 = arith.constant 0 : i32
    %c0_i32_1 = arith.constant 0 : i32
    return %c0_i32, %c0_i32_0 : i32, i32
  }
  func.func @transform_23(%arg0: i32) -> (i32, i32) {
    %c0_i32 = arith.constant 0 : i32
    %c0_i32_0 = arith.constant 0 : i32
    %c0_i32_1 = arith.constant 0 : i32
    return %c0_i32, %c0_i32_0 : i32, i32
  }
  func.func @transform_24(%arg0: i32) -> (i32, i32) {
    %c0_i32 = arith.constant 0 : i32
    %c0_i32_0 = arith.constant 0 : i32
    %c0_i32_1 = arith.constant 0 : i32
    return %c0_i32, %c0_i32_0 : i32, i32
  }
  func.func @transform_25(%arg0: i32) -> (i32, i32) {
    %c0_i32 = arith.constant 0 : i32
    %c0_i32_0 = arith.constant 0 : i32
    %c0_i32_1 = arith.constant 0 : i32
    return %c0_i32, %c0_i32_0 : i32, i32
  }
  func.func @transform_26(%arg0: i32) -> (i32, i32) {
    %c0_i32 = arith.constant 0 : i32
    %c0_i32_0 = arith.constant 0 : i32
    %c0_i32_1 = arith.constant 0 : i32
    return %c0_i32, %c0_i32_0 : i32, i32
  }
  func.func @transform_27(%arg0: i32) -> (i32, i32) {
    %c0_i32 = arith.constant 0 : i32
    %c0_i32_0 = arith.constant 0 : i32
    %c0_i32_1 = arith.constant 0 : i32
    return %c0_i32, %c0_i32_0 : i32, i32
  }
  func.func @transform_28(%arg0: i32) -> (i32, i32) {
    %c0_i32 = arith.constant 0 : i32
    %c0_i32_0 = arith.constant 0 : i32
    %c0_i32_1 = arith.constant 0 : i32
    return %c0_i32, %c0_i32_0 : i32, i32
  }
  func.func @transform_29(%arg0: i32) -> (i32, i32) {
    %c0_i32 = arith.constant 0 : i32
    %c0_i32_0 = arith.constant 0 : i32
    %c0_i32_1 = arith.constant 0 : i32
    return %c0_i32, %c0_i32_0 : i32, i32
  }
  func.func @transform_30(%arg0: i32) -> (i32, i32) {
    %c0_i32 = arith.constant 0 : i32
    %c0_i32_0 = arith.constant 0 : i32
    %c0_i32_1 = arith.constant 0 : i32
    return %c0_i32, %c0_i32_0 : i32, i32
  }
  func.func @transform_31(%arg0: i32) -> (i32, i32) {
    %c0_i32 = arith.constant 0 : i32
    %c0_i32_0 = arith.constant 0 : i32
    %c0_i32_1 = arith.constant 0 : i32
    return %c0_i32, %c0_i32_0 : i32, i32
  }
  func.func @transform_32(%arg0: i32) -> (i32, i32) {
    %c0_i32 = arith.constant 0 : i32
    %c0_i32_0 = arith.constant 0 : i32
    %c0_i32_1 = arith.constant 0 : i32
    return %c0_i32, %c0_i32_0 : i32, i32
  }
  func.func @transform_33(%arg0: i32) -> (i32, i32) {
    %c0_i32 = arith.constant 0 : i32
    %c0_i32_0 = arith.constant 0 : i32
    %c0_i32_1 = arith.constant 0 : i32
    return %c0_i32, %c0_i32_0 : i32, i32
  }
  func.func @transform_34(%arg0: i32) -> (i32, i32) {
    %c0_i32 = arith.constant 0 : i32
    %c0_i32_0 = arith.constant 0 : i32
    %c0_i32_1 = arith.constant 0 : i32
    return %c0_i32, %c0_i32_0 : i32, i32
  }
  func.func @transform_35(%arg0: i32) -> (i32, i32) {
    %c0_i32 = arith.constant 0 : i32
    %c0_i32_0 = arith.constant 0 : i32
    %c0_i32_1 = arith.constant 0 : i32
    return %c0_i32, %c0_i32_0 : i32, i32
  }
  func.func @transform_36(%arg0: i32) -> (i32, i32) {
    %c0_i32 = arith.constant 0 : i32
    %c0_i32_0 = arith.constant 0 : i32
    %c0_i32_1 = arith.constant 0 : i32
    return %c0_i32, %c0_i32_0 : i32, i32
  }
  func.func @transform_37(%arg0: i32) -> (i32, i32) {
    %c0_i32 = arith.constant 0 : i32
    %c0_i32_0 = arith.constant 0 : i32
    %c0_i32_1 = arith.constant 0 : i32
    return %c0_i32, %c0_i32_0 : i32, i32
  }
  func.func @transform_38(%arg0: i32) -> (i32, i32) {
    %c0_i32 = arith.constant 0 : i32
    %c0_i32_0 = arith.constant 0 : i32
    %c0_i32_1 = arith.constant 0 : i32
    return %c0_i32, %c0_i32_0 : i32, i32
  }
  func.func @transform_39(%arg0: i32) -> (i32, i32) {
    %c0_i32 = arith.constant 0 : i32
    %c0_i32_0 = arith.constant 0 : i32
    %c0_i32_1 = arith.constant 0 : i32
    return %c0_i32, %c0_i32_0 : i32, i32
  }
  func.func @transform_40(%arg0: i32) -> (i32, i32, i32) {
    %c0_i32 = arith.constant 0 : i32
    %c0_i32_0 = arith.constant 0 : i32
    %c0_i32_1 = arith.constant 0 : i32
    %c0_i32_2 = arith.constant 0 : i32
    return %c0_i32, %c0_i32_0, %c0_i32_1 : i32, i32, i32
  }
}

</mosaic_0001>

<llo_original>
// kernel: alm_forward.1
$region0: #{alm_forward.1}
  #allocation0 [shape = 'u32[]', space=smem, size = 0x4, offset = 0x4, fixed_abs, tag = 'smem constant byte address 0x4 - core index']
  #allocation1 [shape = 'u32[144,128]{1,0:T(1,128)}', space=vmem, size = 0x12000, scoped, tag = 'internal scratch']
  #allocation2 [shape = 'f32[2,16,128]{2,1,0:T(8,128)}', space=vmem, size = 0x4000, scoped, tag = 'scratch operand']
  %s0 = inlined_call_operand.smem [shape: u32[41], index: -1, kind: input, shape index: {}]
  %s1 = sld [smem:[%s0]]
  %s2 = scalar_lea.smem %s0, 1
  %s3 = sld [smem:[%s2]]
  %s4 = scalar_lea.smem %s0, 2
  %s5 = sld [smem:[%s4]]
  %s6 = scalar_lea.smem %s0, 3
  %s7 = sld [smem:[%s6]]
  %s8 = scalar_lea.smem %s0, 4
  %s9 = sld [smem:[%s8]]
  %s10 = scalar_lea.smem %s0, 5
  %s11 = sld [smem:[%s10]]
  %s12 = scalar_lea.smem %s0, 6
  %s13 = sld [smem:[%s12]]
  %s14 = scalar_lea.smem %s0, 7
  %s15 = sld [smem:[%s14]]
  %s16 = scalar_lea.smem %s0, 8
  %s17 = sld [smem:[%s16]]
  %s18 = scalar_lea.smem %s0, 9
  %s19 = sld [smem:[%s18]]
  %s20 = scalar_lea.smem %s0, 10
  %s21 = sld [smem:[%s20]]
  %s22 = scalar_lea.smem %s0, 11
  %s23 = sld [smem:[%s22]]
  %s24 = scalar_lea.smem %s0, 12
  %s25 = sld [smem:[%s24]]
  %s26 = scalar_lea.smem %s0, 13
  %s27 = sld [smem:[%s26]]
  %s28 = scalar_lea.smem %s0, 14
  %s29 = sld [smem:[%s28]]
  %s30 = scalar_lea.smem %s0, 15
  %s31 = sld [smem:[%s30]]
  %s32 = scalar_lea.smem %s0, 16
  %s33 = sld [smem:[%s32]]
  %s34 = scalar_lea.smem %s0, 17
  %s35 = sld [smem:[%s34]]
  %s36 = scalar_lea.smem %s0, 18
  %s37 = sld [smem:[%s36]]
  %s38 = scalar_lea.smem %s0, 19
  %s39 = sld [smem:[%s38]]
  %s40 = scalar_lea.smem %s0, 20
  %s41 = sld [smem:[%s40]]
  %s42 = scalar_lea.smem %s0, 21
  %s43 = sld [smem:[%s42]]
  %s44 = scalar_lea.smem %s0, 22
  %s45 = sld [smem:[%s44]]
  %s46 = scalar_lea.smem %s0, 23
  %s47 = sld [smem:[%s46]]
  %s48 = scalar_lea.smem %s0, 24
  %s49 = sld [smem:[%s48]]
  %s50 = scalar_lea.smem %s0, 25
  %s51 = sld [smem:[%s50]]
  %s52 = scalar_lea.smem %s0, 26
  %s53 = sld [smem:[%s52]]
  %s54 = scalar_lea.smem %s0, 27
  %s55 = sld [smem:[%s54]]
  %s56 = scalar_lea.smem %s0, 28
  %s57 = sld [smem:[%s56]]
  %s58 = scalar_lea.smem %s0, 29
  %s59 = sld [smem:[%s58]]
  %s60 = scalar_lea.smem %s0, 30
  %s61 = sld [smem:[%s60]]
  %s62 = scalar_lea.smem %s0, 31
  %s63 = sld [smem:[%s62]]
  %s64 = scalar_lea.smem %s0, 32
  %s65 = sld [smem:[%s64]]
  %s66 = scalar_lea.smem %s0, 33
  %s67 = sld [smem:[%s66]]
  %s68 = scalar_lea.smem %s0, 34
  %s69 = sld [smem:[%s68]]
  %s70 = scalar_lea.smem %s0, 35
  %s71 = sld [smem:[%s70]]
  %s72 = scalar_lea.smem %s0, 36
  %s73 = sld [smem:[%s72]]
  %s74 = scalar_lea.smem %s0, 37
  %s75 = sld [smem:[%s74]]
  %s76 = scalar_lea.smem %s0, 38
  %s77 = sld [smem:[%s76]]
  %s78 = scalar_lea.smem %s0, 39
  %s79 = sld [smem:[%s78]]
  %s80 = scalar_lea.smem %s0, 40
  %s81 = sld [smem:[%s80]]
  %s82 = sld [smem:[#allocation0]]
  $region266: #{alm_forward.1} parent=0
    _
  %s84 = ssub.s32 1, %s82
  %s85 = scalar_select 0, %s84, %s82
  $region1: #{alm_forward.1} parent=0
    #allocation3 [shape = 'u8[4096]{0}', space=vmem, size = 0x1000, scoped, tag = 'input window, operand 5, single buffered']
    #allocation4 [shape = 's32[1]{0}', space=sflag, size = 0x4, scoped, tag = 'scoped memory for alm_forward.1']
    #allocation5 [shape = 's32[1]{0}', space=sflag, size = 0x4, scoped, tag = 'scoped memory for alm_forward.1']
    #allocation6 [shape = 'u8[512]{0}', space=vmem, size = 0x400, scoped, tag = 'input window, operand 6, single buffered']
    #allocation7 [shape = 's32[1]{0}', space=sflag, size = 0x4, scoped, tag = 'scoped memory for alm_forward.1']
    #allocation8 [shape = 'u8[512]{0}', space=vmem, size = 0x400, scoped, tag = 'input window, operand 7, single buffered']
    #allocation9 [shape = 'u8[196608]{0}', space=vmem, size = 0x30000, scoped, tag = 'input window, operand 8, single buffered']
    #allocation10 [shape = 's32[1]{0}', space=sflag, size = 0x4, scoped, tag = 'scoped memory for alm_forward.1']
    #allocation11 [shape = 'u8[512]{0}', space=vmem, size = 0x400, scoped, tag = 'input window, operand 11, single buffered']
    #allocation12 [shape = 'u8[512]{0}', space=vmem, size = 0x400, scoped, tag = 'input window, operand 12, single buffered']
    #allocation13 [shape = 's32[1]{0}', space=sflag, size = 0x4, scoped, tag = 'scoped memory for alm_forward.1']
    #allocation14 [shape = 'u8[512]{0}', space=vmem, size = 0x400, scoped, tag = 'input window, operand 13, single buffered']
    #allocation15 [shape = 'u8[262144]{0}', space=vmem, size = 0x40000, scoped, tag = 'input window, operand 14, single buffered']
    #allocation16 [shape = 's32[1]{0}', space=sflag, size = 0x4, scoped, tag = 'scoped memory for alm_forward.1']
    #allocation17 [shape = 'u8[2048]{0}', space=vmem, size = 0x800, scoped, tag = 'input window, operand 15, single buffered']
    #allocation18 [shape = 'u8[262144]{0}', space=vmem, size = 0x40000, scoped, tag = 'input window, operand 16, single buffered']
    #allocation19 [shape = 's32[1]{0}', space=sflag, size = 0x4, scoped, tag = 'scoped memory for alm_forward.1']
    #allocation20 [shape = 'u8[512]{0}', space=vmem, size = 0x400, scoped, tag = 'input window, operand 17, single buffered']
    #allocation21 [shape = 'u8[512]{0}', space=vmem, size = 0x400, scoped, tag = 'input window, operand 18, single buffered']
    #allocation22 [shape = 's32[1]{0}', space=sflag, size = 0x4, scoped, tag = 'scoped memory for alm_forward.1']
    #allocation23 [shape = 'u8[512]{0}', space=vmem, size = 0x400, scoped, tag = 'input window, operand 19, single buffered']
    #allocation24 [shape = 'u8[65536]{0}', space=vmem, size = 0x10000, scoped, tag = 'input window, operand 20, single buffered']
    #allocation25 [shape = 's32[1]{0}', space=sflag, size = 0x4, scoped, tag = 'scoped memory for alm_forward.1']
    #allocation26 [shape = 'u8[65536]{0}', space=vmem, size = 0x10000, scoped, tag = 'input window, operand 22, single buffered']
    #allocation27 [shape = 'u8[512]{0}', space=vmem, size = 0x400, scoped, tag = 'input window, operand 25, single buffered']
    #allocation28 [shape = 's32[1]{0}', space=sflag, size = 0x4, scoped, tag = 'scoped memory for alm_forward.1']
    #allocation29 [shape = 'u8[196608]{0}', space=vmem, size = 0x30000, scoped, tag = 'input window, operand 26, single buffered']
    #allocation30 [shape = 'u8[65536]{0}', space=vmem, size = 0x10000, scoped, tag = 'input window, operand 28, single buffered']
    #allocation31 [shape = 's32[1]{0}', space=sflag, size = 0x4, scoped, tag = 'scoped memory for alm_forward.1']
    #allocation32 [shape = 'u8[512]{0}', space=vmem, size = 0x400, scoped, tag = 'input window, operand 29, single buffered']
    #allocation33 [shape = 'u8[262144]{0}', space=vmem, size = 0x40000, scoped, tag = 'input window, operand 32, single buffered']
    #allocation34 [shape = 's32[1]{0}', space=sflag, size = 0x4, scoped, tag = 'scoped memory for alm_forward.1']
    #allocation35 [shape = 'u8[2048]{0}', space=vmem, size = 0x800, scoped, tag = 'input window, operand 33, single buffered']
    #allocation36 [shape = 'u8[262144]{0}', space=vmem, size = 0x40000, scoped, tag = 'input window, operand 34, single buffered']
    #allocation37 [shape = 's32[1]{0}', space=sflag, size = 0x4, scoped, tag = 'scoped memory for alm_forward.1']
    #allocation38 [shape = 'u8[512]{0}', space=vmem, size = 0x400, scoped, tag = 'input window, operand 35, single buffered']
    #allocation39 [shape = 'u8[65536]{0}', space=vmem, size = 0x10000, scoped, tag = 'input window, operand 38, single buffered']
    #allocation40 [shape = 's32[1]{0}', space=sflag, size = 0x4, scoped, tag = 'scoped memory for alm_forward.1']
    #allocation41 [shape = 'u8[16384]{0}', space=vmem, size = 0x4000, scoped, tag = 'output window, operand 0, single buffered']
    %86 = vsyncpa [#allocation4], 0
    %87 = vsyncpa [#allocation7], 0
    %88 = vsyncpa [#allocation10], 0
    %89 = vsyncpa [#allocation13], 0
    %90 = vsyncpa [#allocation16], 0
    %91 = vsyncpa [#allocation19], 0
    %92 = vsyncpa [#allocation22], 0
    %93 = vsyncpa [#allocation25], 0
    %94 = vsyncpa [#allocation28], 0
    %95 = vsyncpa [#allocation31], 0
    %96 = vsyncpa [#allocation34], 0
    %97 = vsyncpa [#allocation37], 0
    %98 = vsyncpa [#allocation40], 0
    %99 = vsyncpa [#allocation5], 0
    // Predicated region
    $region2: #{alm_forward.1} parent=1 // pred_check
      _
    $region3: #{alm_forward.1} parent=1 // pred_check_branch
      %101 = sbr.rel (0) target = $region5
    $region4: #{alm_forward.1} parent=1 // pred_region
      _
    $region5: #{alm_forward.1} parent=1 // pred_fallthru
      _
    // Predicated region
    $region6: #{alm_forward.1} parent=1 // pred_check
      _
    $region7: #{alm_forward.1} parent=1 // pred_check_branch
      %103 = sbr.rel (0) target = $region9
    $region8: #{alm_forward.1} parent=1 // pred_region
      _
    $region9: #{alm_forward.1} parent=1 // pred_fallthru
      _
    // Predicated region
    $region10: #{alm_forward.1} parent=1 // pred_check
      _
    $region11: #{alm_forward.1} parent=1 // pred_check_branch
      %105 = sbr.rel (0) target = $region13
    $region12: #{alm_forward.1} parent=1 // pred_region
      _
    $region13: #{alm_forward.1} parent=1 // pred_fallthru
      _
    // Predicated region
    $region14: #{alm_forward.1} parent=1 // pred_check
      _
    $region15: #{alm_forward.1} parent=1 // pred_check_branch
      %107 = sbr.rel (0) target = $region17
    $region16: #{alm_forward.1} parent=1 // pred_region
      _
    $region17: #{alm_forward.1} parent=1 // pred_fallthru
      _
    // Predicated region
    $region18: #{alm_forward.1} parent=1 // pred_check
      _
    $region19: #{alm_forward.1} parent=1 // pred_check_branch
      %109 = sbr.rel (0) target = $region21
    $region20: #{alm_forward.1} parent=1 // pred_region
      _
    $region21: #{alm_forward.1} parent=1 // pred_fallthru
      _
    // Predicated region
    $region22: #{alm_forward.1} parent=1 // pred_check
      _
    $region23: #{alm_forward.1} parent=1 // pred_check_branch
      %111 = sbr.rel (0) target = $region25
    $region24: #{alm_forward.1} parent=1 // pred_region
      %s113 = ssub.s32 128, 128
      %114 = vsyncadd [#allocation4], %s113
      %s116 = sshll.u32 [#allocation3], 4
      %s117 = int_to_ptr.vmem [resolvable:$true] %s116
      %119 = dma.hbm_to_vmem [thread:$0]  %s11, 128, %s117, [#allocation4]
    $region25: #{alm_forward.1} parent=1 // pred_fallthru
      _
    // Predicated region
    $region26: #{alm_forward.1} parent=1 // pred_check
      _
    $region27: #{alm_forward.1} parent=1 // pred_check_branch
      %121 = sbr.rel (0) target = $region29
    $region28: #{alm_forward.1} parent=1 // pred_region
      %s123 = ssub.s32 16, 16
      %124 = vsyncadd [#allocation7], %s123
      %s126 = sshll.u32 [#allocation6], 4
      %s127 = int_to_ptr.vmem [resolvable:$true] %s126
      %129 = dma.hbm_to_vmem [thread:$0]  %s13, 16, %s127, [#allocation7]
    $region29: #{alm_forward.1} parent=1 // pred_fallthru
      _
    // Predicated region
    $region30: #{alm_forward.1} parent=1 // pred_check
      _
    $region31: #{alm_forward.1} parent=1 // pred_check_branch
      %131 = sbr.rel (0) target = $region33
    $region32: #{alm_forward.1} parent=1 // pred_region
      %s133 = ssub.s32 16, 16
      %134 = vsyncadd [#allocation7], %s133
      %s136 = sshll.u32 [#allocation8], 4
      %s137 = int_to_ptr.vmem [resolvable:$true] %s136
      %139 = dma.hbm_to_vmem [thread:$0]  %s15, 16, %s137, [#allocation7]
    $region33: #{alm_forward.1} parent=1 // pred_fallthru
      _
    // Predicated region
    $region34: #{alm_forward.1} parent=1 // pred_check
      _
    $region35: #{alm_forward.1} parent=1 // pred_check_branch
      %141 = sbr.rel (0) target = $region37
    $region36: #{alm_forward.1} parent=1 // pred_region
      %s143 = ssub.s32 6144, 6144
      %144 = vsyncadd [#allocation10], %s143
      %s145 = sshll.u32 [#allocation9], 4
      %s146 = int_to_ptr.vmem [resolvable:$true] %s145
      %151 = dma.hbm_to_vmem [thread:$0]  %s17, 6144, %s146, [#allocation10], 384, 384, 24
    $region37: #{alm_forward.1} parent=1 // pred_fallthru
      _
    // Predicated region
    $region38: #{alm_forward.1} parent=1 // pred_check
      _
    $region39: #{alm_forward.1} parent=1 // pred_check_branch
      %153 = sbr.rel (0) target = $region41
    $region40: #{alm_forward.1} parent=1 // pred_region
      _
    $region41: #{alm_forward.1} parent=1 // pred_fallthru
      _
    // Predicated region
    $region42: #{alm_forward.1} parent=1 // pred_check
      _
    $region43: #{alm_forward.1} parent=1 // pred_check_branch
      %155 = sbr.rel (0) target = $region45
    $region44: #{alm_forward.1} parent=1 // pred_region
      _
    $region45: #{alm_forward.1} parent=1 // pred_fallthru
      _
    // Predicated region
    $region46: #{alm_forward.1} parent=1 // pred_check
      _
    $region47: #{alm_forward.1} parent=1 // pred_check_branch
      %157 = sbr.rel (0) target = $region49
    $region48: #{alm_forward.1} parent=1 // pred_region
      %s159 = ssub.s32 16, 16
      %160 = vsyncadd [#allocation10], %s159
      %s162 = sshll.u32 [#allocation11], 4
      %s163 = int_to_ptr.vmem [resolvable:$true] %s162
      %165 = dma.hbm_to_vmem [thread:$0]  %s23, 16, %s163, [#allocation10]
    $region49: #{alm_forward.1} parent=1 // pred_fallthru
      _
    // Predicated region
    $region50: #{alm_forward.1} parent=1 // pred_check
      _
    $region51: #{alm_forward.1} parent=1 // pred_check_branch
      %167 = sbr.rel (0) target = $region53
    $region52: #{alm_forward.1} parent=1 // pred_region
      %s169 = ssub.s32 16, 16
      %170 = vsyncadd [#allocation13], %s169
      %s172 = sshll.u32 [#allocation12], 4
      %s173 = int_to_ptr.vmem [resolvable:$true] %s172
      %175 = dma.hbm_to_vmem [thread:$0]  %s25, 16, %s173, [#allocation13]
    $region53: #{alm_forward.1} parent=1 // pred_fallthru
      _
    // Predicated region
    $region54: #{alm_forward.1} parent=1 // pred_check
      _
    $region55: #{alm_forward.1} parent=1 // pred_check_branch
      %177 = sbr.rel (0) target = $region57
    $region56: #{alm_forward.1} parent=1 // pred_region
      %s179 = ssub.s32 16, 16
      %180 = vsyncadd [#allocation13], %s179
      %s182 = sshll.u32 [#allocation14], 4
      %s183 = int_to_ptr.vmem [resolvable:$true] %s182
      %185 = dma.hbm_to_vmem [thread:$0]  %s27, 16, %s183, [#allocation13]
    $region57: #{alm_forward.1} parent=1 // pred_fallthru
      _
    // Predicated region
    $region58: #{alm_forward.1} parent=1 // pred_check
      _
    $region59: #{alm_forward.1} parent=1 // pred_check_branch
      %187 = sbr.rel (0) target = $region61
    $region60: #{alm_forward.1} parent=1 // pred_region
      %s189 = ssub.s32 8192, 8192
      %190 = vsyncadd [#allocation16], %s189
      %s191 = sshll.u32 [#allocation15], 4
      %s192 = int_to_ptr.vmem [resolvable:$true] %s191
      %197 = dma.hbm_to_vmem [thread:$0]  %s29, 8192, %s192, [#allocation16], 512, 512, 32
    $region61: #{alm_forward.1} parent=1 // pred_fallthru
      _
    // Predicated region
    $region62: #{alm_forward.1} parent=1 // pred_check
      _
    $region63: #{alm_forward.1} parent=1 // pred_check_branch
      %199 = sbr.rel (0) target = $region65
    $region64: #{alm_forward.1} parent=1 // pred_region
      %s201 = ssub.s32 64, 64
      %202 = vsyncadd [#allocation16], %s201
      %s204 = sshll.u32 [#allocation17], 4
      %s205 = int_to_ptr.vmem [resolvable:$true] %s204
      %207 = dma.hbm_to_vmem [thread:$0]  %s31, 64, %s205, [#allocation16]
    $region65: #{alm_forward.1} parent=1 // pred_fallthru
      _
    // Predicated region
    $region66: #{alm_forward.1} parent=1 // pred_check
      _
    $region67: #{alm_forward.1} parent=1 // pred_check_branch
      %209 = sbr.rel (0) target = $region69
    $region68: #{alm_forward.1} parent=1 // pred_region
      %s211 = ssub.s32 8192, 8192
      %212 = vsyncadd [#allocation19], %s211
      %s213 = sshll.u32 [#allocation18], 4
      %s214 = int_to_ptr.vmem [resolvable:$true] %s213
      %219 = dma.hbm_to_vmem [thread:$0]  %s33, 8192, %s214, [#allocation19], 128, 128, 8
    $region69: #{alm_forward.1} parent=1 // pred_fallthru
      _
    // Predicated region
    $region70: #{alm_forward.1} parent=1 // pred_check
      _
    $region71: #{alm_forward.1} parent=1 // pred_check_branch
      %221 = sbr.rel (0) target = $region73
    $region72: #{alm_forward.1} parent=1 // pred_region
      %s223 = ssub.s32 16, 16
      %224 = vsyncadd [#allocation19], %s223
      %s226 = sshll.u32 [#allocation20], 4
      %s227 = int_to_ptr.vmem [resolvable:$true] %s226
      %229 = dma.hbm_to_vmem [thread:$0]  %s35, 16, %s227, [#allocation19]
    $region73: #{alm_forward.1} parent=1 // pred_fallthru
      _
    // Predicated region
    $region74: #{alm_forward.1} parent=1 // pred_check
      _
    $region75: #{alm_forward.1} parent=1 // pred_check_branch
      %231 = sbr.rel (0) target = $region77
    $region76: #{alm_forward.1} parent=1 // pred_region
      %s233 = ssub.s32 16, 16
      %234 = vsyncadd [#allocation22], %s233
      %s236 = sshll.u32 [#allocation21], 4
      %s237 = int_to_ptr.vmem [resolvable:$true] %s236
      %239 = dma.hbm_to_vmem [thread:$0]  %s37, 16, %s237, [#allocation22]
    $region77: #{alm_forward.1} parent=1 // pred_fallthru
      _
    // Predicated region
    $region78: #{alm_forward.1} parent=1 // pred_check
      _
    $region79: #{alm_forward.1} parent=1 // pred_check_branch
      %241 = sbr.rel (0) target = $region81
    $region80: #{alm_forward.1} parent=1 // pred_region
      %s243 = ssub.s32 16, 16
      %244 = vsyncadd [#allocation22], %s243
      %s246 = sshll.u32 [#allocation23], 4
      %s247 = int_to_ptr.vmem [resolvable:$true] %s246
      %249 = dma.hbm_to_vmem [thread:$0]  %s39, 16, %s247, [#allocation22]
    $region81: #{alm_forward.1} parent=1 // pred_fallthru
      _
    // Predicated region
    $region82: #{alm_forward.1} parent=1 // pred_check
      _
    $region83: #{alm_forward.1} parent=1 // pred_check_branch
      %251 = sbr.rel (0) target = $region85
    $region84: #{alm_forward.1} parent=1 // pred_region
      %s253 = ssub.s32 2048, 2048
      %254 = vsyncadd [#allocation25], %s253
      %s255 = sshll.u32 [#allocation24], 4
      %s256 = int_to_ptr.vmem [resolvable:$true] %s255
      %261 = dma.hbm_to_vmem [thread:$0]  %s41, 2048, %s256, [#allocation25], 128, 128, 8
    $region85: #{alm_forward.1} parent=1 // pred_fallthru
      _
    // Predicated region
    $region86: #{alm_forward.1} parent=1 // pred_check
      _
    $region87: #{alm_forward.1} parent=1 // pred_check_branch
      %263 = sbr.rel (0) target = $region89
    $region88: #{alm_forward.1} parent=1 // pred_region
      _
    $region89: #{alm_forward.1} parent=1 // pred_fallthru
      _
    // Predicated region
    $region90: #{alm_forward.1} parent=1 // pred_check
      _
    $region91: #{alm_forward.1} parent=1 // pred_check_branch
      %265 = sbr.rel (0) target = $region93
    $region92: #{alm_forward.1} parent=1 // pred_region
      %s267 = ssub.s32 2048, 2048
      %268 = vsyncadd [#allocation25], %s267
      %s269 = sshll.u32 [#allocation26], 4
      %s270 = int_to_ptr.vmem [resolvable:$true] %s269
      %275 = dma.hbm_to_vmem [thread:$0]  %s45, 2048, %s270, [#allocation25], 128, 128, 8
    $region93: #{alm_forward.1} parent=1 // pred_fallthru
      _
    // Predicated region
    $region94: #{alm_forward.1} parent=1 // pred_check
      _
    $region95: #{alm_forward.1} parent=1 // pred_check_branch
      %277 = sbr.rel (0) target = $region97
    $region96: #{alm_forward.1} parent=1 // pred_region
      _
    $region97: #{alm_forward.1} parent=1 // pred_fallthru
      _
    // Predicated region
    $region98: #{alm_forward.1} parent=1 // pred_check
      _
    $region99: #{alm_forward.1} parent=1 // pred_check_branch
      %279 = sbr.rel (0) target = $region101
    $region100: #{alm_forward.1} parent=1 // pred_region
      _
    $region101: #{alm_forward.1} parent=1 // pred_fallthru
      _
    // Predicated region
    $region102: #{alm_forward.1} parent=1 // pred_check
      _
    $region103: #{alm_forward.1} parent=1 // pred_check_branch
      %281 = sbr.rel (0) target = $region105
    $region104: #{alm_forward.1} parent=1 // pred_region
      %s283 = ssub.s32 16, 16
      %284 = vsyncadd [#allocation28], %s283
      %s286 = sshll.u32 [#allocation27], 4
      %s287 = int_to_ptr.vmem [resolvable:$true] %s286
      %289 = dma.hbm_to_vmem [thread:$0]  %s51, 16, %s287, [#allocation28]
    $region105: #{alm_forward.1} parent=1 // pred_fallthru
      _
    // Predicated region
    $region106: #{alm_forward.1} parent=1 // pred_check
      _
    $region107: #{alm_forward.1} parent=1 // pred_check_branch
      %291 = sbr.rel (0) target = $region109
    $region108: #{alm_forward.1} parent=1 // pred_region
      %s293 = ssub.s32 6144, 6144
      %294 = vsyncadd [#allocation28], %s293
      %s295 = sshll.u32 [#allocation29], 4
      %s296 = int_to_ptr.vmem [resolvable:$true] %s295
      %301 = dma.hbm_to_vmem [thread:$0]  %s53, 6144, %s296, [#allocation28], 384, 384, 24
    $region109: #{alm_forward.1} parent=1 // pred_fallthru
      _
    // Predicated region
    $region110: #{alm_forward.1} parent=1 // pred_check
      _
    $region111: #{alm_forward.1} parent=1 // pred_check_branch
      %303 = sbr.rel (0) target = $region113
    $region112: #{alm_forward.1} parent=1 // pred_region
      _
    $region113: #{alm_forward.1} parent=1 // pred_fallthru
      _
    // Predicated region
    $region114: #{alm_forward.1} parent=1 // pred_check
      _
    $region115: #{alm_forward.1} parent=1 // pred_check_branch
      %305 = sbr.rel (0) target = $region117
    $region116: #{alm_forward.1} parent=1 // pred_region
      %s307 = ssub.s32 2048, 2048
      %308 = vsyncadd [#allocation31], %s307
      %s309 = sshll.u32 [#allocation30], 4
      %s310 = int_to_ptr.vmem [resolvable:$true] %s309
      %315 = dma.hbm_to_vmem [thread:$0]  %s57, 2048, %s310, [#allocation31], 128, 128, 8
    $region117: #{alm_forward.1} parent=1 // pred_fallthru
      _
    // Predicated region
    $region118: #{alm_forward.1} parent=1 // pred_check
      _
    $region119: #{alm_forward.1} parent=1 // pred_check_branch
      %317 = sbr.rel (0) target = $region121
    $region120: #{alm_forward.1} parent=1 // pred_region
      %s319 = ssub.s32 16, 16
      %320 = vsyncadd [#allocation31], %s319
      %s322 = sshll.u32 [#allocation32], 4
      %s323 = int_to_ptr.vmem [resolvable:$true] %s322
      %325 = dma.hbm_to_vmem [thread:$0]  %s59, 16, %s323, [#allocation31]
    $region121: #{alm_forward.1} parent=1 // pred_fallthru
      _
    // Predicated region
    $region122: #{alm_forward.1} parent=1 // pred_check
      _
    $region123: #{alm_forward.1} parent=1 // pred_check_branch
      %327 = sbr.rel (0) target = $region125
    $region124: #{alm_forward.1} parent=1 // pred_region
      _
    $region125: #{alm_forward.1} parent=1 // pred_fallthru
      _
    // Predicated region
    $region126: #{alm_forward.1} parent=1 // pred_check
      _
    $region127: #{alm_forward.1} parent=1 // pred_check_branch
      %329 = sbr.rel (0) target = $region129
    $region128: #{alm_forward.1} parent=1 // pred_region
      _
    $region129: #{alm_forward.1} parent=1 // pred_fallthru
      _
    // Predicated region
    $region130: #{alm_forward.1} parent=1 // pred_check
      _
    $region131: #{alm_forward.1} parent=1 // pred_check_branch
      %331 = sbr.rel (0) target = $region133
    $region132: #{alm_forward.1} parent=1 // pred_region
      %s333 = ssub.s32 8192, 8192
      %334 = vsyncadd [#allocation34], %s333
      %s335 = sshll.u32 [#allocation33], 4
      %s336 = int_to_ptr.vmem [resolvable:$true] %s335
      %341 = dma.hbm_to_vmem [thread:$0]  %s65, 8192, %s336, [#allocation34], 512, 512, 32
    $region133: #{alm_forward.1} parent=1 // pred_fallthru
      _
    // Predicated region
    $region134: #{alm_forward.1} parent=1 // pred_check
      _
    $region135: #{alm_forward.1} parent=1 // pred_check_branch
      %343 = sbr.rel (0) target = $region137
    $region136: #{alm_forward.1} parent=1 // pred_region
      %s345 = ssub.s32 64, 64
      %346 = vsyncadd [#allocation34], %s345
      %s348 = sshll.u32 [#allocation35], 4
      %s349 = int_to_ptr.vmem [resolvable:$true] %s348
      %351 = dma.hbm_to_vmem [thread:$0]  %s67, 64, %s349, [#allocation34]
    $region137: #{alm_forward.1} parent=1 // pred_fallthru
      _
    // Predicated region
    $region138: #{alm_forward.1} parent=1 // pred_check
      _
    $region139: #{alm_forward.1} parent=1 // pred_check_branch
      %353 = sbr.rel (0) target = $region141
    $region140: #{alm_forward.1} parent=1 // pred_region
      %s355 = ssub.s32 8192, 8192
      %356 = vsyncadd [#allocation37], %s355
      %s357 = sshll.u32 [#allocation36], 4
      %s358 = int_to_ptr.vmem [resolvable:$true] %s357
      %363 = dma.hbm_to_vmem [thread:$0]  %s69, 8192, %s358, [#allocation37], 128, 128, 8
    $region141: #{alm_forward.1} parent=1 // pred_fallthru
      _
    // Predicated region
    $region142: #{alm_forward.1} parent=1 // pred_check
      _
    $region143: #{alm_forward.1} parent=1 // pred_check_branch
      %365 = sbr.rel (0) target = $region145
    $region144: #{alm_forward.1} parent=1 // pred_region
      %s367 = ssub.s32 16, 16
      %368 = vsyncadd [#allocation37], %s367
      %s370 = sshll.u32 [#allocation38], 4
      %s371 = int_to_ptr.vmem [resolvable:$true] %s370
      %373 = dma.hbm_to_vmem [thread:$0]  %s71, 16, %s371, [#allocation37]
    $region145: #{alm_forward.1} parent=1 // pred_fallthru
      _
    // Predicated region
    $region146: #{alm_forward.1} parent=1 // pred_check
      _
    $region147: #{alm_forward.1} parent=1 // pred_check_branch
      %375 = sbr.rel (0) target = $region149
    $region148: #{alm_forward.1} parent=1 // pred_region
      _
    $region149: #{alm_forward.1} parent=1 // pred_fallthru
      _
    // Predicated region
    $region150: #{alm_forward.1} parent=1 // pred_check
      _
    $region151: #{alm_forward.1} parent=1 // pred_check_branch
      %377 = sbr.rel (0) target = $region153
    $region152: #{alm_forward.1} parent=1 // pred_region
      _
    $region153: #{alm_forward.1} parent=1 // pred_fallthru
      _
    // Predicated region
    $region154: #{alm_forward.1} parent=1 // pred_check
      _
    $region155: #{alm_forward.1} parent=1 // pred_check_branch
      %379 = sbr.rel (0) target = $region157
    $region156: #{alm_forward.1} parent=1 // pred_region
      %s381 = ssub.s32 2048, 2048
      %382 = vsyncadd [#allocation40], %s381
      %s383 = sshll.u32 [#allocation39], 4
      %s384 = int_to_ptr.vmem [resolvable:$true] %s383
      %389 = dma.hbm_to_vmem [thread:$0]  %s77, 2048, %s384, [#allocation40], 128, 128, 8
    $region157: #{alm_forward.1} parent=1 // pred_fallthru
      _
    // Predicated region
    $region158: #{alm_forward.1} parent=1 // pred_check
      _
    $region159: #{alm_forward.1} parent=1 // pred_check_branch
      %391 = sbr.rel (0) target = $region161
    $region160: #{alm_forward.1} parent=1 // pred_region
      _
    $region161: #{alm_forward.1} parent=1 // pred_fallthru
      _
    // Predicated region
    $region162: #{alm_forward.1} parent=1 // pred_check
      _
    $region163: #{alm_forward.1} parent=1 // pred_check_branch
      %393 = sbr.rel (0) target = $region165
    $region164: #{alm_forward.1} parent=1 // pred_region
      %394 = dma.done [#allocation4], 128
    $region165: #{alm_forward.1} parent=1 // pred_fallthru
      _
    // Predicated region
    $region166: #{alm_forward.1} parent=1 // pred_check
      _
    $region167: #{alm_forward.1} parent=1 // pred_check_branch
      %396 = sbr.rel (0) target = $region169
    $region168: #{alm_forward.1} parent=1 // pred_region
      %397 = dma.done [#allocation7], 16
    $region169: #{alm_forward.1} parent=1 // pred_fallthru
      _
    // Predicated region
    $region170: #{alm_forward.1} parent=1 // pred_check
      _
    $region171: #{alm_forward.1} parent=1 // pred_check_branch
      %399 = sbr.rel (0) target = $region173
    $region172: #{alm_forward.1} parent=1 // pred_region
      %400 = dma.done [#allocation7], 16
    $region173: #{alm_forward.1} parent=1 // pred_fallthru
      _
    // Predicated region
    $region174: #{alm_forward.1} parent=1 // pred_check
      _
    $region175: #{alm_forward.1} parent=1 // pred_check_branch
      %402 = sbr.rel (0) target = $region177
    $region176: #{alm_forward.1} parent=1 // pred_region
      %403 = dma.done [#allocation10], 6144
    $region177: #{alm_forward.1} parent=1 // pred_fallthru
      _
    // Predicated region
    $region178: #{alm_forward.1} parent=1 // pred_check
      _
    $region179: #{alm_forward.1} parent=1 // pred_check_branch
      %405 = sbr.rel (0) target = $region181
    $region180: #{alm_forward.1} parent=1 // pred_region
      %406 = dma.done [#allocation10], 16
    $region181: #{alm_forward.1} parent=1 // pred_fallthru
      _
    // Predicated region
    $region182: #{alm_forward.1} parent=1 // pred_check
      _
    $region183: #{alm_forward.1} parent=1 // pred_check_branch
      %408 = sbr.rel (0) target = $region185
    $region184: #{alm_forward.1} parent=1 // pred_region
      %409 = dma.done [#allocation13], 16
    $region185: #{alm_forward.1} parent=1 // pred_fallthru
      _
    // Predicated region
    $region186: #{alm_forward.1} parent=1 // pred_check
      _
    $region187: #{alm_forward.1} parent=1 // pred_check_branch
      %411 = sbr.rel (0) target = $region189
    $region188: #{alm_forward.1} parent=1 // pred_region
      %412 = dma.done [#allocation13], 16
    $region189: #{alm_forward.1} parent=1 // pred_fallthru
      _
    // Predicated region
    $region190: #{alm_forward.1} parent=1 // pred_check
      _
    $region191: #{alm_forward.1} parent=1 // pred_check_branch
      %414 = sbr.rel (0) target = $region193
    $region192: #{alm_forward.1} parent=1 // pred_region
      %415 = dma.done [#allocation16], 8192
    $region193: #{alm_forward.1} parent=1 // pred_fallthru
      _
    // Predicated region
    $region194: #{alm_forward.1} parent=1 // pred_check
      _
    $region195: #{alm_forward.1} parent=1 // pred_check_branch
      %417 = sbr.rel (0) target = $region197
    $region196: #{alm_forward.1} parent=1 // pred_region
      %418 = dma.done [#allocation16], 64
    $region197: #{alm_forward.1} parent=1 // pred_fallthru
      _
    // Predicated region
    $region198: #{alm_forward.1} parent=1 // pred_check
      _
    $region199: #{alm_forward.1} parent=1 // pred_check_branch
      %420 = sbr.rel (0) target = $region201
    $region200: #{alm_forward.1} parent=1 // pred_region
      %421 = dma.done [#allocation19], 8192
    $region201: #{alm_forward.1} parent=1 // pred_fallthru
      _
    // Predicated region
    $region202: #{alm_forward.1} parent=1 // pred_check
      _
    $region203: #{alm_forward.1} parent=1 // pred_check_branch
      %423 = sbr.rel (0) target = $region205
    $region204: #{alm_forward.1} parent=1 // pred_region
      %424 = dma.done [#allocation19], 16
    $region205: #{alm_forward.1} parent=1 // pred_fallthru
      _
    // Predicated region
    $region206: #{alm_forward.1} parent=1 // pred_check
      _
    $region207: #{alm_forward.1} parent=1 // pred_check_branch
      %426 = sbr.rel (0) target = $region209
    $region208: #{alm_forward.1} parent=1 // pred_region
      %427 = dma.done [#allocation22], 16
    $region209: #{alm_forward.1} parent=1 // pred_fallthru
      _
    // Predicated region
    $region210: #{alm_forward.1} parent=1 // pred_check
      _
    $region211: #{alm_forward.1} parent=1 // pred_check_branch
      %429 = sbr.rel (0) target = $region213
    $region212: #{alm_forward.1} parent=1 // pred_region
      %430 = dma.done [#allocation22], 16
    $region213: #{alm_forward.1} parent=1 // pred_fallthru
      _
    // Predicated region
    $region214: #{alm_forward.1} parent=1 // pred_check
      _
    $region215: #{alm_forward.1} parent=1 // pred_check_branch
      %432 = sbr.rel (0) target = $region217
    $region216: #{alm_forward.1} parent=1 // pred_region
      %433 = dma.done [#allocation25], 2048
    $region217: #{alm_forward.1} parent=1 // pred_fallthru
      _
    // Predicated region
    $region218: #{alm_forward.1} parent=1 // pred_check
      _
    $region219: #{alm_forward.1} parent=1 // pred_check_branch
      %435 = sbr.rel (0) target = $region221
    $region220: #{alm_forward.1} parent=1 // pred_region
      %436 = dma.done [#allocation25], 2048
    $region221: #{alm_forward.1} parent=1 // pred_fallthru
      _
    // Predicated region
    $region222: #{alm_forward.1} parent=1 // pred_check
      _
    $region223: #{alm_forward.1} parent=1 // pred_check_branch
      %438 = sbr.rel (0) target = $region225
    $region224: #{alm_forward.1} parent=1 // pred_region
      %439 = dma.done [#allocation28], 16
    $region225: #{alm_forward.1} parent=1 // pred_fallthru
      _
    // Predicated region
    $region226: #{alm_forward.1} parent=1 // pred_check
      _
    $region227: #{alm_forward.1} parent=1 // pred_check_branch
      %441 = sbr.rel (0) target = $region229
    $region228: #{alm_forward.1} parent=1 // pred_region
      %442 = dma.done [#allocation28], 6144
    $region229: #{alm_forward.1} parent=1 // pred_fallthru
      _
    // Predicated region
    $region230: #{alm_forward.1} parent=1 // pred_check
      _
    $region231: #{alm_forward.1} parent=1 // pred_check_branch
      %444 = sbr.rel (0) target = $region233
    $region232: #{alm_forward.1} parent=1 // pred_region
      %445 = dma.done [#allocation31], 2048
    $region233: #{alm_forward.1} parent=1 // pred_fallthru
      _
    // Predicated region
    $region234: #{alm_forward.1} parent=1 // pred_check
      _
    $region235: #{alm_forward.1} parent=1 // pred_check_branch
      %447 = sbr.rel (0) target = $region237
    $region236: #{alm_forward.1} parent=1 // pred_region
      %448 = dma.done [#allocation31], 16
    $region237: #{alm_forward.1} parent=1 // pred_fallthru
      _
    // Predicated region
    $region238: #{alm_forward.1} parent=1 // pred_check
      _
    $region239: #{alm_forward.1} parent=1 // pred_check_branch
      %450 = sbr.rel (0) target = $region241
    $region240: #{alm_forward.1} parent=1 // pred_region
      %451 = dma.done [#allocation34], 8192
    $region241: #{alm_forward.1} parent=1 // pred_fallthru
      _
    // Predicated region
    $region242: #{alm_forward.1} parent=1 // pred_check
      _
    $region243: #{alm_forward.1} parent=1 // pred_check_branch
      %453 = sbr.rel (0) target = $region245
    $region244: #{alm_forward.1} parent=1 // pred_region
      %454 = dma.done [#allocation34], 64
    $region245: #{alm_forward.1} parent=1 // pred_fallthru
      _
    // Predicated region
    $region246: #{alm_forward.1} parent=1 // pred_check
      _
    $region247: #{alm_forward.1} parent=1 // pred_check_branch
      %456 = sbr.rel (0) target = $region249
    $region248: #{alm_forward.1} parent=1 // pred_region
      %457 = dma.done [#allocation37], 8192
    $region249: #{alm_forward.1} parent=1 // pred_fallthru
      _
    // Predicated region
    $region250: #{alm_forward.1} parent=1 // pred_check
      _
    $region251: #{alm_forward.1} parent=1 // pred_check_branch
      %459 = sbr.rel (0) target = $region253
    $region252: #{alm_forward.1} parent=1 // pred_region
      %460 = dma.done [#allocation37], 16
    $region253: #{alm_forward.1} parent=1 // pred_fallthru
      _
    // Predicated region
    $region254: #{alm_forward.1} parent=1 // pred_check
      _
    $region255: #{alm_forward.1} parent=1 // pred_check_branch
      %462 = sbr.rel (0) target = $region257
    $region256: #{alm_forward.1} parent=1 // pred_region
      %463 = dma.done [#allocation40], 2048
    $region257: #{alm_forward.1} parent=1 // pred_fallthru
      _
    %v464 = vld [vmem:[%s1] sm:$0xff]
    %v465 = vld [vmem:[%s1 + $0x8] sm:$0xff]
    %v466 = vld [vmem:[%s7] sm:$0xff]
    %v467 = vld [vmem:[%s7 + $0x8] sm:$0xff]
    %v468 = vld [vmem:[%s7 + $0x10] sm:$0xff]
    %v469 = vld [vmem:[%s7 + $0x18] sm:$0xff]
    %v470 = vld [vmem:[%s9] sm:$0x1]
    %v472 = vlaneseq
    %v473 = vshrl.u32 %v472, 7
    %v474 = vsub.s32 0, %v473
    %v475 = vrot.slane %v470, %v474
    %vm477 = vcmask 261120
    %v479 = vsel %vm477, %v464, 0
    %v482 = vsel %vm477, %v465, 0
    %484 = vmatprep.subr.mxu0 0.0
    %485 = vmatpush1.msra.mxu0 %v466
    %486 = vmatprep.subr.mxu0 0.0
    %487 = vmatpush1.msra.mxu0 %v467
    %488 = vmatprep.subr.mxu0 0.0
    %489 = vmatpush1.msra.mxu0 %v468
    %490 = vmatprep.subr.mxu0 0.0
    %491 = vmatpush1.msra.mxu0 %v469
    %492 = vmatprep.subr.mxu0 0.0
    %493 = vmatpush1.msra.mxu0 0.0
    %494 = vmatprep.subr.mxu0 0.0
    %495 = vmatpush1.msra.mxu0 0.0
    %496 = vmatprep.subr.mxu0 0.0
    %497 = vmatpush1.msra.mxu0 0.0
    %498 = vmatprep.subr.mxu0 0.0
    %499 = vmatpush1.msra.mxu0 0.0
    %500 = vmatprep.subr.mxu0 0.0
    %501 = vmatpush1.msra.mxu0 0.0
    %502 = vmatprep.subr.mxu0 0.0
    %503 = vmatpush1.msra.mxu0 0.0
    %504 = vmatprep.subr.mxu0 0.0
    %505 = vmatpush1.msra.mxu0 0.0
    %506 = vmatprep.subr.mxu0 0.0
    %507 = vmatpush1.msra.mxu0 0.0
    %508 = vmatprep.subr.mxu0 0.0
    %509 = vmatpush1.msra.mxu0 0.0
    %510 = vmatprep.subr.mxu0 0.0
    %511 = vmatpush1.msra.mxu0 0.0
    %512 = vmatprep.subr.mxu0 0.0
    %513 = vmatpush1.msra.mxu0 0.0
    %514 = vmatprep.subr.mxu0 0.0
    %515 = vmatpush1.msra.mxu0 0.0
    %516 = vmatprep.subr.mxu0 0.0
    %517 = vmatpush1.msra.mxu0 0.0
    %518 = vmatprep.subr.mxu0 0.0
    %519 = vmatpush1.msra.mxu0 0.0
    %520 = vmatprep.subr.mxu0 0.0
    %521 = vmatpush1.msra.mxu0 0.0
    %522 = vmatprep.subr.mxu0 0.0
    %523 = vmatpush1.msra.mxu0 0.0
    %524 = vmatprep.subr.mxu0 0.0
    %525 = vmatpush1.msra.mxu0 0.0
    %526 = vmatprep.subr.mxu0 0.0
    %527 = vmatpush1.msra.mxu0 0.0
    %528 = vmatprep.subr.mxu0 0.0
    %529 = vmatpush1.msra.mxu0 0.0
    %530 = vmatprep.subr.mxu0 0.0
    %531 = vmatpush1.msra.mxu0 0.0
    %532 = vmatprep.subr.mxu0 0.0
    %533 = vmatpush1.msra.mxu0 0.0
    %534 = vmatprep.subr.mxu0 0.0
    %535 = vmatpush1.msra.mxu0 0.0
    %536 = vmatprep.subr.mxu0 0.0
    %537 = vmatpush1.msra.mxu0 0.0
    %538 = vmatprep.subr.mxu0 0.0
    %539 = vmatpush1.msra.mxu0 0.0
    %540 = vmatprep.subr.mxu0 0.0
    %541 = vmatpush1.msra.mxu0 0.0
    %542 = vmatprep.subr.mxu0 0.0
    %543 = vmatpush1.msra.mxu0 0.0
    %544 = vmatprep.subr.mxu0 0.0
    %545 = vmatpush1.msra.mxu0 0.0
    %546 = vmatprep.subr.mxu0 0.0
    %547 = vmatpush1.msra.mxu0 0.0
    %548 = vmatprep.mubr.f32.mxu0 0.0
    %549 = vmatmul.mubr.f32.gmra.mrb[0].mxu0 %v479
    %v550 = vpop.f32.mrb[0].mxu0
    %v551 = vadd.f32 %v475, %v550
    %v552 = vpop.f32.mrb[0].mxu0
    %553 = vmatprep.mubr.f32.mxu0 0.0
    %554 = vmatmul.mubr.f32.gmra.mrb[0].mxu0 %v482
    %v555 = vpop.f32.mrb[0].mxu0
    %v556 = vadd.f32 %v475, %v555
    %v557 = vpop.f32.mrb[0].mxu0
    %558 = vdwg.mxu0
    %v559 = vld [vmem:[#allocation3] sm:$0xff]
    %v560 = vadd.f32 %v551, %v559
    %v561 = vadd.f32 %v556, %v559
    %v562 = vld [vmem:[#allocation6] sm:$0x1]
    %v563 = vld [vmem:[#allocation8] sm:$0x1]
    %v564 = vld [vmem:[#allocation9] sm:$0xff]
    %v565 = vld [vmem:[#allocation9 + $0x8] sm:$0xff]
    %v566 = vld [vmem:[#allocation9 + $0x10] sm:$0xff]
    %v567 = vld [vmem:[#allocation9 + $0x18] sm:$0xff]
    %v568 = vld [vmem:[#allocation9 + $0x20] sm:$0xff]
    %v569 = vld [vmem:[#allocation9 + $0x28] sm:$0xff]
    %v570 = vld [vmem:[#allocation9 + $0x30] sm:$0xff]
    %v571 = vld [vmem:[#allocation9 + $0x38] sm:$0xff]
    %v572 = vld [vmem:[#allocation9 + $0x40] sm:$0xff]
    %v573 = vld [vmem:[#allocation9 + $0x48] sm:$0xff]
    %v574 = vld [vmem:[#allocation9 + $0x50] sm:$0xff]
    %v575 = vld [vmem:[#allocation9 + $0x58] sm:$0xff]
    %v576 = vld [vmem:[#allocation9 + $0x60] sm:$0xff]
    %v577 = vld [vmem:[#allocation9 + $0x68] sm:$0xff]
    %v578 = vld [vmem:[#allocation9 + $0x70] sm:$0xff]
    %v579 = vld [vmem:[#allocation9 + $0x78] sm:$0xff]
    %v580 = vld [vmem:[#allocation9 + $0x80] sm:$0xff]
    %v581 = vld [vmem:[#allocation9 + $0x88] sm:$0xff]
    %v582 = vld [vmem:[#allocation9 + $0x90] sm:$0xff]
    %v583 = vld [vmem:[#allocation9 + $0x98] sm:$0xff]
    %v584 = vld [vmem:[#allocation9 + $0xa0] sm:$0xff]
    %v585 = vld [vmem:[#allocation9 + $0xa8] sm:$0xff]
    %v586 = vld [vmem:[#allocation9 + $0xb0] sm:$0xff]
    %v587 = vld [vmem:[#allocation9 + $0xb8] sm:$0xff]
    %v588 = vld [vmem:[#allocation9 + $0xc0] sm:$0xff]
    %v589 = vld [vmem:[#allocation9 + $0xc8] sm:$0xff]
    %v590 = vld [vmem:[#allocation9 + $0xd0] sm:$0xff]
    %v591 = vld [vmem:[#allocation9 + $0xd8] sm:$0xff]
    %v592 = vld [vmem:[#allocation9 + $0xe0] sm:$0xff]
    %v593 = vld [vmem:[#allocation9 + $0xe8] sm:$0xff]
    %v594 = vld [vmem:[#allocation9 + $0xf0] sm:$0xff]
    %v595 = vld [vmem:[#allocation9 + $0xf8] sm:$0xff]
    %v596 = vld [vmem:[#allocation9 + $0x100] sm:$0xff]
    %v597 = vld [vmem:[#allocation9 + $0x108] sm:$0xff]
    %v598 = vld [vmem:[#allocation9 + $0x110] sm:$0xff]
    %v599 = vld [vmem:[#allocation9 + $0x118] sm:$0xff]
    %v600 = vld [vmem:[#allocation9 + $0x120] sm:$0xff]
    %v601 = vld [vmem:[#allocation9 + $0x128] sm:$0xff]
    %v602 = vld [vmem:[#allocation9 + $0x130] sm:$0xff]
    %v603 = vld [vmem:[#allocation9 + $0x138] sm:$0xff]
    %v604 = vld [vmem:[#allocation9 + $0x140] sm:$0xff]
    %v605 = vld [vmem:[#allocation9 + $0x148] sm:$0xff]
    %v606 = vld [vmem:[#allocation9 + $0x150] sm:$0xff]
    %v607 = vld [vmem:[#allocation9 + $0x158] sm:$0xff]
    %v608 = vld [vmem:[#allocation9 + $0x160] sm:$0xff]
    %v609 = vld [vmem:[#allocation9 + $0x168] sm:$0xff]
    %v610 = vld [vmem:[#allocation9 + $0x170] sm:$0xff]
    %v611 = vld [vmem:[#allocation9 + $0x178] sm:$0xff]
    %v612 = vld [vmem:[%s19] sm:$0x7]
    %v613 = vld [vmem:[%s21] sm:$0xff]
    %v614 = vld [vmem:[%s21 + $0x8] sm:$0xff]
    %v615 = vld [vmem:[%s21 + $0x10] sm:$0xff]
    %v616 = vld [vmem:[%s21 + $0x18] sm:$0xff]
    %v617 = vld [vmem:[%s21 + $0x20] sm:$0xff]
    %v618 = vld [vmem:[%s21 + $0x28] sm:$0xff]
    %v619 = vld [vmem:[%s21 + $0x30] sm:$0xff]
    %v620 = vld [vmem:[%s21 + $0x38] sm:$0xff]
    %v621 = vld [vmem:[%s21 + $0x40] sm:$0xff]
    %v622 = vld [vmem:[%s21 + $0x48] sm:$0xff]
    %v623 = vld [vmem:[%s21 + $0x50] sm:$0xff]
    %v624 = vld [vmem:[%s21 + $0x58] sm:$0xff]
    %v625 = vld [vmem:[%s21 + $0x60] sm:$0xff]
    %v626 = vld [vmem:[%s21 + $0x68] sm:$0xff]
    %v627 = vld [vmem:[%s21 + $0x70] sm:$0xff]
    %v628 = vld [vmem:[%s21 + $0x78] sm:$0xff]
    %v629 = vld [vmem:[#allocation11] sm:$0x1]
    %v630 = vld [vmem:[#allocation12] sm:$0x1]
    %v631 = vld [vmem:[#allocation14] sm:$0x1]
    %v632 = vld [vmem:[#allocation15] sm:$0xff]
    %v633 = vld [vmem:[#allocation15 + $0x8] sm:$0xff]
    %v634 = vld [vmem:[#allocation15 + $0x10] sm:$0xff]
    %v635 = vld [vmem:[#allocation15 + $0x18] sm:$0xff]
    %v636 = vld [vmem:[#allocation15 + $0x20] sm:$0xff]
    %v637 = vld [vmem:[#allocation15 + $0x28] sm:$0xff]
    %v638 = vld [vmem:[#allocation15 + $0x30] sm:$0xff]
    %v639 = vld [vmem:[#allocation15 + $0x38] sm:$0xff]
    %v640 = vld [vmem:[#allocation15 + $0x40] sm:$0xff]
    %v641 = vld [vmem:[#allocation15 + $0x48] sm:$0xff]
    %v642 = vld [vmem:[#allocation15 + $0x50] sm:$0xff]
    %v643 = vld [vmem:[#allocation15 + $0x58] sm:$0xff]
    %v644 = vld [vmem:[#allocation15 + $0x60] sm:$0xff]
    %v645 = vld [vmem:[#allocation15 + $0x68] sm:$0xff]
    %v646 = vld [vmem:[#allocation15 + $0x70] sm:$0xff]
    %v647 = vld [vmem:[#allocation15 + $0x78] sm:$0xff]
    %v648 = vld [vmem:[#allocation15 + $0x80] sm:$0xff]
    %v649 = vld [vmem:[#allocation15 + $0x88] sm:$0xff]
    %v650 = vld [vmem:[#allocation15 + $0x90] sm:$0xff]
    %v651 = vld [vmem:[#allocation15 + $0x98] sm:$0xff]
    %v652 = vld [vmem:[#allocation15 + $0xa0] sm:$0xff]
    %v653 = vld [vmem:[#allocation15 + $0xa8] sm:$0xff]
    %v654 = vld [vmem:[#allocation15 + $0xb0] sm:$0xff]
    %v655 = vld [vmem:[#allocation15 + $0xb8] sm:$0xff]
    %v656 = vld [vmem:[#allocation15 + $0xc0] sm:$0xff]
    %v657 = vld [vmem:[#allocation15 + $0xc8] sm:$0xff]
    %v658 = vld [vmem:[#allocation15 + $0xd0] sm:$0xff]
    %v659 = vld [vmem:[#allocation15 + $0xd8] sm:$0xff]
    %v660 = vld [vmem:[#allocation15 + $0xe0] sm:$0xff]
    %v661 = vld [vmem:[#allocation15 + $0xe8] sm:$0xff]
    %v662 = vld [vmem:[#allocation15 + $0xf0] sm:$0xff]
    %v663 = vld [vmem:[#allocation15 + $0xf8] sm:$0xff]
    %v664 = vld [vmem:[#allocation15 + $0x100] sm:$0xff]
    %v665 = vld [vmem:[#allocation15 + $0x108] sm:$0xff]
    %v666 = vld [vmem:[#allocation15 + $0x110] sm:$0xff]
    %v667 = vld [vmem:[#allocation15 + $0x118] sm:$0xff]
    %v668 = vld [vmem:[#allocation15 + $0x120] sm:$0xff]
    %v669 = vld [vmem:[#allocation15 + $0x128] sm:$0xff]
    %v670 = vld [vmem:[#allocation15 + $0x130] sm:$0xff]
    %v671 = vld [vmem:[#allocation15 + $0x138] sm:$0xff]
    %v672 = vld [vmem:[#allocation15 + $0x140] sm:$0xff]
    %v673 = vld [vmem:[#allocation15 + $0x148] sm:$0xff]
    %v674 = vld [vmem:[#allocation15 + $0x150] sm:$0xff]
    %v675 = vld [vmem:[#allocation15 + $0x158] sm:$0xff]
    %v676 = vld [vmem:[#allocation15 + $0x160] sm:$0xff]
    %v677 = vld [vmem:[#allocation15 + $0x168] sm:$0xff]
    %v678 = vld [vmem:[#allocation15 + $0x170] sm:$0xff]
    %v679 = vld [vmem:[#allocation15 + $0x178] sm:$0xff]
    %v680 = vld [vmem:[#allocation15 + $0x180] sm:$0xff]
    %v681 = vld [vmem:[#allocation15 + $0x188] sm:$0xff]
    %v682 = vld [vmem:[#allocation15 + $0x190] sm:$0xff]
    %v683 = vld [vmem:[#allocation15 + $0x198] sm:$0xff]
    %v684 = vld [vmem:[#allocation15 + $0x1a0] sm:$0xff]
    %v685 = vld [vmem:[#allocation15 + $0x1a8] sm:$0xff]
    %v686 = vld [vmem:[#allocation15 + $0x1b0] sm:$0xff]
    %v687 = vld [vmem:[#allocation15 + $0x1b8] sm:$0xff]
    %v688 = vld [vmem:[#allocation15 + $0x1c0] sm:$0xff]
    %v689 = vld [vmem:[#allocation15 + $0x1c8] sm:$0xff]
    %v690 = vld [vmem:[#allocation15 + $0x1d0] sm:$0xff]
    %v691 = vld [vmem:[#allocation15 + $0x1d8] sm:$0xff]
    %v692 = vld [vmem:[#allocation15 + $0x1e0] sm:$0xff]
    %v693 = vld [vmem:[#allocation15 + $0x1e8] sm:$0xff]
    %v694 = vld [vmem:[#allocation15 + $0x1f0] sm:$0xff]
    %v695 = vld [vmem:[#allocation15 + $0x1f8] sm:$0xff]
    %v696 = vld [vmem:[#allocation17] sm:$0xf]
    %v697 = vld [vmem:[#allocation18] sm:$0xff]
    %v698 = vld [vmem:[#allocation18 + $0x8] sm:$0xff]
    %v699 = vld [vmem:[#allocation18 + $0x10] sm:$0xff]
    %v700 = vld [vmem:[#allocation18 + $0x18] sm:$0xff]
    %v701 = vld [vmem:[#allocation18 + $0x20] sm:$0xff]
    %v702 = vld [vmem:[#allocation18 + $0x28] sm:$0xff]
    %v703 = vld [vmem:[#allocation18 + $0x30] sm:$0xff]
    %v704 = vld [vmem:[#allocation18 + $0x38] sm:$0xff]
    %v705 = vld [vmem:[#allocation18 + $0x40] sm:$0xff]
    %v706 = vld [vmem:[#allocation18 + $0x48] sm:$0xff]
    %v707 = vld [vmem:[#allocation18 + $0x50] sm:$0xff]
    %v708 = vld [vmem:[#allocation18 + $0x58] sm:$0xff]
    %v709 = vld [vmem:[#allocation18 + $0x60] sm:$0xff]
    %v710 = vld [vmem:[#allocation18 + $0x68] sm:$0xff]
    %v711 = vld [vmem:[#allocation18 + $0x70] sm:$0xff]
    %v712 = vld [vmem:[#allocation18 + $0x78] sm:$0xff]
    %v713 = vld [vmem:[#allocation18 + $0x80] sm:$0xff]
    %v714 = vld [vmem:[#allocation18 + $0x88] sm:$0xff]
    %v715 = vld [vmem:[#allocation18 + $0x90] sm:$0xff]
    %v716 = vld [vmem:[#allocation18 + $0x98] sm:$0xff]
    %v717 = vld [vmem:[#allocation18 + $0xa0] sm:$0xff]
    %v718 = vld [vmem:[#allocation18 + $0xa8] sm:$0xff]
    %v719 = vld [vmem:[#allocation18 + $0xb0] sm:$0xff]
    %v720 = vld [vmem:[#allocation18 + $0xb8] sm:$0xff]
    %v721 = vld [vmem:[#allocation18 + $0xc0] sm:$0xff]
    %v722 = vld [vmem:[#allocation18 + $0xc8] sm:$0xff]
    %v723 = vld [vmem:[#allocation18 + $0xd0] sm:$0xff]
    %v724 = vld [vmem:[#allocation18 + $0xd8] sm:$0xff]
    %v725 = vld [vmem:[#allocation18 + $0xe0] sm:$0xff]
    %v726 = vld [vmem:[#allocation18 + $0xe8] sm:$0xff]
    %v727 = vld [vmem:[#allocation18 + $0xf0] sm:$0xff]
    %v728 = vld [vmem:[#allocation18 + $0xf8] sm:$0xff]
    %v729 = vld [vmem:[#allocation18 + $0x100] sm:$0xff]
    %v730 = vld [vmem:[#allocation18 + $0x108] sm:$0xff]
    %v731 = vld [vmem:[#allocation18 + $0x110] sm:$0xff]
    %v732 = vld [vmem:[#allocation18 + $0x118] sm:$0xff]
    %v733 = vld [vmem:[#allocation18 + $0x120] sm:$0xff]
    %v734 = vld [vmem:[#allocation18 + $0x128] sm:$0xff]
    %v735 = vld [vmem:[#allocation18 + $0x130] sm:$0xff]
    %v736 = vld [vmem:[#allocation18 + $0x138] sm:$0xff]
    %v737 = vld [vmem:[#allocation18 + $0x140] sm:$0xff]
    %v738 = vld [vmem:[#allocation18 + $0x148] sm:$0xff]
    %v739 = vld [vmem:[#allocation18 + $0x150] sm:$0xff]
    %v740 = vld [vmem:[#allocation18 + $0x158] sm:$0xff]
    %v741 = vld [vmem:[#allocation18 + $0x160] sm:$0xff]
    %v742 = vld [vmem:[#allocation18 + $0x168] sm:$0xff]
    %v743 = vld [vmem:[#allocation18 + $0x170] sm:$0xff]
    %v744 = vld [vmem:[#allocation18 + $0x178] sm:$0xff]
    %v745 = vld [vmem:[#allocation18 + $0x180] sm:$0xff]
    %v746 = vld [vmem:[#allocation18 + $0x188] sm:$0xff]
    %v747 = vld [vmem:[#allocation18 + $0x190] sm:$0xff]
    %v748 = vld [vmem:[#allocation18 + $0x198] sm:$0xff]
    %v749 = vld [vmem:[#allocation18 + $0x1a0] sm:$0xff]
    %v750 = vld [vmem:[#allocation18 + $0x1a8] sm:$0xff]
    %v751 = vld [vmem:[#allocation18 + $0x1b0] sm:$0xff]
    %v752 = vld [vmem:[#allocation18 + $0x1b8] sm:$0xff]
    %v753 = vld [vmem:[#allocation18 + $0x1c0] sm:$0xff]
    %v754 = vld [vmem:[#allocation18 + $0x1c8] sm:$0xff]
    %v755 = vld [vmem:[#allocation18 + $0x1d0] sm:$0xff]
    %v756 = vld [vmem:[#allocation18 + $0x1d8] sm:$0xff]
    %v757 = vld [vmem:[#allocation18 + $0x1e0] sm:$0xff]
    %v758 = vld [vmem:[#allocation18 + $0x1e8] sm:$0xff]
    %v759 = vld [vmem:[#allocation18 + $0x1f0] sm:$0xff]
    %v760 = vld [vmem:[#allocation18 + $0x1f8] sm:$0xff]
    %v761 = vld [vmem:[#allocation20] sm:$0x1]
    %762 = vadd.xlane.f32.xlu0 %v560
    %v763 = vpop.xlane.xlu0 %762
    %764 = vadd.xlane.f32.xlu0 %v561
    %v765 = vpop.xlane.xlu0 %764
    %v766 = vrcp.pop 128.0
    %v767 = vmul.f32 %v763, %v766
    %v768 = vmul.f32 %v765, %v766
    %v769 = vsub.f32 %v560, %v767
    %v770 = vsub.f32 %v561, %v768
    %v771 = vmul.f32 %v769, %v769
    %v772 = vmul.f32 %v770, %v770
    %773 = vadd.xlane.f32.xlu0 %v771
    %v774 = vpop.xlane.xlu0 %773
    %775 = vadd.xlane.f32.xlu0 %v772
    %v776 = vpop.xlane.xlu0 %775
    %v777 = vmul.f32 %v774, %v766
    %v778 = vmul.f32 %v776, %v766
    %v779 = vadd.f32 %v777, 1e-05
    %v780 = vadd.f32 %v778, 1e-05
    %v781 = vrsqrt.pop %v779
    %v782 = vrsqrt.pop %v780
    %v783 = vmul.f32 %v769, %v781
    %v784 = vmul.f32 %v770, %v782
    %v786 = vlaneseq
    %v787 = vshrl.u32 %v786, 7
    %v788 = vsub.s32 0, %v787
    %v789 = vrot.slane %v562, %v788
    %v791 = vmul.f32 %v783, %v789
    %v792 = vmul.f32 %v784, %v789
    %v794 = vlaneseq
    %v795 = vshrl.u32 %v794, 7
    %v796 = vsub.s32 0, %v795
    %v797 = vrot.slane %v563, %v796
    %v799 = vadd.f32 %v791, %v797
    %v800 = vadd.f32 %v792, %v797
    %v802 = vlaneseq
    %v803 = vshrl.u32 %v802, 7
    %v804 = vsub.s32 0, %v803
    %v805 = vrot.slane %v612, %v804
    %v806 = vlaneseq
    %v807 = vshrl.u32 %v806, 7
    %v808 = vsub.s32 1, %v807
    %v809 = vrot.slane %v612, %v808
    %v810 = vlaneseq
    %v811 = vshrl.u32 %v810, 7
    %v812 = vsub.s32 2, %v811
    %v813 = vrot.slane %v612, %v812
    %817 = vmatprep.subr.mxu0 %v565
    %818 = vmatpush1.msra.mxu0 %v564
    %819 = vmatprep.subr.mxu0 %v568
    %820 = vmatpush1.msra.mxu0 %v567
    %821 = vmatprep.subr.mxu0 %v571
    %822 = vmatpush1.msra.mxu0 %v570
    %823 = vmatprep.subr.mxu0 %v574
    %824 = vmatpush1.msra.mxu0 %v573
    %825 = vmatprep.subr.mxu0 %v577
    %826 = vmatpush1.msra.mxu0 %v576
    %827 = vmatprep.subr.mxu0 %v580
    %828 = vmatpush1.msra.mxu0 %v579
    %829 = vmatprep.subr.mxu0 %v583
    %830 = vmatpush1.msra.mxu0 %v582
    %831 = vmatprep.subr.mxu0 %v586
    %832 = vmatpush1.msra.mxu0 %v585
    %833 = vmatprep.subr.mxu0 %v589
    %834 = vmatpush1.msra.mxu0 %v588
    %835 = vmatprep.subr.mxu0 %v592
    %836 = vmatpush1.msra.mxu0 %v591
    %837 = vmatprep.subr.mxu0 %v595
    %838 = vmatpush1.msra.mxu0 %v594
    %839 = vmatprep.subr.mxu0 %v598
    %840 = vmatpush1.msra.mxu0 %v597
    %841 = vmatprep.subr.mxu0 %v601
    %842 = vmatpush1.msra.mxu0 %v600
    %843 = vmatprep.subr.mxu0 %v604
    %844 = vmatpush1.msra.mxu0 %v603
    %845 = vmatprep.subr.mxu0 %v607
    %846 = vmatpush1.msra.mxu0 %v606
    %847 = vmatprep.subr.mxu0 %v610
    %848 = vmatpush1.msra.mxu0 %v609
    %849 = vmatprep.subr.mxu0 0.0
    %850 = vmatpush1.msra.mxu0 0.0
    %851 = vmatprep.subr.mxu0 0.0
    %852 = vmatpush1.msra.mxu0 0.0
    %853 = vmatprep.subr.mxu0 0.0
    %854 = vmatpush1.msra.mxu0 0.0
    %855 = vmatprep.subr.mxu0 0.0
    %856 = vmatpush1.msra.mxu0 0.0
    %857 = vmatprep.subr.mxu0 0.0
    %858 = vmatpush1.msra.mxu0 0.0
    %859 = vmatprep.subr.mxu0 0.0
    %860 = vmatpush1.msra.mxu0 0.0
    %861 = vmatprep.subr.mxu0 0.0
    %862 = vmatpush1.msra.mxu0 0.0
    %863 = vmatprep.subr.mxu0 0.0
    %864 = vmatpush1.msra.mxu0 0.0
    %865 = vmatprep.subr.mxu0 0.0
    %866 = vmatpush1.msra.mxu0 0.0
    %867 = vmatprep.subr.mxu0 0.0
    %868 = vmatpush1.msra.mxu0 0.0
    %869 = vmatprep.subr.mxu0 0.0
    %870 = vmatpush1.msra.mxu0 0.0
    %871 = vmatprep.subr.mxu0 0.0
    %872 = vmatpush1.msra.mxu0 0.0
    %873 = vmatprep.subr.mxu0 0.0
    %874 = vmatpush1.msra.mxu0 0.0
    %875 = vmatprep.subr.mxu0 0.0
    %876 = vmatpush1.msra.mxu0 0.0
    %877 = vmatprep.subr.mxu0 0.0
    %878 = vmatpush1.msra.mxu0 0.0
    %879 = vmatprep.subr.mxu0 0.0
    %880 = vmatpush1.msra.mxu0 0.0
    %881 = vmatprep.mubr.f32.mxu0 0.0
    %882 = vmatmul.mubr.f32.gmra.mrb[0].mxu0 %v799
    %v883 = vpop.f32.mrb[0].mxu0
    %v884 = vadd.f32 %v805, %v883
    %v885 = vpop.f32.mrb[0].mxu0
    %v886 = vadd.f32 %v809, %v885
    %887 = vmatprep.mubr.f32.mxu0 0.0
    %888 = vmatmul.mubr.f32.gmra.mrb[0].mxu0 %v800
    %v889 = vpop.f32.mrb[0].mxu0
    %v890 = vadd.f32 %v805, %v889
    %v891 = vpop.f32.mrb[0].mxu0
    %v892 = vadd.f32 %v809, %v891
    %893 = vdwg.mxu0
    %894 = vmatprep.subr.mxu0 0.0
    %895 = vmatpush1.msra.mxu0 %v566
    %896 = vmatprep.subr.mxu0 0.0
    %897 = vmatpush1.msra.mxu0 %v569
    %898 = vmatprep.subr.mxu0 0.0
    %899 = vmatpush1.msra.mxu0 %v572
    %900 = vmatprep.subr.mxu0 0.0
    %901 = vmatpush1.msra.mxu0 %v575
    %902 = vmatprep.subr.mxu0 0.0
    %903 = vmatpush1.msra.mxu0 %v578
    %904 = vmatprep.subr.mxu0 0.0
    %905 = vmatpush1.msra.mxu0 %v581
    %906 = vmatprep.subr.mxu0 0.0
    %907 = vmatpush1.msra.mxu0 %v584
    %908 = vmatprep.subr.mxu0 0.0
    %909 = vmatpush1.msra.mxu0 %v587
    %910 = vmatprep.subr.mxu0 0.0
    %911 = vmatpush1.msra.mxu0 %v590
    %912 = vmatprep.subr.mxu0 0.0
    %913 = vmatpush1.msra.mxu0 %v593
    %914 = vmatprep.subr.mxu0 0.0
    %915 = vmatpush1.msra.mxu0 %v596
    %916 = vmatprep.subr.mxu0 0.0
    %917 = vmatpush1.msra.mxu0 %v599
    %918 = vmatprep.subr.mxu0 0.0
    %919 = vmatpush1.msra.mxu0 %v602
    %920 = vmatprep.subr.mxu0 0.0
    %921 = vmatpush1.msra.mxu0 %v605
    %922 = vmatprep.subr.mxu0 0.0
    %923 = vmatpush1.msra.mxu0 %v608
    %924 = vmatprep.subr.mxu0 0.0
    %925 = vmatpush1.msra.mxu0 %v611
    %926 = vmatprep.subr.mxu0 0.0
    %927 = vmatpush1.msra.mxu0 0.0
    %928 = vmatprep.subr.mxu0 0.0
    %929 = vmatpush1.msra.mxu0 0.0
    %930 = vmatprep.subr.mxu0 0.0
    %931 = vmatpush1.msra.mxu0 0.0
    %932 = vmatprep.subr.mxu0 0.0
    %933 = vmatpush1.msra.mxu0 0.0
    %934 = vmatprep.subr.mxu0 0.0
    %935 = vmatpush1.msra.mxu0 0.0
    %936 = vmatprep.subr.mxu0 0.0
    %937 = vmatpush1.msra.mxu0 0.0
    %938 = vmatprep.subr.mxu0 0.0
    %939 = vmatpush1.msra.mxu0 0.0
    %940 = vmatprep.subr.mxu0 0.0
    %941 = vmatpush1.msra.mxu0 0.0
    %942 = vmatprep.subr.mxu0 0.0
    %943 = vmatpush1.msra.mxu0 0.0
    %944 = vmatprep.subr.mxu0 0.0
    %945 = vmatpush1.msra.mxu0 0.0
    %946 = vmatprep.subr.mxu0 0.0
    %947 = vmatpush1.msra.mxu0 0.0
    %948 = vmatprep.subr.mxu0 0.0
    %949 = vmatpush1.msra.mxu0 0.0
    %950 = vmatprep.subr.mxu0 0.0
    %951 = vmatpush1.msra.mxu0 0.0
    %952 = vmatprep.subr.mxu0 0.0
    %953 = vmatpush1.msra.mxu0 0.0
    %954 = vmatprep.subr.mxu0 0.0
    %955 = vmatpush1.msra.mxu0 0.0
    %956 = vmatprep.subr.mxu0 0.0
    %957 = vmatpush1.msra.mxu0 0.0
    %958 = vmatprep.mubr.f32.mxu0 0.0
    %959 = vmatmul.mubr.f32.gmra.mrb[0].mxu0 %v799
    %v960 = vpop.f32.mrb[0].mxu0
    %v961 = vadd.f32 %v813, %v960
    %v962 = vpop.f32.mrb[0].mxu0
    %963 = vmatprep.mubr.f32.mxu0 0.0
    %964 = vmatmul.mubr.f32.gmra.mrb[0].mxu0 %v800
    %v965 = vpop.f32.mrb[0].mxu0
    %v966 = vadd.f32 %v813, %v965
    %v967 = vpop.f32.mrb[0].mxu0
    %968 = vdwg.mxu0
    %v970 = vlaneseq
    %v971 = vshrl.u32 %v970, 7
    %v972 = vsub.s32 0, %v971
    %v973 = vrot.slane %v629, %v972
    %v975 = vadd.f32 %v973, 0.0
    %vm976 = vcmask 523264
    %v978 = vsel %vm976, %v884, 0
    %v981 = vsel %vm976, %v886, 0
    %983 = vmatprep.subr.mxu0 0.0
    %984 = vmatpush1.xpose.msra.mxu0 %v981
    %985 = vmatprep.subr.mxu0 0.0
    %986 = vmatpush1.xpose.msra.mxu0 0.0
    %987 = vmatprep.subr.mxu0 0.0
    %988 = vmatpush1.xpose.msra.mxu0 0.0
    %989 = vmatprep.subr.mxu0 0.0
    %990 = vmatpush1.xpose.msra.mxu0 0.0
    %991 = vmatprep.subr.mxu0 0.0
    %992 = vmatpush1.xpose.msra.mxu0 0.0
    %993 = vmatprep.subr.mxu0 0.0
    %994 = vmatpush1.xpose.msra.mxu0 0.0
    %995 = vmatprep.subr.mxu0 0.0
    %996 = vmatpush1.xpose.msra.mxu0 0.0
    %997 = vmatprep.subr.mxu0 0.0
    %998 = vmatpush1.xpose.msra.mxu0 0.0
    %999 = vmatprep.subr.mxu0 0.0
    %1000 = vmatpush1.xpose.msra.mxu0 0.0
    %1001 = vmatprep.subr.mxu0 0.0
    %1002 = vmatpush1.xpose.msra.mxu0 0.0
    %1003 = vmatprep.subr.mxu0 0.0
    %1004 = vmatpush1.xpose.msra.mxu0 0.0
    %1005 = vmatprep.subr.mxu0 0.0
    %1006 = vmatpush1.xpose.msra.mxu0 0.0
    %1007 = vmatprep.subr.mxu0 0.0
    %1008 = vmatpush1.xpose.msra.mxu0 0.0
    %1009 = vmatprep.subr.mxu0 0.0
    %1010 = vmatpush1.xpose.msra.mxu0 0.0
    %1011 = vmatprep.subr.mxu0 0.0
    %1012 = vmatpush1.xpose.msra.mxu0 0.0
    %1013 = vmatprep.subr.mxu0 0.0
    %1014 = vmatpush1.xpose.msra.mxu0 0.0
    %1015 = vmatprep.subr.mxu0 0.0
    %1016 = vmatpush1.xpose.msra.mxu0 0.0
    %1017 = vmatprep.subr.mxu0 0.0
    %1018 = vmatpush1.xpose.msra.mxu0 0.0
    %1019 = vmatprep.subr.mxu0 0.0
    %1020 = vmatpush1.xpose.msra.mxu0 0.0
    %1021 = vmatprep.subr.mxu0 0.0
    %1022 = vmatpush1.xpose.msra.mxu0 0.0
    %1023 = vmatprep.subr.mxu0 0.0
    %1024 = vmatpush1.xpose.msra.mxu0 0.0
    %1025 = vmatprep.subr.mxu0 0.0
    %1026 = vmatpush1.xpose.msra.mxu0 0.0
    %1027 = vmatprep.subr.mxu0 0.0
    %1028 = vmatpush1.xpose.msra.mxu0 0.0
    %1029 = vmatprep.subr.mxu0 0.0
    %1030 = vmatpush1.xpose.msra.mxu0 0.0
    %1031 = vmatprep.subr.mxu0 0.0
    %1032 = vmatpush1.xpose.msra.mxu0 0.0
    %1033 = vmatprep.subr.mxu0 0.0
    %1034 = vmatpush1.xpose.msra.mxu0 0.0
    %1035 = vmatprep.subr.mxu0 0.0
    %1036 = vmatpush1.xpose.msra.mxu0 0.0
    %1037 = vmatprep.subr.mxu0 0.0
    %1038 = vmatpush1.xpose.msra.mxu0 0.0
    %1039 = vmatprep.subr.mxu0 0.0
    %1040 = vmatpush1.xpose.msra.mxu0 0.0
    %1041 = vmatprep.subr.mxu0 0.0
    %1042 = vmatpush1.xpose.msra.mxu0 0.0
    %1043 = vmatprep.subr.mxu0 0.0
    %1044 = vmatpush1.xpose.msra.mxu0 0.0
    %1045 = vmatprep.subr.mxu0 0.0
    %1046 = vmatpush1.xpose.msra.mxu0 0.0
    %1047 = vmatprep.mubr.f32.mxu0 0.0
    %1048 = vmatmul.mubr.f32.gmra.mrb[0].mxu0 %v978
    %v1049 = vpop.f32.mrb[0].mxu0
    %v1050 = vadd.f32 0.0, %v1049
    %v1051 = vpop.f32.mrb[0].mxu0
    %1052 = vdwg.mxu0
    %v1054 = vsel %vm976, %v890, 0
    %v1057 = vsel %vm976, %v892, 0
    %1059 = vmatprep.subr.mxu0 0.0
    %1060 = vmatpush1.xpose.msra.mxu0 %v1057
    %1061 = vmatprep.subr.mxu0 0.0
    %1062 = vmatpush1.xpose.msra.mxu0 0.0
    %1063 = vmatprep.subr.mxu0 0.0
    %1064 = vmatpush1.xpose.msra.mxu0 0.0
    %1065 = vmatprep.subr.mxu0 0.0
    %1066 = vmatpush1.xpose.msra.mxu0 0.0
    %1067 = vmatprep.subr.mxu0 0.0
    %1068 = vmatpush1.xpose.msra.mxu0 0.0
    %1069 = vmatprep.subr.mxu0 0.0
    %1070 = vmatpush1.xpose.msra.mxu0 0.0
    %1071 = vmatprep.subr.mxu0 0.0
    %1072 = vmatpush1.xpose.msra.mxu0 0.0
    %1073 = vmatprep.subr.mxu0 0.0
    %1074 = vmatpush1.xpose.msra.mxu0 0.0
    %1075 = vmatprep.subr.mxu0 0.0
    %1076 = vmatpush1.xpose.msra.mxu0 0.0
    %1077 = vmatprep.subr.mxu0 0.0
    %1078 = vmatpush1.xpose.msra.mxu0 0.0
    %1079 = vmatprep.subr.mxu0 0.0
    %1080 = vmatpush1.xpose.msra.mxu0 0.0
    %1081 = vmatprep.subr.mxu0 0.0
    %1082 = vmatpush1.xpose.msra.mxu0 0.0
    %1083 = vmatprep.subr.mxu0 0.0
    %1084 = vmatpush1.xpose.msra.mxu0 0.0
    %1085 = vmatprep.subr.mxu0 0.0
    %1086 = vmatpush1.xpose.msra.mxu0 0.0
    %1087 = vmatprep.subr.mxu0 0.0
    %1088 = vmatpush1.xpose.msra.mxu0 0.0
    %1089 = vmatprep.subr.mxu0 0.0
    %1090 = vmatpush1.xpose.msra.mxu0 0.0
    %1091 = vmatprep.subr.mxu0 0.0
    %1092 = vmatpush1.xpose.msra.mxu0 0.0
    %1093 = vmatprep.subr.mxu0 0.0
    %1094 = vmatpush1.xpose.msra.mxu0 0.0
    %1095 = vmatprep.subr.mxu0 0.0
    %1096 = vmatpush1.xpose.msra.mxu0 0.0
    %1097 = vmatprep.subr.mxu0 0.0
    %1098 = vmatpush1.xpose.msra.mxu0 0.0
    %1099 = vmatprep.subr.mxu0 0.0
    %1100 = vmatpush1.xpose.msra.mxu0 0.0
    %1101 = vmatprep.subr.mxu0 0.0
    %1102 = vmatpush1.xpose.msra.mxu0 0.0
    %1103 = vmatprep.subr.mxu0 0.0
    %1104 = vmatpush1.xpose.msra.mxu0 0.0
    %1105 = vmatprep.subr.mxu0 0.0
    %1106 = vmatpush1.xpose.msra.mxu0 0.0
    %1107 = vmatprep.subr.mxu0 0.0
    %1108 = vmatpush1.xpose.msra.mxu0 0.0
    %1109 = vmatprep.subr.mxu0 0.0
    %1110 = vmatpush1.xpose.msra.mxu0 0.0
    %1111 = vmatprep.subr.mxu0 0.0
    %1112 = vmatpush1.xpose.msra.mxu0 0.0
    %1113 = vmatprep.subr.mxu0 0.0
    %1114 = vmatpush1.xpose.msra.mxu0 0.0
    %1115 = vmatprep.subr.mxu0 0.0
    %1116 = vmatpush1.xpose.msra.mxu0 0.0
    %1117 = vmatprep.subr.mxu0 0.0
    %1118 = vmatpush1.xpose.msra.mxu0 0.0
    %1119 = vmatprep.subr.mxu0 0.0
    %1120 = vmatpush1.xpose.msra.mxu0 0.0
    %1121 = vmatprep.subr.mxu0 0.0
    %1122 = vmatpush1.xpose.msra.mxu0 0.0
    %1123 = vmatprep.mubr.f32.mxu0 0.0
    %1124 = vmatmul.mubr.f32.gmra.mrb[0].mxu0 %v1054
    %v1125 = vpop.f32.mrb[0].mxu0
    %v1126 = vadd.f32 0.0, %v1125
    %v1127 = vpop.f32.mrb[0].mxu0
    %1128 = vdwg.mxu0
    %v1129 = vmul.f32 %v1050, 0.125
    %v1130 = vmul.f32 %v1126, 0.125
    %vm1131 = vcmask 64512
    %v1132 = vsel %vm1131, %v1129, -inf
    %1133 = vmax.xlane.f32.xlu0 %v1132
    %v1134 = vpop.xlane.xlu0 %1133
    %v1135 = vsel %vm1131, %v1130, -inf
    %1136 = vmax.xlane.f32.xlu0 %v1135
    %v1137 = vpop.xlane.xlu0 %1136
    %v1138 = vsub.f32 %v1129, %v1134
    %v1139 = vsub.f32 %v1130, %v1137
    %v1140 = vmul.f32 %v1138, 1.442695
    %v1141 = vpow.pop %v1140
    %v1142 = vmul.f32 %v1139, 1.442695
    %v1143 = vpow.pop %v1142
    %v1144 = vsel %vm1131, %v1141, 0.0
    %1145 = vadd.xlane.f32.xlu0 %v1144
    %v1146 = vpop.xlane.xlu0 %1145
    %v1147 = vsel %vm1131, %v1143, 0.0
    %1148 = vadd.xlane.f32.xlu0 %v1147
    %v1149 = vpop.xlane.xlu0 %1148
    %v1150 = vmax.f32 %v1146, 1e-20
    %v1151 = vmax.f32 %v1149, 1e-20
    %v1152 = vrcp.pop %v1150
    %v1153 = vrcp.pop %v1151
    %v1154 = vmul.f32 %v1141, %v1152
    %v1155 = vmul.f32 %v1143, %v1153
    %v1157 = vsel %vm1131, %v1154, 0
    %1159 = vmatprep.subr.mxu0 0.0
    %1160 = vmatpush1.msra.mxu0 %v961
    %1161 = vmatprep.subr.mxu0 0.0
    %1162 = vmatpush1.msra.mxu0 0.0
    %1163 = vmatprep.subr.mxu0 0.0
    %1164 = vmatpush1.msra.mxu0 0.0
    %1165 = vmatprep.subr.mxu0 0.0
    %1166 = vmatpush1.msra.mxu0 0.0
    %1167 = vmatprep.subr.mxu0 0.0
    %1168 = vmatpush1.msra.mxu0 0.0
    %1169 = vmatprep.subr.mxu0 0.0
    %1170 = vmatpush1.msra.mxu0 0.0
    %1171 = vmatprep.subr.mxu0 0.0
    %1172 = vmatpush1.msra.mxu0 0.0
    %1173 = vmatprep.subr.mxu0 0.0
    %1174 = vmatpush1.msra.mxu0 0.0
    %1175 = vmatprep.subr.mxu0 0.0
    %1176 = vmatpush1.msra.mxu0 0.0
    %1177 = vmatprep.subr.mxu0 0.0
    %1178 = vmatpush1.msra.mxu0 0.0
    %1179 = vmatprep.subr.mxu0 0.0
    %1180 = vmatpush1.msra.mxu0 0.0
    %1181 = vmatprep.subr.mxu0 0.0
    %1182 = vmatpush1.msra.mxu0 0.0
    %1183 = vmatprep.subr.mxu0 0.0
    %1184 = vmatpush1.msra.mxu0 0.0
    %1185 = vmatprep.subr.mxu0 0.0
    %1186 = vmatpush1.msra.mxu0 0.0
    %1187 = vmatprep.subr.mxu0 0.0
    %1188 = vmatpush1.msra.mxu0 0.0
    %1189 = vmatprep.subr.mxu0 0.0
    %1190 = vmatpush1.msra.mxu0 0.0
    %1191 = vmatprep.subr.mxu0 0.0
    %1192 = vmatpush1.msra.mxu0 0.0
    %1193 = vmatprep.subr.mxu0 0.0
    %1194 = vmatpush1.msra.mxu0 0.0
    %1195 = vmatprep.subr.mxu0 0.0
    %1196 = vmatpush1.msra.mxu0 0.0
    %1197 = vmatprep.subr.mxu0 0.0
    %1198 = vmatpush1.msra.mxu0 0.0
    %1199 = vmatprep.subr.mxu0 0.0
    %1200 = vmatpush1.msra.mxu0 0.0
    %1201 = vmatprep.subr.mxu0 0.0
    %1202 = vmatpush1.msra.mxu0 0.0
    %1203 = vmatprep.subr.mxu0 0.0
    %1204 = vmatpush1.msra.mxu0 0.0
    %1205 = vmatprep.subr.mxu0 0.0
    %1206 = vmatpush1.msra.mxu0 0.0
    %1207 = vmatprep.subr.mxu0 0.0
    %1208 = vmatpush1.msra.mxu0 0.0
    %1209 = vmatprep.subr.mxu0 0.0
    %1210 = vmatpush1.msra.mxu0 0.0
    %1211 = vmatprep.subr.mxu0 0.0
    %1212 = vmatpush1.msra.mxu0 0.0
    %1213 = vmatprep.subr.mxu0 0.0
    %1214 = vmatpush1.msra.mxu0 0.0
    %1215 = vmatprep.subr.mxu0 0.0
    %1216 = vmatpush1.msra.mxu0 0.0
    %1217 = vmatprep.subr.mxu0 0.0
    %1218 = vmatpush1.msra.mxu0 0.0
    %1219 = vmatprep.subr.mxu0 0.0
    %1220 = vmatpush1.msra.mxu0 0.0
    %1221 = vmatprep.subr.mxu0 0.0
    %1222 = vmatpush1.msra.mxu0 0.0
    %1223 = vmatprep.mubr.f32.mxu0 0.0
    %1224 = vmatmul.mubr.f32.gmra.mrb[0].mxu0 %v1157
    %v1225 = vpop.f32.mrb[0].mxu0
    %v1226 = vadd.f32 0.0, %v1225
    %v1227 = vpop.f32.mrb[0].mxu0
    %1228 = vdwg.mxu0
    %v1230 = vsel %vm1131, %v1155, 0
    %1232 = vmatprep.subr.mxu0 0.0
    %1233 = vmatpush1.msra.mxu0 %v966
    %1234 = vmatprep.subr.mxu0 0.0
    %1235 = vmatpush1.msra.mxu0 0.0
    %1236 = vmatprep.subr.mxu0 0.0
    %1237 = vmatpush1.msra.mxu0 0.0
    %1238 = vmatprep.subr.mxu0 0.0
    %1239 = vmatpush1.msra.mxu0 0.0
    %1240 = vmatprep.subr.mxu0 0.0
    %1241 = vmatpush1.msra.mxu0 0.0
    %1242 = vmatprep.subr.mxu0 0.0
    %1243 = vmatpush1.msra.mxu0 0.0
    %1244 = vmatprep.subr.mxu0 0.0
    %1245 = vmatpush1.msra.mxu0 0.0
    %1246 = vmatprep.subr.mxu0 0.0
    %1247 = vmatpush1.msra.mxu0 0.0
    %1248 = vmatprep.subr.mxu0 0.0
    %1249 = vmatpush1.msra.mxu0 0.0
    %1250 = vmatprep.subr.mxu0 0.0
    %1251 = vmatpush1.msra.mxu0 0.0
    %1252 = vmatprep.subr.mxu0 0.0
    %1253 = vmatpush1.msra.mxu0 0.0
    %1254 = vmatprep.subr.mxu0 0.0
    %1255 = vmatpush1.msra.mxu0 0.0
    %1256 = vmatprep.subr.mxu0 0.0
    %1257 = vmatpush1.msra.mxu0 0.0
    %1258 = vmatprep.subr.mxu0 0.0
    %1259 = vmatpush1.msra.mxu0 0.0
    %1260 = vmatprep.subr.mxu0 0.0
    %1261 = vmatpush1.msra.mxu0 0.0
    %1262 = vmatprep.subr.mxu0 0.0
    %1263 = vmatpush1.msra.mxu0 0.0
    %1264 = vmatprep.subr.mxu0 0.0
    %1265 = vmatpush1.msra.mxu0 0.0
    %1266 = vmatprep.subr.mxu0 0.0
    %1267 = vmatpush1.msra.mxu0 0.0
    %1268 = vmatprep.subr.mxu0 0.0
    %1269 = vmatpush1.msra.mxu0 0.0
    %1270 = vmatprep.subr.mxu0 0.0
    %1271 = vmatpush1.msra.mxu0 0.0
    %1272 = vmatprep.subr.mxu0 0.0
    %1273 = vmatpush1.msra.mxu0 0.0
    %1274 = vmatprep.subr.mxu0 0.0
    %1275 = vmatpush1.msra.mxu0 0.0
    %1276 = vmatprep.subr.mxu0 0.0
    %1277 = vmatpush1.msra.mxu0 0.0
    %1278 = vmatprep.subr.mxu0 0.0
    %1279 = vmatpush1.msra.mxu0 0.0
    %1280 = vmatprep.subr.mxu0 0.0
    %1281 = vmatpush1.msra.mxu0 0.0
    %1282 = vmatprep.subr.mxu0 0.0
    %1283 = vmatpush1.msra.mxu0 0.0
    %1284 = vmatprep.subr.mxu0 0.0
    %1285 = vmatpush1.msra.mxu0 0.0
    %1286 = vmatprep.subr.mxu0 0.0
    %1287 = vmatpush1.msra.mxu0 0.0
    %1288 = vmatprep.subr.mxu0 0.0
    %1289 = vmatpush1.msra.mxu0 0.0
    %1290 = vmatprep.subr.mxu0 0.0
    %1291 = vmatpush1.msra.mxu0 0.0
    %1292 = vmatprep.subr.mxu0 0.0
    %1293 = vmatpush1.msra.mxu0 0.0
    %1294 = vmatprep.subr.mxu0 0.0
    %1295 = vmatpush1.msra.mxu0 0.0
    %1296 = vmatprep.mubr.f32.mxu0 0.0
    %1297 = vmatmul.mubr.f32.gmra.mrb[0].mxu0 %v1230
    %v1298 = vpop.f32.mrb[0].mxu0
    %v1299 = vadd.f32 0.0, %v1298
    %v1300 = vpop.f32.mrb[0].mxu0
    %1301 = vdwg.mxu0
    %v1303 = vsel %vm976, %v1226, 0
    %v1306 = vsel %vm976, %v1299, 0
    %1308 = vmatprep.subr.mxu0 0.0
    %1309 = vmatpush1.msra.mxu0 %v613
    %1310 = vmatprep.subr.mxu0 0.0
    %1311 = vmatpush1.msra.mxu0 %v614
    %1312 = vmatprep.subr.mxu0 0.0
    %1313 = vmatpush1.msra.mxu0 %v615
    %1314 = vmatprep.subr.mxu0 0.0
    %1315 = vmatpush1.msra.mxu0 %v616
    %1316 = vmatprep.subr.mxu0 0.0
    %1317 = vmatpush1.msra.mxu0 %v617
    %1318 = vmatprep.subr.mxu0 0.0
    %1319 = vmatpush1.msra.mxu0 %v618
    %1320 = vmatprep.subr.mxu0 0.0
    %1321 = vmatpush1.msra.mxu0 %v619
    %1322 = vmatprep.subr.mxu0 0.0
    %1323 = vmatpush1.msra.mxu0 %v620
    %1324 = vmatprep.subr.mxu0 0.0
    %1325 = vmatpush1.msra.mxu0 0.0
    %1326 = vmatprep.subr.mxu0 0.0
    %1327 = vmatpush1.msra.mxu0 0.0
    %1328 = vmatprep.subr.mxu0 0.0
    %1329 = vmatpush1.msra.mxu0 0.0
    %1330 = vmatprep.subr.mxu0 0.0
    %1331 = vmatpush1.msra.mxu0 0.0
    %1332 = vmatprep.subr.mxu0 0.0
    %1333 = vmatpush1.msra.mxu0 0.0
    %1334 = vmatprep.subr.mxu0 0.0
    %1335 = vmatpush1.msra.mxu0 0.0
    %1336 = vmatprep.subr.mxu0 0.0
    %1337 = vmatpush1.msra.mxu0 0.0
    %1338 = vmatprep.subr.mxu0 0.0
    %1339 = vmatpush1.msra.mxu0 0.0
    %1340 = vmatprep.subr.mxu0 0.0
    %1341 = vmatpush1.msra.mxu0 0.0
    %1342 = vmatprep.subr.mxu0 0.0
    %1343 = vmatpush1.msra.mxu0 0.0
    %1344 = vmatprep.subr.mxu0 0.0
    %1345 = vmatpush1.msra.mxu0 0.0
    %1346 = vmatprep.subr.mxu0 0.0
    %1347 = vmatpush1.msra.mxu0 0.0
    %1348 = vmatprep.subr.mxu0 0.0
    %1349 = vmatpush1.msra.mxu0 0.0
    %1350 = vmatprep.subr.mxu0 0.0
    %1351 = vmatpush1.msra.mxu0 0.0
    %1352 = vmatprep.subr.mxu0 0.0
    %1353 = vmatpush1.msra.mxu0 0.0
    %1354 = vmatprep.subr.mxu0 0.0
    %1355 = vmatpush1.msra.mxu0 0.0
    %1356 = vmatprep.subr.mxu0 0.0
    %1357 = vmatpush1.msra.mxu0 0.0
    %1358 = vmatprep.subr.mxu0 0.0
    %1359 = vmatpush1.msra.mxu0 0.0
    %1360 = vmatprep.subr.mxu0 0.0
    %1361 = vmatpush1.msra.mxu0 0.0
    %1362 = vmatprep.subr.mxu0 0.0
    %1363 = vmatpush1.msra.mxu0 0.0
    %1364 = vmatprep.subr.mxu0 0.0
    %1365 = vmatpush1.msra.mxu0 0.0
    %1366 = vmatprep.subr.mxu0 0.0
    %1367 = vmatpush1.msra.mxu0 0.0
    %1368 = vmatprep.subr.mxu0 0.0
    %1369 = vmatpush1.msra.mxu0 0.0
    %1370 = vmatprep.subr.mxu0 0.0
    %1371 = vmatpush1.msra.mxu0 0.0
    %1372 = vmatprep.mubr.f32.mxu0 0.0
    %1373 = vmatmul.mubr.f32.gmra.mrb[0].mxu0 %v1303
    %v1374 = vpop.f32.mrb[0].mxu0
    %v1375 = vadd.f32 0.0, %v1374
    %v1376 = vpop.f32.mrb[0].mxu0
    %1377 = vmatprep.mubr.f32.mxu0 0.0
    %1378 = vmatmul.mubr.f32.gmra.mrb[0].mxu0 %v1306
    %v1379 = vpop.f32.mrb[0].mxu0
    %v1380 = vadd.f32 0.0, %v1379
    %v1381 = vpop.f32.mrb[0].mxu0
    %1382 = vdwg.mxu0
    %v1383 = vadd.f32 %v975, %v1375
    %v1384 = vadd.f32 %v975, %v1380
    %1385 = vrot.lane.b32.xlu0 %v884, 64
    %v1386 = vpop.permute.xlu0 %1385
    %1387 = vrot.lane.b32.xlu0 %v886, 64
    %v1388 = vpop.permute.xlu0 %1387
    %v1389 = vsel %vm976, %v1386, 0
    %v1391 = vsel %vm976, %v1388, 0
    %1393 = vmatprep.subr.mxu0 0.0
    %1394 = vmatpush1.xpose.msra.mxu0 %v1391
    %1395 = vmatprep.subr.mxu0 0.0
    %1396 = vmatpush1.xpose.msra.mxu0 0.0
    %1397 = vmatprep.subr.mxu0 0.0
    %1398 = vmatpush1.xpose.msra.mxu0 0.0
    %1399 = vmatprep.subr.mxu0 0.0
    %1400 = vmatpush1.xpose.msra.mxu0 0.0
    %1401 = vmatprep.subr.mxu0 0.0
    %1402 = vmatpush1.xpose.msra.mxu0 0.0
    %1403 = vmatprep.subr.mxu0 0.0
    %1404 = vmatpush1.xpose.msra.mxu0 0.0
    %1405 = vmatprep.subr.mxu0 0.0
    %1406 = vmatpush1.xpose.msra.mxu0 0.0
    %1407 = vmatprep.subr.mxu0 0.0
    %1408 = vmatpush1.xpose.msra.mxu0 0.0
    %1409 = vmatprep.subr.mxu0 0.0
    %1410 = vmatpush1.xpose.msra.mxu0 0.0
    %1411 = vmatprep.subr.mxu0 0.0
    %1412 = vmatpush1.xpose.msra.mxu0 0.0
    %1413 = vmatprep.subr.mxu0 0.0
    %1414 = vmatpush1.xpose.msra.mxu0 0.0
    %1415 = vmatprep.subr.mxu0 0.0
    %1416 = vmatpush1.xpose.msra.mxu0 0.0
    %1417 = vmatprep.subr.mxu0 0.0
    %1418 = vmatpush1.xpose.msra.mxu0 0.0
    %1419 = vmatprep.subr.mxu0 0.0
    %1420 = vmatpush1.xpose.msra.mxu0 0.0
    %1421 = vmatprep.subr.mxu0 0.0
    %1422 = vmatpush1.xpose.msra.mxu0 0.0
    %1423 = vmatprep.subr.mxu0 0.0
    %1424 = vmatpush1.xpose.msra.mxu0 0.0
    %1425 = vmatprep.subr.mxu0 0.0
    %1426 = vmatpush1.xpose.msra.mxu0 0.0
    %1427 = vmatprep.subr.mxu0 0.0
    %1428 = vmatpush1.xpose.msra.mxu0 0.0
    %1429 = vmatprep.subr.mxu0 0.0
    %1430 = vmatpush1.xpose.msra.mxu0 0.0
    %1431 = vmatprep.subr.mxu0 0.0
    %1432 = vmatpush1.xpose.msra.mxu0 0.0
    %1433 = vmatprep.subr.mxu0 0.0
    %1434 = vmatpush1.xpose.msra.mxu0 0.0
    %1435 = vmatprep.subr.mxu0 0.0
    %1436 = vmatpush1.xpose.msra.mxu0 0.0
    %1437 = vmatprep.subr.mxu0 0.0
    %1438 = vmatpush1.xpose.msra.mxu0 0.0
    %1439 = vmatprep.subr.mxu0 0.0
    %1440 = vmatpush1.xpose.msra.mxu0 0.0
    %1441 = vmatprep.subr.mxu0 0.0
    %1442 = vmatpush1.xpose.msra.mxu0 0.0
    %1443 = vmatprep.subr.mxu0 0.0
    %1444 = vmatpush1.xpose.msra.mxu0 0.0
    %1445 = vmatprep.subr.mxu0 0.0
    %1446 = vmatpush1.xpose.msra.mxu0 0.0
    %1447 = vmatprep.subr.mxu0 0.0
    %1448 = vmatpush1.xpose.msra.mxu0 0.0
    %1449 = vmatprep.subr.mxu0 0.0
    %1450 = vmatpush1.xpose.msra.mxu0 0.0
    %1451 = vmatprep.subr.mxu0 0.0
    %1452 = vmatpush1.xpose.msra.mxu0 0.0
    %1453 = vmatprep.subr.mxu0 0.0
    %1454 = vmatpush1.xpose.msra.mxu0 0.0
    %1455 = vmatprep.subr.mxu0 0.0
    %1456 = vmatpush1.xpose.msra.mxu0 0.0
    %1457 = vmatprep.mubr.f32.mxu0 0.0
    %1458 = vmatmul.mubr.f32.gmra.mrb[0].mxu0 %v1389
    %v1459 = vpop.f32.mrb[0].mxu0
    %v1460 = vadd.f32 0.0, %v1459
    %v1461 = vpop.f32.mrb[0].mxu0
    %1462 = vdwg.mxu0
    %1463 = vrot.lane.b32.xlu0 %v890, 64
    %v1464 = vpop.permute.xlu0 %1463
    %1465 = vrot.lane.b32.xlu0 %v892, 64
    %v1466 = vpop.permute.xlu0 %1465
    %v1467 = vsel %vm976, %v1464, 0
    %v1469 = vsel %vm976, %v1466, 0
    %1471 = vmatprep.subr.mxu0 0.0
    %1472 = vmatpush1.xpose.msra.mxu0 %v1469
    %1473 = vmatprep.subr.mxu0 0.0
    %1474 = vmatpush1.xpose.msra.mxu0 0.0
    %1475 = vmatprep.subr.mxu0 0.0
    %1476 = vmatpush1.xpose.msra.mxu0 0.0
    %1477 = vmatprep.subr.mxu0 0.0
    %1478 = vmatpush1.xpose.msra.mxu0 0.0
    %1479 = vmatprep.subr.mxu0 0.0
    %1480 = vmatpush1.xpose.msra.mxu0 0.0
    %1481 = vmatprep.subr.mxu0 0.0
    %1482 = vmatpush1.xpose.msra.mxu0 0.0
    %1483 = vmatprep.subr.mxu0 0.0
    %1484 = vmatpush1.xpose.msra.mxu0 0.0
    %1485 = vmatprep.subr.mxu0 0.0
    %1486 = vmatpush1.xpose.msra.mxu0 0.0
    %1487 = vmatprep.subr.mxu0 0.0
    %1488 = vmatpush1.xpose.msra.mxu0 0.0
    %1489 = vmatprep.subr.mxu0 0.0
    %1490 = vmatpush1.xpose.msra.mxu0 0.0
    %1491 = vmatprep.subr.mxu0 0.0
    %1492 = vmatpush1.xpose.msra.mxu0 0.0
    %1493 = vmatprep.subr.mxu0 0.0
    %1494 = vmatpush1.xpose.msra.mxu0 0.0
    %1495 = vmatprep.subr.mxu0 0.0
    %1496 = vmatpush1.xpose.msra.mxu0 0.0
    %1497 = vmatprep.subr.mxu0 0.0
    %1498 = vmatpush1.xpose.msra.mxu0 0.0
    %1499 = vmatprep.subr.mxu0 0.0
    %1500 = vmatpush1.xpose.msra.mxu0 0.0
    %1501 = vmatprep.subr.mxu0 0.0
    %1502 = vmatpush1.xpose.msra.mxu0 0.0
    %1503 = vmatprep.subr.mxu0 0.0
    %1504 = vmatpush1.xpose.msra.mxu0 0.0
    %1505 = vmatprep.subr.mxu0 0.0
    %1506 = vmatpush1.xpose.msra.mxu0 0.0
    %1507 = vmatprep.subr.mxu0 0.0
    %1508 = vmatpush1.xpose.msra.mxu0 0.0
    %1509 = vmatprep.subr.mxu0 0.0
    %1510 = vmatpush1.xpose.msra.mxu0 0.0
    %1511 = vmatprep.subr.mxu0 0.0
    %1512 = vmatpush1.xpose.msra.mxu0 0.0
    %1513 = vmatprep.subr.mxu0 0.0
    %1514 = vmatpush1.xpose.msra.mxu0 0.0
    %1515 = vmatprep.subr.mxu0 0.0
    %1516 = vmatpush1.xpose.msra.mxu0 0.0
    %1517 = vmatprep.subr.mxu0 0.0
    %1518 = vmatpush1.xpose.msra.mxu0 0.0
    %1519 = vmatprep.subr.mxu0 0.0
    %1520 = vmatpush1.xpose.msra.mxu0 0.0
    %1521 = vmatprep.subr.mxu0 0.0
    %1522 = vmatpush1.xpose.msra.mxu0 0.0
    %1523 = vmatprep.subr.mxu0 0.0
    %1524 = vmatpush1.xpose.msra.mxu0 0.0
    %1525 = vmatprep.subr.mxu0 0.0
    %1526 = vmatpush1.xpose.msra.mxu0 0.0
    %1527 = vmatprep.subr.mxu0 0.0
    %1528 = vmatpush1.xpose.msra.mxu0 0.0
    %1529 = vmatprep.subr.mxu0 0.0
    %1530 = vmatpush1.xpose.msra.mxu0 0.0
    %1531 = vmatprep.subr.mxu0 0.0
    %1532 = vmatpush1.xpose.msra.mxu0 0.0
    %1533 = vmatprep.subr.mxu0 0.0
    %1534 = vmatpush1.xpose.msra.mxu0 0.0
    %1535 = vmatprep.mubr.f32.mxu0 0.0
    %1536 = vmatmul.mubr.f32.gmra.mrb[0].mxu0 %v1467
    %v1537 = vpop.f32.mrb[0].mxu0
    %v1538 = vadd.f32 0.0, %v1537
    %v1539 = vpop.f32.mrb[0].mxu0
    %1540 = vdwg.mxu0
    %v1541 = vmul.f32 %v1460, 0.125
    %v1542 = vmul.f32 %v1538, 0.125
    %v1543 = vsel %vm1131, %v1541, -inf
    %1544 = vmax.xlane.f32.xlu0 %v1543
    %v1545 = vpop.xlane.xlu0 %1544
    %v1546 = vsel %vm1131, %v1542, -inf
    %1547 = vmax.xlane.f32.xlu0 %v1546
    %v1548 = vpop.xlane.xlu0 %1547
    %v1549 = vsub.f32 %v1541, %v1545
    %v1550 = vsub.f32 %v1542, %v1548
    %v1551 = vmul.f32 %v1549, 1.442695
    %v1552 = vpow.pop %v1551
    %v1553 = vmul.f32 %v1550, 1.442695
    %v1554 = vpow.pop %v1553
    %v1555 = vsel %vm1131, %v1552, 0.0
    %1556 = vadd.xlane.f32.xlu0 %v1555
    %v1557 = vpop.xlane.xlu0 %1556
    %v1558 = vsel %vm1131, %v1554, 0.0
    %1559 = vadd.xlane.f32.xlu0 %v1558
    %v1560 = vpop.xlane.xlu0 %1559
    %v1561 = vmax.f32 %v1557, 1e-20
    %v1562 = vmax.f32 %v1560, 1e-20
    %v1563 = vrcp.pop %v1561
    %v1564 = vrcp.pop %v1562
    %v1565 = vmul.f32 %v1552, %v1563
    %v1566 = vmul.f32 %v1554, %v1564
    %1568 = vrot.lane.b32.xlu0 %v961, 64
    %v1569 = vpop.permute.xlu0 %1568
    %v1572 = vsel %vm1131, %v1565, 0
    %1574 = vmatprep.subr.mxu0 0.0
    %1575 = vmatpush1.msra.mxu0 %v1569
    %1576 = vmatprep.subr.mxu0 0.0
    %1577 = vmatpush1.msra.mxu0 0.0
    %1578 = vmatprep.subr.mxu0 0.0
    %1579 = vmatpush1.msra.mxu0 0.0
    %1580 = vmatprep.subr.mxu0 0.0
    %1581 = vmatpush1.msra.mxu0 0.0
    %1582 = vmatprep.subr.mxu0 0.0
    %1583 = vmatpush1.msra.mxu0 0.0
    %1584 = vmatprep.subr.mxu0 0.0
    %1585 = vmatpush1.msra.mxu0 0.0
    %1586 = vmatprep.subr.mxu0 0.0
    %1587 = vmatpush1.msra.mxu0 0.0
    %1588 = vmatprep.subr.mxu0 0.0
    %1589 = vmatpush1.msra.mxu0 0.0
    %1590 = vmatprep.subr.mxu0 0.0
    %1591 = vmatpush1.msra.mxu0 0.0
    %1592 = vmatprep.subr.mxu0 0.0
    %1593 = vmatpush1.msra.mxu0 0.0
    %1594 = vmatprep.subr.mxu0 0.0
    %1595 = vmatpush1.msra.mxu0 0.0
    %1596 = vmatprep.subr.mxu0 0.0
    %1597 = vmatpush1.msra.mxu0 0.0
    %1598 = vmatprep.subr.mxu0 0.0
    %1599 = vmatpush1.msra.mxu0 0.0
    %1600 = vmatprep.subr.mxu0 0.0
    %1601 = vmatpush1.msra.mxu0 0.0
    %1602 = vmatprep.subr.mxu0 0.0
    %1603 = vmatpush1.msra.mxu0 0.0
    %1604 = vmatprep.subr.mxu0 0.0
    %1605 = vmatpush1.msra.mxu0 0.0
    %1606 = vmatprep.subr.mxu0 0.0
    %1607 = vmatpush1.msra.mxu0 0.0
    %1608 = vmatprep.subr.mxu0 0.0
    %1609 = vmatpush1.msra.mxu0 0.0
    %1610 = vmatprep.subr.mxu0 0.0
    %1611 = vmatpush1.msra.mxu0 0.0
    %1612 = vmatprep.subr.mxu0 0.0
    %1613 = vmatpush1.msra.mxu0 0.0
    %1614 = vmatprep.subr.mxu0 0.0
    %1615 = vmatpush1.msra.mxu0 0.0
    %1616 = vmatprep.subr.mxu0 0.0
    %1617 = vmatpush1.msra.mxu0 0.0
    %1618 = vmatprep.subr.mxu0 0.0
    %1619 = vmatpush1.msra.mxu0 0.0
    %1620 = vmatprep.subr.mxu0 0.0
    %1621 = vmatpush1.msra.mxu0 0.0
    %1622 = vmatprep.subr.mxu0 0.0
    %1623 = vmatpush1.msra.mxu0 0.0
    %1624 = vmatprep.subr.mxu0 0.0
    %1625 = vmatpush1.msra.mxu0 0.0
    %1626 = vmatprep.subr.mxu0 0.0
    %1627 = vmatpush1.msra.mxu0 0.0
    %1628 = vmatprep.subr.mxu0 0.0
    %1629 = vmatpush1.msra.mxu0 0.0
    %1630 = vmatprep.subr.mxu0 0.0
    %1631 = vmatpush1.msra.mxu0 0.0
    %1632 = vmatprep.subr.mxu0 0.0
    %1633 = vmatpush1.msra.mxu0 0.0
    %1634 = vmatprep.subr.mxu0 0.0
    %1635 = vmatpush1.msra.mxu0 0.0
    %1636 = vmatprep.subr.mxu0 0.0
    %1637 = vmatpush1.msra.mxu0 0.0
    %1638 = vmatprep.mubr.f32.mxu0 0.0
    %1639 = vmatmul.mubr.f32.gmra.mrb[0].mxu0 %v1572
    %v1640 = vpop.f32.mrb[0].mxu0
    %v1641 = vadd.f32 0.0, %v1640
    %v1642 = vpop.f32.mrb[0].mxu0
    %1643 = vdwg.mxu0
    %1645 = vrot.lane.b32.xlu0 %v966, 64
    %v1646 = vpop.permute.xlu0 %1645
    %v1649 = vsel %vm1131, %v1566, 0
    %1651 = vmatprep.subr.mxu0 0.0
    %1652 = vmatpush1.msra.mxu0 %v1646
    %1653 = vmatprep.subr.mxu0 0.0
    %1654 = vmatpush1.msra.mxu0 0.0
    %1655 = vmatprep.subr.mxu0 0.0
    %1656 = vmatpush1.msra.mxu0 0.0
    %1657 = vmatprep.subr.mxu0 0.0
    %1658 = vmatpush1.msra.mxu0 0.0
    %1659 = vmatprep.subr.mxu0 0.0
    %1660 = vmatpush1.msra.mxu0 0.0
    %1661 = vmatprep.subr.mxu0 0.0
    %1662 = vmatpush1.msra.mxu0 0.0
    %1663 = vmatprep.subr.mxu0 0.0
    %1664 = vmatpush1.msra.mxu0 0.0
    %1665 = vmatprep.subr.mxu0 0.0
    %1666 = vmatpush1.msra.mxu0 0.0
    %1667 = vmatprep.subr.mxu0 0.0
    %1668 = vmatpush1.msra.mxu0 0.0
    %1669 = vmatprep.subr.mxu0 0.0
    %1670 = vmatpush1.msra.mxu0 0.0
    %1671 = vmatprep.subr.mxu0 0.0
    %1672 = vmatpush1.msra.mxu0 0.0
    %1673 = vmatprep.subr.mxu0 0.0
    %1674 = vmatpush1.msra.mxu0 0.0
    %1675 = vmatprep.subr.mxu0 0.0
    %1676 = vmatpush1.msra.mxu0 0.0
    %1677 = vmatprep.subr.mxu0 0.0
    %1678 = vmatpush1.msra.mxu0 0.0
    %1679 = vmatprep.subr.mxu0 0.0
    %1680 = vmatpush1.msra.mxu0 0.0
    %1681 = vmatprep.subr.mxu0 0.0
    %1682 = vmatpush1.msra.mxu0 0.0
    %1683 = vmatprep.subr.mxu0 0.0
    %1684 = vmatpush1.msra.mxu0 0.0
    %1685 = vmatprep.subr.mxu0 0.0
    %1686 = vmatpush1.msra.mxu0 0.0
    %1687 = vmatprep.subr.mxu0 0.0
    %1688 = vmatpush1.msra.mxu0 0.0
    %1689 = vmatprep.subr.mxu0 0.0
    %1690 = vmatpush1.msra.mxu0 0.0
    %1691 = vmatprep.subr.mxu0 0.0
    %1692 = vmatpush1.msra.mxu0 0.0
    %1693 = vmatprep.subr.mxu0 0.0
    %1694 = vmatpush1.msra.mxu0 0.0
    %1695 = vmatprep.subr.mxu0 0.0
    %1696 = vmatpush1.msra.mxu0 0.0
    %1697 = vmatprep.subr.mxu0 0.0
    %1698 = vmatpush1.msra.mxu0 0.0
    %1699 = vmatprep.subr.mxu0 0.0
    %1700 = vmatpush1.msra.mxu0 0.0
    %1701 = vmatprep.subr.mxu0 0.0
    %1702 = vmatpush1.msra.mxu0 0.0
    %1703 = vmatprep.subr.mxu0 0.0
    %1704 = vmatpush1.msra.mxu0 0.0
    %1705 = vmatprep.subr.mxu0 0.0
    %1706 = vmatpush1.msra.mxu0 0.0
    %1707 = vmatprep.subr.mxu0 0.0
    %1708 = vmatpush1.msra.mxu0 0.0
    %1709 = vmatprep.subr.mxu0 0.0
    %1710 = vmatpush1.msra.mxu0 0.0
    %1711 = vmatprep.subr.mxu0 0.0
    %1712 = vmatpush1.msra.mxu0 0.0
    %1713 = vmatprep.subr.mxu0 0.0
    %1714 = vmatpush1.msra.mxu0 0.0
    %1715 = vmatprep.mubr.f32.mxu0 0.0
    %1716 = vmatmul.mubr.f32.gmra.mrb[0].mxu0 %v1649
    %v1717 = vpop.f32.mrb[0].mxu0
    %v1718 = vadd.f32 0.0, %v1717
    %v1719 = vpop.f32.mrb[0].mxu0
    %1720 = vdwg.mxu0
    %v1722 = vsel %vm976, %v1641, 0
    %v1725 = vsel %vm976, %v1718, 0
    %1727 = vmatprep.subr.mxu0 0.0
    %1728 = vmatpush1.msra.mxu0 %v621
    %1729 = vmatprep.subr.mxu0 0.0
    %1730 = vmatpush1.msra.mxu0 %v622
    %1731 = vmatprep.subr.mxu0 0.0
    %1732 = vmatpush1.msra.mxu0 %v623
    %1733 = vmatprep.subr.mxu0 0.0
    %1734 = vmatpush1.msra.mxu0 %v624
    %1735 = vmatprep.subr.mxu0 0.0
    %1736 = vmatpush1.msra.mxu0 %v625
    %1737 = vmatprep.subr.mxu0 0.0
    %1738 = vmatpush1.msra.mxu0 %v626
    %1739 = vmatprep.subr.mxu0 0.0
    %1740 = vmatpush1.msra.mxu0 %v627
    %1741 = vmatprep.subr.mxu0 0.0
    %1742 = vmatpush1.msra.mxu0 %v628
    %1743 = vmatprep.subr.mxu0 0.0
    %1744 = vmatpush1.msra.mxu0 0.0
    %1745 = vmatprep.subr.mxu0 0.0
    %1746 = vmatpush1.msra.mxu0 0.0
    %1747 = vmatprep.subr.mxu0 0.0
    %1748 = vmatpush1.msra.mxu0 0.0
    %1749 = vmatprep.subr.mxu0 0.0
    %1750 = vmatpush1.msra.mxu0 0.0
    %1751 = vmatprep.subr.mxu0 0.0
    %1752 = vmatpush1.msra.mxu0 0.0
    %1753 = vmatprep.subr.mxu0 0.0
    %1754 = vmatpush1.msra.mxu0 0.0
    %1755 = vmatprep.subr.mxu0 0.0
    %1756 = vmatpush1.msra.mxu0 0.0
    %1757 = vmatprep.subr.mxu0 0.0
    %1758 = vmatpush1.msra.mxu0 0.0
    %1759 = vmatprep.subr.mxu0 0.0
    %1760 = vmatpush1.msra.mxu0 0.0
    %1761 = vmatprep.subr.mxu0 0.0
    %1762 = vmatpush1.msra.mxu0 0.0
    %1763 = vmatprep.subr.mxu0 0.0
    %1764 = vmatpush1.msra.mxu0 0.0
    %1765 = vmatprep.subr.mxu0 0.0
    %1766 = vmatpush1.msra.mxu0 0.0
    %1767 = vmatprep.subr.mxu0 0.0
    %1768 = vmatpush1.msra.mxu0 0.0
    %1769 = vmatprep.subr.mxu0 0.0
    %1770 = vmatpush1.msra.mxu0 0.0
    %1771 = vmatprep.subr.mxu0 0.0
    %1772 = vmatpush1.msra.mxu0 0.0
    %1773 = vmatprep.subr.mxu0 0.0
    %1774 = vmatpush1.msra.mxu0 0.0
    %1775 = vmatprep.subr.mxu0 0.0
    %1776 = vmatpush1.msra.mxu0 0.0
    %1777 = vmatprep.subr.mxu0 0.0
    %1778 = vmatpush1.msra.mxu0 0.0
    %1779 = vmatprep.subr.mxu0 0.0
    %1780 = vmatpush1.msra.mxu0 0.0
    %1781 = vmatprep.subr.mxu0 0.0
    %1782 = vmatpush1.msra.mxu0 0.0
    %1783 = vmatprep.subr.mxu0 0.0
    %1784 = vmatpush1.msra.mxu0 0.0
    %1785 = vmatprep.subr.mxu0 0.0
    %1786 = vmatpush1.msra.mxu0 0.0
    %1787 = vmatprep.subr.mxu0 0.0
    %1788 = vmatpush1.msra.mxu0 0.0
    %1789 = vmatprep.subr.mxu0 0.0
    %1790 = vmatpush1.msra.mxu0 0.0
    %1791 = vmatprep.mubr.f32.mxu0 0.0
    %1792 = vmatmul.mubr.f32.gmra.mrb[0].mxu0 %v1722
    %v1793 = vpop.f32.mrb[0].mxu0
    %v1794 = vadd.f32 0.0, %v1793
    %v1795 = vpop.f32.mrb[0].mxu0
    %1796 = vmatprep.mubr.f32.mxu0 0.0
    %1797 = vmatmul.mubr.f32.gmra.mrb[0].mxu0 %v1725
    %v1798 = vpop.f32.mrb[0].mxu0
    %v1799 = vadd.f32 0.0, %v1798
    %v1800 = vpop.f32.mrb[0].mxu0
    %1801 = vdwg.mxu0
    %v1802 = vadd.f32 %v1383, %v1794
    %v1803 = vadd.f32 %v1384, %v1799
    %v1804 = vadd.f32 %v560, %v1802
    %v1805 = vadd.f32 %v561, %v1803
    %1806 = vadd.xlane.f32.xlu0 %v1804
    %v1807 = vpop.xlane.xlu0 %1806
    %1808 = vadd.xlane.f32.xlu0 %v1805
    %v1809 = vpop.xlane.xlu0 %1808
    %v1810 = vmul.f32 %v1807, %v766
    %v1811 = vmul.f32 %v1809, %v766
    %v1812 = vsub.f32 %v1804, %v1810
    %v1813 = vsub.f32 %v1805, %v1811
    %v1814 = vmul.f32 %v1812, %v1812
    %v1815 = vmul.f32 %v1813, %v1813
    %1816 = vadd.xlane.f32.xlu0 %v1814
    %v1817 = vpop.xlane.xlu0 %1816
    %1818 = vadd.xlane.f32.xlu0 %v1815
    %v1819 = vpop.xlane.xlu0 %1818
    %v1820 = vmul.f32 %v1817, %v766
    %v1821 = vmul.f32 %v1819, %v766
    %v1822 = vadd.f32 %v1820, 1e-05
    %v1823 = vadd.f32 %v1821, 1e-05
    %v1824 = vrsqrt.pop %v1822
    %v1825 = vrsqrt.pop %v1823
    %v1826 = vmul.f32 %v1812, %v1824
    %v1827 = vmul.f32 %v1813, %v1825
    %v1829 = vlaneseq
    %v1830 = vshrl.u32 %v1829, 7
    %v1831 = vsub.s32 0, %v1830
    %v1832 = vrot.slane %v630, %v1831
    %v1834 = vmul.f32 %v1826, %v1832
    %v1835 = vmul.f32 %v1827, %v1832
    %v1837 = vlaneseq
    %v1838 = vshrl.u32 %v1837, 7
    %v1839 = vsub.s32 0, %v1838
    %v1840 = vrot.slane %v631, %v1839
    %v1842 = vadd.f32 %v1834, %v1840
    %v1843 = vadd.f32 %v1835, %v1840
    %v1845 = vlaneseq
    %v1846 = vshrl.u32 %v1845, 7
    %v1847 = vsub.s32 0, %v1846
    %v1848 = vrot.slane %v696, %v1847
    %v1849 = vlaneseq
    %v1850 = vshrl.u32 %v1849, 7
    %v1851 = vsub.s32 1, %v1850
    %v1852 = vrot.slane %v696, %v1851
    %v1853 = vlaneseq
    %v1854 = vshrl.u32 %v1853, 7
    %v1855 = vsub.s32 2, %v1854
    %v1856 = vrot.slane %v696, %v1855
    %v1857 = vlaneseq
    %v1858 = vshrl.u32 %v1857, 7
    %v1859 = vsub.s32 3, %v1858
    %v1860 = vrot.slane %v696, %v1859
    %1865 = vmatprep.subr.mxu0 %v633
    %1866 = vmatpush1.msra.mxu0 %v632
    %1867 = vmatprep.subr.mxu0 %v637
    %1868 = vmatpush1.msra.mxu0 %v636
    %1869 = vmatprep.subr.mxu0 %v641
    %1870 = vmatpush1.msra.mxu0 %v640
    %1871 = vmatprep.subr.mxu0 %v645
    %1872 = vmatpush1.msra.mxu0 %v644
    %1873 = vmatprep.subr.mxu0 %v649
    %1874 = vmatpush1.msra.mxu0 %v648
    %1875 = vmatprep.subr.mxu0 %v653
    %1876 = vmatpush1.msra.mxu0 %v652
    %1877 = vmatprep.subr.mxu0 %v657
    %1878 = vmatpush1.msra.mxu0 %v656
    %1879 = vmatprep.subr.mxu0 %v661
    %1880 = vmatpush1.msra.mxu0 %v660
    %1881 = vmatprep.subr.mxu0 %v665
    %1882 = vmatpush1.msra.mxu0 %v664
    %1883 = vmatprep.subr.mxu0 %v669
    %1884 = vmatpush1.msra.mxu0 %v668
    %1885 = vmatprep.subr.mxu0 %v673
    %1886 = vmatpush1.msra.mxu0 %v672
    %1887 = vmatprep.subr.mxu0 %v677
    %1888 = vmatpush1.msra.mxu0 %v676
    %1889 = vmatprep.subr.mxu0 %v681
    %1890 = vmatpush1.msra.mxu0 %v680
    %1891 = vmatprep.subr.mxu0 %v685
    %1892 = vmatpush1.msra.mxu0 %v684
    %1893 = vmatprep.subr.mxu0 %v689
    %1894 = vmatpush1.msra.mxu0 %v688
    %1895 = vmatprep.subr.mxu0 %v693
    %1896 = vmatpush1.msra.mxu0 %v692
    %1897 = vmatprep.subr.mxu0 0.0
    %1898 = vmatpush1.msra.mxu0 0.0
    %1899 = vmatprep.subr.mxu0 0.0
    %1900 = vmatpush1.msra.mxu0 0.0
    %1901 = vmatprep.subr.mxu0 0.0
    %1902 = vmatpush1.msra.mxu0 0.0
    %1903 = vmatprep.subr.mxu0 0.0
    %1904 = vmatpush1.msra.mxu0 0.0
    %1905 = vmatprep.subr.mxu0 0.0
    %1906 = vmatpush1.msra.mxu0 0.0
    %1907 = vmatprep.subr.mxu0 0.0
    %1908 = vmatpush1.msra.mxu0 0.0
    %1909 = vmatprep.subr.mxu0 0.0
    %1910 = vmatpush1.msra.mxu0 0.0
    %1911 = vmatprep.subr.mxu0 0.0
    %1912 = vmatpush1.msra.mxu0 0.0
    %1913 = vmatprep.subr.mxu0 0.0
    %1914 = vmatpush1.msra.mxu0 0.0
    %1915 = vmatprep.subr.mxu0 0.0
    %1916 = vmatpush1.msra.mxu0 0.0
    %1917 = vmatprep.subr.mxu0 0.0
    %1918 = vmatpush1.msra.mxu0 0.0
    %1919 = vmatprep.subr.mxu0 0.0
    %1920 = vmatpush1.msra.mxu0 0.0
    %1921 = vmatprep.subr.mxu0 0.0
    %1922 = vmatpush1.msra.mxu0 0.0
    %1923 = vmatprep.subr.mxu0 0.0
    %1924 = vmatpush1.msra.mxu0 0.0
    %1925 = vmatprep.subr.mxu0 0.0
    %1926 = vmatpush1.msra.mxu0 0.0
    %1927 = vmatprep.subr.mxu0 0.0
    %1928 = vmatpush1.msra.mxu0 0.0
    %1929 = vmatprep.mubr.f32.mxu0 0.0
    %1930 = vmatmul.mubr.f32.gmra.mrb[0].mxu0 %v1842
    %v1931 = vpop.f32.mrb[0].mxu0
    %v1932 = vadd.f32 %v1848, %v1931
    %v1933 = vpop.f32.mrb[0].mxu0
    %v1934 = vadd.f32 %v1852, %v1933
    %1935 = vmatprep.mubr.f32.mxu0 0.0
    %1936 = vmatmul.mubr.f32.gmra.mrb[0].mxu0 %v1843
    %v1937 = vpop.f32.mrb[0].mxu0
    %v1938 = vadd.f32 %v1848, %v1937
    %v1939 = vpop.f32.mrb[0].mxu0
    %v1940 = vadd.f32 %v1852, %v1939
    %1941 = vdwg.mxu0
    %1942 = vmatprep.subr.mxu0 %v635
    %1943 = vmatpush1.msra.mxu0 %v634
    %1944 = vmatprep.subr.mxu0 %v639
    %1945 = vmatpush1.msra.mxu0 %v638
    %1946 = vmatprep.subr.mxu0 %v643
    %1947 = vmatpush1.msra.mxu0 %v642
    %1948 = vmatprep.subr.mxu0 %v647
    %1949 = vmatpush1.msra.mxu0 %v646
    %1950 = vmatprep.subr.mxu0 %v651
    %1951 = vmatpush1.msra.mxu0 %v650
    %1952 = vmatprep.subr.mxu0 %v655
    %1953 = vmatpush1.msra.mxu0 %v654
    %1954 = vmatprep.subr.mxu0 %v659
    %1955 = vmatpush1.msra.mxu0 %v658
    %1956 = vmatprep.subr.mxu0 %v663
    %1957 = vmatpush1.msra.mxu0 %v662
    %1958 = vmatprep.subr.mxu0 %v667
    %1959 = vmatpush1.msra.mxu0 %v666
    %1960 = vmatprep.subr.mxu0 %v671
    %1961 = vmatpush1.msra.mxu0 %v670
    %1962 = vmatprep.subr.mxu0 %v675
    %1963 = vmatpush1.msra.mxu0 %v674
    %1964 = vmatprep.subr.mxu0 %v679
    %1965 = vmatpush1.msra.mxu0 %v678
    %1966 = vmatprep.subr.mxu0 %v683
    %1967 = vmatpush1.msra.mxu0 %v682
    %1968 = vmatprep.subr.mxu0 %v687
    %1969 = vmatpush1.msra.mxu0 %v686
    %1970 = vmatprep.subr.mxu0 %v691
    %1971 = vmatpush1.msra.mxu0 %v690
    %1972 = vmatprep.subr.mxu0 %v695
    %1973 = vmatpush1.msra.mxu0 %v694
    %1974 = vmatprep.subr.mxu0 0.0
    %1975 = vmatpush1.msra.mxu0 0.0
    %1976 = vmatprep.subr.mxu0 0.0
    %1977 = vmatpush1.msra.mxu0 0.0
    %1978 = vmatprep.subr.mxu0 0.0
    %1979 = vmatpush1.msra.mxu0 0.0
    %1980 = vmatprep.subr.mxu0 0.0
    %1981 = vmatpush1.msra.mxu0 0.0
    %1982 = vmatprep.subr.mxu0 0.0
    %1983 = vmatpush1.msra.mxu0 0.0
    %1984 = vmatprep.subr.mxu0 0.0
    %1985 = vmatpush1.msra.mxu0 0.0
    %1986 = vmatprep.subr.mxu0 0.0
    %1987 = vmatpush1.msra.mxu0 0.0
    %1988 = vmatprep.subr.mxu0 0.0
    %1989 = vmatpush1.msra.mxu0 0.0
    %1990 = vmatprep.subr.mxu0 0.0
    %1991 = vmatpush1.msra.mxu0 0.0
    %1992 = vmatprep.subr.mxu0 0.0
    %1993 = vmatpush1.msra.mxu0 0.0
    %1994 = vmatprep.subr.mxu0 0.0
    %1995 = vmatpush1.msra.mxu0 0.0
    %1996 = vmatprep.subr.mxu0 0.0
    %1997 = vmatpush1.msra.mxu0 0.0
    %1998 = vmatprep.subr.mxu0 0.0
    %1999 = vmatpush1.msra.mxu0 0.0
    %2000 = vmatprep.subr.mxu0 0.0
    %2001 = vmatpush1.msra.mxu0 0.0
    %2002 = vmatprep.subr.mxu0 0.0
    %2003 = vmatpush1.msra.mxu0 0.0
    %2004 = vmatprep.subr.mxu0 0.0
    %2005 = vmatpush1.msra.mxu0 0.0
    %2006 = vmatprep.mubr.f32.mxu0 0.0
    %2007 = vmatmul.mubr.f32.gmra.mrb[0].mxu0 %v1842
    %v2008 = vpop.f32.mrb[0].mxu0
    %v2009 = vadd.f32 %v1856, %v2008
    %v2010 = vpop.f32.mrb[0].mxu0
    %v2011 = vadd.f32 %v1860, %v2010
    %2012 = vmatprep.mubr.f32.mxu0 0.0
    %2013 = vmatmul.mubr.f32.gmra.mrb[0].mxu0 %v1843
    %v2014 = vpop.f32.mrb[0].mxu0
    %v2015 = vadd.f32 %v1856, %v2014
    %v2016 = vpop.f32.mrb[0].mxu0
    %v2017 = vadd.f32 %v1860, %v2016
    %2018 = vdwg.mxu0
    %v2019 = vmul.f32 %v1932, %v1932
    %v2020 = vmul.f32 %v1934, %v1934
    %v2021 = vmul.f32 %v2009, %v2009
    %v2022 = vmul.f32 %v2011, %v2011
    %v2023 = vmul.f32 %v1938, %v1938
    %v2024 = vmul.f32 %v1940, %v1940
    %v2025 = vmul.f32 %v2015, %v2015
    %v2026 = vmul.f32 %v2017, %v2017
    %v2027 = vmul.f32 %v1932, %v2019
    %v2028 = vmul.f32 %v1934, %v2020
    %v2029 = vmul.f32 %v2009, %v2021
    %v2030 = vmul.f32 %v2011, %v2022
    %v2031 = vmul.f32 %v1938, %v2023
    %v2032 = vmul.f32 %v1940, %v2024
    %v2033 = vmul.f32 %v2015, %v2025
    %v2034 = vmul.f32 %v2017, %v2026
    %v2035 = vmul.f32 %v2027, 0.044715
    %v2036 = vmul.f32 %v2028, 0.044715
    %v2037 = vmul.f32 %v2029, 0.044715
    %v2038 = vmul.f32 %v2030, 0.044715
    %v2039 = vmul.f32 %v2031, 0.044715
    %v2040 = vmul.f32 %v2032, 0.044715
    %v2041 = vmul.f32 %v2033, 0.044715
    %v2042 = vmul.f32 %v2034, 0.044715
    %v2043 = vadd.f32 %v1932, %v2035
    %v2044 = vadd.f32 %v1934, %v2036
    %v2045 = vadd.f32 %v2009, %v2037
    %v2046 = vadd.f32 %v2011, %v2038
    %v2047 = vadd.f32 %v1938, %v2039
    %v2048 = vadd.f32 %v1940, %v2040
    %v2049 = vadd.f32 %v2015, %v2041
    %v2050 = vadd.f32 %v2017, %v2042
    %v2051 = vmul.f32 %v2043, 0.7978846
    %v2052 = vmul.f32 %v2044, 0.7978846
    %v2053 = vmul.f32 %v2045, 0.7978846
    %v2054 = vmul.f32 %v2046, 0.7978846
    %v2055 = vmul.f32 %v2047, 0.7978846
    %v2056 = vmul.f32 %v2048, 0.7978846
    %v2057 = vmul.f32 %v2049, 0.7978846
    %v2058 = vmul.f32 %v2050, 0.7978846
    %v2059 = vtanh.pop %v2051
    %v2060 = vtanh.pop %v2052
    %v2061 = vtanh.pop %v2053
    %v2062 = vtanh.pop %v2054
    %v2063 = vtanh.pop %v2055
    %v2064 = vtanh.pop %v2056
    %v2065 = vtanh.pop %v2057
    %v2066 = vtanh.pop %v2058
    %v2067 = vadd.f32 %v2059, 1.0
    %v2068 = vadd.f32 %v2060, 1.0
    %v2069 = vadd.f32 %v2061, 1.0
    %v2070 = vadd.f32 %v2062, 1.0
    %v2071 = vadd.f32 %v2063, 1.0
    %v2072 = vadd.f32 %v2064, 1.0
    %v2073 = vadd.f32 %v2065, 1.0
    %v2074 = vadd.f32 %v2066, 1.0
    %v2075 = vmul.f32 %v2067, 0.5
    %v2076 = vmul.f32 %v2068, 0.5
    %v2077 = vmul.f32 %v2069, 0.5
    %v2078 = vmul.f32 %v2070, 0.5
    %v2079 = vmul.f32 %v2071, 0.5
    %v2080 = vmul.f32 %v2072, 0.5
    %v2081 = vmul.f32 %v2073, 0.5
    %v2082 = vmul.f32 %v2074, 0.5
    %v2083 = vmul.f32 %v1932, %v2075
    %v2084 = vmul.f32 %v1934, %v2076
    %v2085 = vmul.f32 %v2009, %v2077
    %v2086 = vmul.f32 %v2011, %v2078
    %v2087 = vmul.f32 %v1938, %v2079
    %v2088 = vmul.f32 %v1940, %v2080
    %v2089 = vmul.f32 %v2015, %v2081
    %v2090 = vmul.f32 %v2017, %v2082
    %v2092 = vlaneseq
    %v2093 = vshrl.u32 %v2092, 7
    %v2094 = vsub.s32 0, %v2093
    %v2095 = vrot.slane %v761, %v2094
    %2097 = vmatprep.subr.mxu0 0.0
    %2098 = vmatpush1.msra.mxu0 %v697
    %2099 = vmatprep.subr.mxu0 0.0
    %2100 = vmatpush1.msra.mxu0 %v698
    %2101 = vmatprep.subr.mxu0 0.0
    %2102 = vmatpush1.msra.mxu0 %v699
    %2103 = vmatprep.subr.mxu0 0.0
    %2104 = vmatpush1.msra.mxu0 %v700
    %2105 = vmatprep.subr.mxu0 0.0
    %2106 = vmatpush1.msra.mxu0 %v701
    %2107 = vmatprep.subr.mxu0 0.0
    %2108 = vmatpush1.msra.mxu0 %v702
    %2109 = vmatprep.subr.mxu0 0.0
    %2110 = vmatpush1.msra.mxu0 %v703
    %2111 = vmatprep.subr.mxu0 0.0
    %2112 = vmatpush1.msra.mxu0 %v704
    %2113 = vmatprep.subr.mxu0 0.0
    %2114 = vmatpush1.msra.mxu0 %v705
    %2115 = vmatprep.subr.mxu0 0.0
    %2116 = vmatpush1.msra.mxu0 %v706
    %2117 = vmatprep.subr.mxu0 0.0
    %2118 = vmatpush1.msra.mxu0 %v707
    %2119 = vmatprep.subr.mxu0 0.0
    %2120 = vmatpush1.msra.mxu0 %v708
    %2121 = vmatprep.subr.mxu0 0.0
    %2122 = vmatpush1.msra.mxu0 %v709
    %2123 = vmatprep.subr.mxu0 0.0
    %2124 = vmatpush1.msra.mxu0 %v710
    %2125 = vmatprep.subr.mxu0 0.0
    %2126 = vmatpush1.msra.mxu0 %v711
    %2127 = vmatprep.subr.mxu0 0.0
    %2128 = vmatpush1.msra.mxu0 %v712
    %2129 = vmatprep.subr.mxu0 0.0
    %2130 = vmatpush1.msra.mxu0 %v713
    %2131 = vmatprep.subr.mxu0 0.0
    %2132 = vmatpush1.msra.mxu0 %v714
    %2133 = vmatprep.subr.mxu0 0.0
    %2134 = vmatpush1.msra.mxu0 %v715
    %2135 = vmatprep.subr.mxu0 0.0
    %2136 = vmatpush1.msra.mxu0 %v716
    %2137 = vmatprep.subr.mxu0 0.0
    %2138 = vmatpush1.msra.mxu0 %v717
    %2139 = vmatprep.subr.mxu0 0.0
    %2140 = vmatpush1.msra.mxu0 %v718
    %2141 = vmatprep.subr.mxu0 0.0
    %2142 = vmatpush1.msra.mxu0 %v719
    %2143 = vmatprep.subr.mxu0 0.0
    %2144 = vmatpush1.msra.mxu0 %v720
    %2145 = vmatprep.subr.mxu0 0.0
    %2146 = vmatpush1.msra.mxu0 %v721
    %2147 = vmatprep.subr.mxu0 0.0
    %2148 = vmatpush1.msra.mxu0 %v722
    %2149 = vmatprep.subr.mxu0 0.0
    %2150 = vmatpush1.msra.mxu0 %v723
    %2151 = vmatprep.subr.mxu0 0.0
    %2152 = vmatpush1.msra.mxu0 %v724
    %2153 = vmatprep.subr.mxu0 0.0
    %2154 = vmatpush1.msra.mxu0 %v725
    %2155 = vmatprep.subr.mxu0 0.0
    %2156 = vmatpush1.msra.mxu0 %v726
    %2157 = vmatprep.subr.mxu0 0.0
    %2158 = vmatpush1.msra.mxu0 %v727
    %2159 = vmatprep.subr.mxu0 0.0
    %2160 = vmatpush1.msra.mxu0 %v728
    %2161 = vmatprep.mubr.f32.mxu0 %v2084
    %2162 = vmatmul.mubr.f32.gmra.mrb[0].mxu0 %v2083
    %v2163 = vpop.f32.mrb[0].mxu0
    %v2164 = vadd.f32 %v2095, %v2163
    %v2165 = vpop.f32.mrb[0].mxu0
    %2166 = vmatprep.mubr.f32.mxu0 %v2088
    %2167 = vmatmul.mubr.f32.gmra.mrb[0].mxu0 %v2087
    %v2168 = vpop.f32.mrb[0].mxu0
    %v2169 = vadd.f32 %v2095, %v2168
    %v2170 = vpop.f32.mrb[0].mxu0
    %2171 = vdwg.mxu0
    %2172 = vmatprep.subr.mxu0 0.0
    %2173 = vmatpush1.msra.mxu0 %v729
    %2174 = vmatprep.subr.mxu0 0.0
    %2175 = vmatpush1.msra.mxu0 %v730
    %2176 = vmatprep.subr.mxu0 0.0
    %2177 = vmatpush1.msra.mxu0 %v731
    %2178 = vmatprep.subr.mxu0 0.0
    %2179 = vmatpush1.msra.mxu0 %v732
    %2180 = vmatprep.subr.mxu0 0.0
    %2181 = vmatpush1.msra.mxu0 %v733
    %2182 = vmatprep.subr.mxu0 0.0
    %2183 = vmatpush1.msra.mxu0 %v734
    %2184 = vmatprep.subr.mxu0 0.0
    %2185 = vmatpush1.msra.mxu0 %v735
    %2186 = vmatprep.subr.mxu0 0.0
    %2187 = vmatpush1.msra.mxu0 %v736
    %2188 = vmatprep.subr.mxu0 0.0
    %2189 = vmatpush1.msra.mxu0 %v737
    %2190 = vmatprep.subr.mxu0 0.0
    %2191 = vmatpush1.msra.mxu0 %v738
    %2192 = vmatprep.subr.mxu0 0.0
    %2193 = vmatpush1.msra.mxu0 %v739
    %2194 = vmatprep.subr.mxu0 0.0
    %2195 = vmatpush1.msra.mxu0 %v740
    %2196 = vmatprep.subr.mxu0 0.0
    %2197 = vmatpush1.msra.mxu0 %v741
    %2198 = vmatprep.subr.mxu0 0.0
    %2199 = vmatpush1.msra.mxu0 %v742
    %2200 = vmatprep.subr.mxu0 0.0
    %2201 = vmatpush1.msra.mxu0 %v743
    %2202 = vmatprep.subr.mxu0 0.0
    %2203 = vmatpush1.msra.mxu0 %v744
    %2204 = vmatprep.subr.mxu0 0.0
    %2205 = vmatpush1.msra.mxu0 %v745
    %2206 = vmatprep.subr.mxu0 0.0
    %2207 = vmatpush1.msra.mxu0 %v746
    %2208 = vmatprep.subr.mxu0 0.0
    %2209 = vmatpush1.msra.mxu0 %v747
    %2210 = vmatprep.subr.mxu0 0.0
    %2211 = vmatpush1.msra.mxu0 %v748
    %2212 = vmatprep.subr.mxu0 0.0
    %2213 = vmatpush1.msra.mxu0 %v749
    %2214 = vmatprep.subr.mxu0 0.0
    %2215 = vmatpush1.msra.mxu0 %v750
    %2216 = vmatprep.subr.mxu0 0.0
    %2217 = vmatpush1.msra.mxu0 %v751
    %2218 = vmatprep.subr.mxu0 0.0
    %2219 = vmatpush1.msra.mxu0 %v752
    %2220 = vmatprep.subr.mxu0 0.0
    %2221 = vmatpush1.msra.mxu0 %v753
    %2222 = vmatprep.subr.mxu0 0.0
    %2223 = vmatpush1.msra.mxu0 %v754
    %2224 = vmatprep.subr.mxu0 0.0
    %2225 = vmatpush1.msra.mxu0 %v755
    %2226 = vmatprep.subr.mxu0 0.0
    %2227 = vmatpush1.msra.mxu0 %v756
    %2228 = vmatprep.subr.mxu0 0.0
    %2229 = vmatpush1.msra.mxu0 %v757
    %2230 = vmatprep.subr.mxu0 0.0
    %2231 = vmatpush1.msra.mxu0 %v758
    %2232 = vmatprep.subr.mxu0 0.0
    %2233 = vmatpush1.msra.mxu0 %v759
    %2234 = vmatprep.subr.mxu0 0.0
    %2235 = vmatpush1.msra.mxu0 %v760
    %2236 = vmatprep.mubr.f32.mxu0 %v2086
    %2237 = vmatmul.mubr.f32.gmra.mrb[0].mxu0 %v2085
    %v2238 = vpop.f32.mrb[0].mxu0
    %v2239 = vadd.f32 %v2164, %v2238
    %v2240 = vpop.f32.mrb[0].mxu0
    %2241 = vmatprep.mubr.f32.mxu0 %v2090
    %2242 = vmatmul.mubr.f32.gmra.mrb[0].mxu0 %v2089
    %v2243 = vpop.f32.mrb[0].mxu0
    %v2244 = vadd.f32 %v2169, %v2243
    %v2245 = vpop.f32.mrb[0].mxu0
    %2246 = vdwg.mxu0
    %v2247 = vadd.f32 %v1804, %v2239
    %v2248 = vadd.f32 %v1805, %v2244
    %v2249 = vld [vmem:[#allocation21] sm:$0x1]
    %v2250 = vld [vmem:[#allocation23] sm:$0x1]
    %2251 = vadd.xlane.f32.xlu0 %v2247
    %v2252 = vpop.xlane.xlu0 %2251
    %2253 = vadd.xlane.f32.xlu0 %v2248
    %v2254 = vpop.xlane.xlu0 %2253
    %v2255 = vmul.f32 %v2252, %v766
    %v2256 = vmul.f32 %v2254, %v766
    %v2257 = vsub.f32 %v2247, %v2255
    %v2258 = vsub.f32 %v2248, %v2256
    %v2259 = vmul.f32 %v2257, %v2257
    %v2260 = vmul.f32 %v2258, %v2258
    %2261 = vadd.xlane.f32.xlu0 %v2259
    %v2262 = vpop.xlane.xlu0 %2261
    %2263 = vadd.xlane.f32.xlu0 %v2260
    %v2264 = vpop.xlane.xlu0 %2263
    %v2265 = vmul.f32 %v2262, %v766
    %v2266 = vmul.f32 %v2264, %v766
    %v2267 = vadd.f32 %v2265, 1e-05
    %v2268 = vadd.f32 %v2266, 1e-05
    %v2269 = vrsqrt.pop %v2267
    %v2270 = vrsqrt.pop %v2268
    %v2271 = vmul.f32 %v2257, %v2269
    %v2272 = vmul.f32 %v2258, %v2270
    %v2274 = vlaneseq
    %v2275 = vshrl.u32 %v2274, 7
    %v2276 = vsub.s32 0, %v2275
    %v2277 = vrot.slane %v2249, %v2276
    %v2279 = vmul.f32 %v2271, %v2277
    %v2280 = vmul.f32 %v2272, %v2277
    %v2282 = vlaneseq
    %v2283 = vshrl.u32 %v2282, 7
    %v2284 = vsub.s32 0, %v2283
    %v2285 = vrot.slane %v2250, %v2284
    %v2287 = vadd.f32 %v2279, %v2285
    %v2288 = vadd.f32 %v2280, %v2285
    %v2289 = vld [vmem:[#allocation24] sm:$0xff]
    %v2290 = vld [vmem:[#allocation24 + $0x8] sm:$0xff]
    %v2291 = vld [vmem:[#allocation24 + $0x10] sm:$0xff]
    %v2292 = vld [vmem:[#allocation24 + $0x18] sm:$0xff]
    %v2293 = vld [vmem:[#allocation24 + $0x20] sm:$0xff]
    %v2294 = vld [vmem:[#allocation24 + $0x28] sm:$0xff]
    %v2295 = vld [vmem:[#allocation24 + $0x30] sm:$0xff]
    %v2296 = vld [vmem:[#allocation24 + $0x38] sm:$0xff]
    %v2297 = vld [vmem:[#allocation24 + $0x40] sm:$0xff]
    %v2298 = vld [vmem:[#allocation24 + $0x48] sm:$0xff]
    %v2299 = vld [vmem:[#allocation24 + $0x50] sm:$0xff]
    %v2300 = vld [vmem:[#allocation24 + $0x58] sm:$0xff]
    %v2301 = vld [vmem:[#allocation24 + $0x60] sm:$0xff]
    %v2302 = vld [vmem:[#allocation24 + $0x68] sm:$0xff]
    %v2303 = vld [vmem:[#allocation24 + $0x70] sm:$0xff]
    %v2304 = vld [vmem:[#allocation24 + $0x78] sm:$0xff]
    %v2305 = vld [vmem:[%s43] sm:$0x1]
    %v2307 = vlaneseq
    %v2308 = vshrl.u32 %v2307, 7
    %v2309 = vsub.s32 0, %v2308
    %v2310 = vrot.slane %v2305, %v2309
    %2312 = vmatprep.subr.mxu0 0.0
    %2313 = vmatpush1.msra.mxu0 %v2289
    %2314 = vmatprep.subr.mxu0 0.0
    %2315 = vmatpush1.msra.mxu0 %v2290
    %2316 = vmatprep.subr.mxu0 0.0
    %2317 = vmatpush1.msra.mxu0 %v2291
    %2318 = vmatprep.subr.mxu0 0.0
    %2319 = vmatpush1.msra.mxu0 %v2292
    %2320 = vmatprep.subr.mxu0 0.0
    %2321 = vmatpush1.msra.mxu0 %v2293
    %2322 = vmatprep.subr.mxu0 0.0
    %2323 = vmatpush1.msra.mxu0 %v2294
    %2324 = vmatprep.subr.mxu0 0.0
    %2325 = vmatpush1.msra.mxu0 %v2295
    %2326 = vmatprep.subr.mxu0 0.0
    %2327 = vmatpush1.msra.mxu0 %v2296
    %2328 = vmatprep.subr.mxu0 0.0
    %2329 = vmatpush1.msra.mxu0 %v2297
    %2330 = vmatprep.subr.mxu0 0.0
    %2331 = vmatpush1.msra.mxu0 %v2298
    %2332 = vmatprep.subr.mxu0 0.0
    %2333 = vmatpush1.msra.mxu0 %v2299
    %2334 = vmatprep.subr.mxu0 0.0
    %2335 = vmatpush1.msra.mxu0 %v2300
    %2336 = vmatprep.subr.mxu0 0.0
    %2337 = vmatpush1.msra.mxu0 %v2301
    %2338 = vmatprep.subr.mxu0 0.0
    %2339 = vmatpush1.msra.mxu0 %v2302
    %2340 = vmatprep.subr.mxu0 0.0
    %2341 = vmatpush1.msra.mxu0 %v2303
    %2342 = vmatprep.subr.mxu0 0.0
    %2343 = vmatpush1.msra.mxu0 %v2304
    %2344 = vmatprep.subr.mxu0 0.0
    %2345 = vmatpush1.msra.mxu0 0.0
    %2346 = vmatprep.subr.mxu0 0.0
    %2347 = vmatpush1.msra.mxu0 0.0
    %2348 = vmatprep.subr.mxu0 0.0
    %2349 = vmatpush1.msra.mxu0 0.0
    %2350 = vmatprep.subr.mxu0 0.0
    %2351 = vmatpush1.msra.mxu0 0.0
    %2352 = vmatprep.subr.mxu0 0.0
    %2353 = vmatpush1.msra.mxu0 0.0
    %2354 = vmatprep.subr.mxu0 0.0
    %2355 = vmatpush1.msra.mxu0 0.0
    %2356 = vmatprep.subr.mxu0 0.0
    %2357 = vmatpush1.msra.mxu0 0.0
    %2358 = vmatprep.subr.mxu0 0.0
    %2359 = vmatpush1.msra.mxu0 0.0
    %2360 = vmatprep.subr.mxu0 0.0
    %2361 = vmatpush1.msra.mxu0 0.0
    %2362 = vmatprep.subr.mxu0 0.0
    %2363 = vmatpush1.msra.mxu0 0.0
    %2364 = vmatprep.subr.mxu0 0.0
    %2365 = vmatpush1.msra.mxu0 0.0
    %2366 = vmatprep.subr.mxu0 0.0
    %2367 = vmatpush1.msra.mxu0 0.0
    %2368 = vmatprep.subr.mxu0 0.0
    %2369 = vmatpush1.msra.mxu0 0.0
    %2370 = vmatprep.subr.mxu0 0.0
    %2371 = vmatpush1.msra.mxu0 0.0
    %2372 = vmatprep.subr.mxu0 0.0
    %2373 = vmatpush1.msra.mxu0 0.0
    %2374 = vmatprep.subr.mxu0 0.0
    %2375 = vmatpush1.msra.mxu0 0.0
    %2376 = vmatprep.mubr.f32.mxu0 0.0
    %2377 = vmatmul.mubr.f32.gmra.mrb[0].mxu0 %v2287
    %v2378 = vpop.f32.mrb[0].mxu0
    %v2379 = vadd.f32 %v2310, %v2378
    %v2380 = vpop.f32.mrb[0].mxu0
    %2381 = vmatprep.mubr.f32.mxu0 0.0
    %2382 = vmatmul.mubr.f32.gmra.mrb[0].mxu0 %v2288
    %v2383 = vpop.f32.mrb[0].mxu0
    %v2384 = vadd.f32 %v2310, %v2383
    %v2385 = vpop.f32.mrb[0].mxu0
    %2386 = vdwg.mxu0
    %v2387 = vld [vmem:[%s3] sm:$0x3]
    %v2388 = vlaneseq
    %v2389 = vand.u32 %v2388, 127
    %v2390 = vlaneseq
    %v2391 = vshrl.u32 %v2390, 7
    %v2392 = vsub.s32 0, %v2391
    %v2393 = vrot.slane %v2387, %v2392
    %2395 = vbcast.lane.b32.xlu0 %v2393, 256
    %v2396 = vpop.permute.xlu0 %2395
    %v2397 = vlaneseq
    %v2398 = vshrl.u32 %v2397, 7
    %v2399 = vsub.s32 1, %v2398
    %v2400 = vrot.slane %v2387, %v2399
    %2402 = vbcast.lane.b32.xlu0 %v2400, 256
    %v2403 = vpop.permute.xlu0 %2402
    %vm2404 = vcmp.eq.s32.totalorder %v2389, %v2396
    %vm2405 = vcmp.eq.s32.totalorder %v2389, %v2403
    %v2406 = vsel %vm2404, 1, 0
    %v2407 = vsel %vm2405, 1, 0
    %v2408 = vcvt.s32.f32 %v2406
    %v2409 = vcvt.s32.f32 %v2407
    %v2410 = vld [vmem:[#allocation26] sm:$0xff]
    %v2411 = vld [vmem:[#allocation26 + $0x8] sm:$0xff]
    %v2412 = vld [vmem:[#allocation26 + $0x10] sm:$0xff]
    %v2413 = vld [vmem:[#allocation26 + $0x18] sm:$0xff]
    %v2414 = vld [vmem:[#allocation26 + $0x20] sm:$0xff]
    %v2415 = vld [vmem:[#allocation26 + $0x28] sm:$0xff]
    %v2416 = vld [vmem:[#allocation26 + $0x30] sm:$0xff]
    %v2417 = vld [vmem:[#allocation26 + $0x38] sm:$0xff]
    %v2418 = vld [vmem:[#allocation26 + $0x40] sm:$0xff]
    %v2419 = vld [vmem:[#allocation26 + $0x48] sm:$0xff]
    %v2420 = vld [vmem:[#allocation26 + $0x50] sm:$0xff]
    %v2421 = vld [vmem:[#allocation26 + $0x58] sm:$0xff]
    %v2422 = vld [vmem:[#allocation26 + $0x60] sm:$0xff]
    %v2423 = vld [vmem:[#allocation26 + $0x68] sm:$0xff]
    %v2424 = vld [vmem:[#allocation26 + $0x70] sm:$0xff]
    %v2425 = vld [vmem:[#allocation26 + $0x78] sm:$0xff]
    %2426 = vmatprep.subr.mxu0 0.0
    %2427 = vmatpush1.msra.mxu0 %v2410
    %2428 = vmatprep.subr.mxu0 0.0
    %2429 = vmatpush1.msra.mxu0 %v2411
    %2430 = vmatprep.subr.mxu0 0.0
    %2431 = vmatpush1.msra.mxu0 %v2412
    %2432 = vmatprep.subr.mxu0 0.0
    %2433 = vmatpush1.msra.mxu0 %v2413
    %2434 = vmatprep.subr.mxu0 0.0
    %2435 = vmatpush1.msra.mxu0 %v2414
    %2436 = vmatprep.subr.mxu0 0.0
    %2437 = vmatpush1.msra.mxu0 %v2415
    %2438 = vmatprep.subr.mxu0 0.0
    %2439 = vmatpush1.msra.mxu0 %v2416
    %2440 = vmatprep.subr.mxu0 0.0
    %2441 = vmatpush1.msra.mxu0 %v2417
    %2442 = vmatprep.subr.mxu0 0.0
    %2443 = vmatpush1.msra.mxu0 %v2418
    %2444 = vmatprep.subr.mxu0 0.0
    %2445 = vmatpush1.msra.mxu0 %v2419
    %2446 = vmatprep.subr.mxu0 0.0
    %2447 = vmatpush1.msra.mxu0 %v2420
    %2448 = vmatprep.subr.mxu0 0.0
    %2449 = vmatpush1.msra.mxu0 %v2421
    %2450 = vmatprep.subr.mxu0 0.0
    %2451 = vmatpush1.msra.mxu0 %v2422
    %2452 = vmatprep.subr.mxu0 0.0
    %2453 = vmatpush1.msra.mxu0 %v2423
    %2454 = vmatprep.subr.mxu0 0.0
    %2455 = vmatpush1.msra.mxu0 %v2424
    %2456 = vmatprep.subr.mxu0 0.0
    %2457 = vmatpush1.msra.mxu0 %v2425
    %2458 = vmatprep.subr.mxu0 0.0
    %2459 = vmatpush1.msra.mxu0 0.0
    %2460 = vmatprep.subr.mxu0 0.0
    %2461 = vmatpush1.msra.mxu0 0.0
    %2462 = vmatprep.subr.mxu0 0.0
    %2463 = vmatpush1.msra.mxu0 0.0
    %2464 = vmatprep.subr.mxu0 0.0
    %2465 = vmatpush1.msra.mxu0 0.0
    %2466 = vmatprep.subr.mxu0 0.0
    %2467 = vmatpush1.msra.mxu0 0.0
    %2468 = vmatprep.subr.mxu0 0.0
    %2469 = vmatpush1.msra.mxu0 0.0
    %2470 = vmatprep.subr.mxu0 0.0
    %2471 = vmatpush1.msra.mxu0 0.0
    %2472 = vmatprep.subr.mxu0 0.0
    %2473 = vmatpush1.msra.mxu0 0.0
    %2474 = vmatprep.subr.mxu0 0.0
    %2475 = vmatpush1.msra.mxu0 0.0
    %2476 = vmatprep.subr.mxu0 0.0
    %2477 = vmatpush1.msra.mxu0 0.0
    %2478 = vmatprep.subr.mxu0 0.0
    %2479 = vmatpush1.msra.mxu0 0.0
    %2480 = vmatprep.subr.mxu0 0.0
    %2481 = vmatpush1.msra.mxu0 0.0
    %2482 = vmatprep.subr.mxu0 0.0
    %2483 = vmatpush1.msra.mxu0 0.0
    %2484 = vmatprep.subr.mxu0 0.0
    %2485 = vmatpush1.msra.mxu0 0.0
    %2486 = vmatprep.subr.mxu0 0.0
    %2487 = vmatpush1.msra.mxu0 0.0
    %2488 = vmatprep.subr.mxu0 0.0
    %2489 = vmatpush1.msra.mxu0 0.0
    %2490 = vmatprep.mubr.f32.mxu0 0.0
    %2491 = vmatmul.mubr.f32.gmra.mrb[0].mxu0 %v2408
    %v2492 = vpop.f32.mrb[0].mxu0
    %v2493 = vadd.f32 0.0, %v2492
    %v2494 = vpop.f32.mrb[0].mxu0
    %2495 = vmatprep.mubr.f32.mxu0 0.0
    %2496 = vmatmul.mubr.f32.gmra.mrb[0].mxu0 %v2409
    %v2497 = vpop.f32.mrb[0].mxu0
    %v2498 = vadd.f32 0.0, %v2497
    %v2499 = vpop.f32.mrb[0].mxu0
    %2500 = vdwg.mxu0
    %2501 = vst [vmem:[#allocation2] sm:$0xff] %v2379
    %2502 = vst [vmem:[#allocation2 + $0x10] sm:$0xff] %v2384
    %2503 = vst [vmem:[#allocation2 + $0x8] sm:$0xff] %v2493
    %2504 = vst [vmem:[#allocation2 + $0x18] sm:$0xff] %v2498
    %v2505 = vld [vmem:[#allocation2] sm:$0xff]
    %v2506 = vld [vmem:[#allocation2 + $0x8] sm:$0xff]
    %v2507 = vld [vmem:[#allocation2 + $0x10] sm:$0xff]
    %v2508 = vld [vmem:[#allocation2 + $0x18] sm:$0xff]
    %v2509 = vld [vmem:[%s47] sm:$0xff]
    %v2510 = vld [vmem:[%s47 + $0x8] sm:$0xff]
    %v2511 = vadd.f32 %v2505, %v2509
    %v2512 = vadd.f32 %v2506, %v2510
    %v2513 = vadd.f32 %v2507, %v2509
    %v2514 = vadd.f32 %v2508, %v2510
    %v2515 = vld [vmem:[%s5] sm:$0x3]
    %v2516 = vld [vmem:[%s49] sm:$0x1]
    %v2517 = vld [vmem:[#allocation27] sm:$0x1]
    %v2518 = vld [vmem:[#allocation29] sm:$0xff]
    %v2519 = vld [vmem:[#allocation29 + $0x8] sm:$0xff]
    %v2520 = vld [vmem:[#allocation29 + $0x10] sm:$0xff]
    %v2521 = vld [vmem:[#allocation29 + $0x18] sm:$0xff]
    %v2522 = vld [vmem:[#allocation29 + $0x20] sm:$0xff]
    %v2523 = vld [vmem:[#allocation29 + $0x28] sm:$0xff]
    %v2524 = vld [vmem:[#allocation29 + $0x30] sm:$0xff]
    %v2525 = vld [vmem:[#allocation29 + $0x38] sm:$0xff]
    %v2526 = vld [vmem:[#allocation29 + $0x40] sm:$0xff]
    %v2527 = vld [vmem:[#allocation29 + $0x48] sm:$0xff]
    %v2528 = vld [vmem:[#allocation29 + $0x50] sm:$0xff]
    %v2529 = vld [vmem:[#allocation29 + $0x58] sm:$0xff]
    %v2530 = vld [vmem:[#allocation29 + $0x60] sm:$0xff]
    %v2531 = vld [vmem:[#allocation29 + $0x68] sm:$0xff]
    %v2532 = vld [vmem:[#allocation29 + $0x70] sm:$0xff]
    %v2533 = vld [vmem:[#allocation29 + $0x78] sm:$0xff]
    %v2534 = vld [vmem:[#allocation29 + $0x80] sm:$0xff]
    %v2535 = vld [vmem:[#allocation29 + $0x88] sm:$0xff]
    %v2536 = vld [vmem:[#allocation29 + $0x90] sm:$0xff]
    %v2537 = vld [vmem:[#allocation29 + $0x98] sm:$0xff]
    %v2538 = vld [vmem:[#allocation29 + $0xa0] sm:$0xff]
    %v2539 = vld [vmem:[#allocation29 + $0xa8] sm:$0xff]
    %v2540 = vld [vmem:[#allocation29 + $0xb0] sm:$0xff]
    %v2541 = vld [vmem:[#allocation29 + $0xb8] sm:$0xff]
    %v2542 = vld [vmem:[#allocation29 + $0xc0] sm:$0xff]
    %v2543 = vld [vmem:[#allocation29 + $0xc8] sm:$0xff]
    %v2544 = vld [vmem:[#allocation29 + $0xd0] sm:$0xff]
    %v2545 = vld [vmem:[#allocation29 + $0xd8] sm:$0xff]
    %v2546 = vld [vmem:[#allocation29 + $0xe0] sm:$0xff]
    %v2547 = vld [vmem:[#allocation29 + $0xe8] sm:$0xff]
    %v2548 = vld [vmem:[#allocation29 + $0xf0] sm:$0xff]
    %v2549 = vld [vmem:[#allocation29 + $0xf8] sm:$0xff]
    %v2550 = vld [vmem:[#allocation29 + $0x100] sm:$0xff]
    %v2551 = vld [vmem:[#allocation29 + $0x108] sm:$0xff]
    %v2552 = vld [vmem:[#allocation29 + $0x110] sm:$0xff]
    %v2553 = vld [vmem:[#allocation29 + $0x118] sm:$0xff]
    %v2554 = vld [vmem:[#allocation29 + $0x120] sm:$0xff]
    %v2555 = vld [vmem:[#allocation29 + $0x128] sm:$0xff]
    %v2556 = vld [vmem:[#allocation29 + $0x130] sm:$0xff]
    %v2557 = vld [vmem:[#allocation29 + $0x138] sm:$0xff]
    %v2558 = vld [vmem:[#allocation29 + $0x140] sm:$0xff]
    %v2559 = vld [vmem:[#allocation29 + $0x148] sm:$0xff]
    %v2560 = vld [vmem:[#allocation29 + $0x150] sm:$0xff]
    %v2561 = vld [vmem:[#allocation29 + $0x158] sm:$0xff]
    %v2562 = vld [vmem:[#allocation29 + $0x160] sm:$0xff]
    %v2563 = vld [vmem:[#allocation29 + $0x168] sm:$0xff]
    %v2564 = vld [vmem:[#allocation29 + $0x170] sm:$0xff]
    %v2565 = vld [vmem:[#allocation29 + $0x178] sm:$0xff]
    %v2566 = vld [vmem:[%s55] sm:$0x7]
    %v2567 = vld [vmem:[#allocation30] sm:$0xff]
    %v2568 = vld [vmem:[#allocation30 + $0x8] sm:$0xff]
    %v2569 = vld [vmem:[#allocation30 + $0x10] sm:$0xff]
    %v2570 = vld [vmem:[#allocation30 + $0x18] sm:$0xff]
    %v2571 = vld [vmem:[#allocation30 + $0x20] sm:$0xff]
    %v2572 = vld [vmem:[#allocation30 + $0x28] sm:$0xff]
    %v2573 = vld [vmem:[#allocation30 + $0x30] sm:$0xff]
    %v2574 = vld [vmem:[#allocation30 + $0x38] sm:$0xff]
    %v2575 = vld [vmem:[#allocation30 + $0x40] sm:$0xff]
    %v2576 = vld [vmem:[#allocation30 + $0x48] sm:$0xff]
    %v2577 = vld [vmem:[#allocation30 + $0x50] sm:$0xff]
    %v2578 = vld [vmem:[#allocation30 + $0x58] sm:$0xff]
    %v2579 = vld [vmem:[#allocation30 + $0x60] sm:$0xff]
    %v2580 = vld [vmem:[#allocation30 + $0x68] sm:$0xff]
    %v2581 = vld [vmem:[#allocation30 + $0x70] sm:$0xff]
    %v2582 = vld [vmem:[#allocation30 + $0x78] sm:$0xff]
    %v2583 = vld [vmem:[#allocation32] sm:$0x1]
    %v2584 = vld [vmem:[%s61] sm:$0x1]
    %v2585 = vld [vmem:[%s63] sm:$0x1]
    %v2586 = vld [vmem:[#allocation33] sm:$0xff]
    %v2587 = vld [vmem:[#allocation33 + $0x8] sm:$0xff]
    %v2588 = vld [vmem:[#allocation33 + $0x10] sm:$0xff]
    %v2589 = vld [vmem:[#allocation33 + $0x18] sm:$0xff]
    %v2590 = vld [vmem:[#allocation33 + $0x20] sm:$0xff]
    %v2591 = vld [vmem:[#allocation33 + $0x28] sm:$0xff]
    %v2592 = vld [vmem:[#allocation33 + $0x30] sm:$0xff]
    %v2593 = vld [vmem:[#allocation33 + $0x38] sm:$0xff]
    %v2594 = vld [vmem:[#allocation33 + $0x40] sm:$0xff]
    %v2595 = vld [vmem:[#allocation33 + $0x48] sm:$0xff]
    %v2596 = vld [vmem:[#allocation33 + $0x50] sm:$0xff]
    %v2597 = vld [vmem:[#allocation33 + $0x58] sm:$0xff]
    %v2598 = vld [vmem:[#allocation33 + $0x60] sm:$0xff]
    %v2599 = vld [vmem:[#allocation33 + $0x68] sm:$0xff]
    %v2600 = vld [vmem:[#allocation33 + $0x70] sm:$0xff]
    %v2601 = vld [vmem:[#allocation33 + $0x78] sm:$0xff]
    %v2602 = vld [vmem:[#allocation33 + $0x80] sm:$0xff]
    %v2603 = vld [vmem:[#allocation33 + $0x88] sm:$0xff]
    %v2604 = vld [vmem:[#allocation33 + $0x90] sm:$0xff]
    %v2605 = vld [vmem:[#allocation33 + $0x98] sm:$0xff]
    %v2606 = vld [vmem:[#allocation33 + $0xa0] sm:$0xff]
    %v2607 = vld [vmem:[#allocation33 + $0xa8] sm:$0xff]
    %v2608 = vld [vmem:[#allocation33 + $0xb0] sm:$0xff]
    %v2609 = vld [vmem:[#allocation33 + $0xb8] sm:$0xff]
    %v2610 = vld [vmem:[#allocation33 + $0xc0] sm:$0xff]
    %v2611 = vld [vmem:[#allocation33 + $0xc8] sm:$0xff]
    %v2612 = vld [vmem:[#allocation33 + $0xd0] sm:$0xff]
    %v2613 = vld [vmem:[#allocation33 + $0xd8] sm:$0xff]
    %v2614 = vld [vmem:[#allocation33 + $0xe0] sm:$0xff]
    %v2615 = vld [vmem:[#allocation33 + $0xe8] sm:$0xff]
    %v2616 = vld [vmem:[#allocation33 + $0xf0] sm:$0xff]
    %v2617 = vld [vmem:[#allocation33 + $0xf8] sm:$0xff]
    %v2618 = vld [vmem:[#allocation33 + $0x100] sm:$0xff]
    %v2619 = vld [vmem:[#allocation33 + $0x108] sm:$0xff]
    %v2620 = vld [vmem:[#allocation33 + $0x110] sm:$0xff]
    %v2621 = vld [vmem:[#allocation33 + $0x118] sm:$0xff]
    %v2622 = vld [vmem:[#allocation33 + $0x120] sm:$0xff]
    %v2623 = vld [vmem:[#allocation33 + $0x128] sm:$0xff]
    %v2624 = vld [vmem:[#allocation33 + $0x130] sm:$0xff]
    %v2625 = vld [vmem:[#allocation33 + $0x138] sm:$0xff]
    %v2626 = vld [vmem:[#allocation33 + $0x140] sm:$0xff]
    %v2627 = vld [vmem:[#allocation33 + $0x148] sm:$0xff]
    %v2628 = vld [vmem:[#allocation33 + $0x150] sm:$0xff]
    %v2629 = vld [vmem:[#allocation33 + $0x158] sm:$0xff]
    %v2630 = vld [vmem:[#allocation33 + $0x160] sm:$0xff]
    %v2631 = vld [vmem:[#allocation33 + $0x168] sm:$0xff]
    %v2632 = vld [vmem:[#allocation33 + $0x170] sm:$0xff]
    %v2633 = vld [vmem:[#allocation33 + $0x178] sm:$0xff]
    %v2634 = vld [vmem:[#allocation33 + $0x180] sm:$0xff]
    %v2635 = vld [vmem:[#allocation33 + $0x188] sm:$0xff]
    %v2636 = vld [vmem:[#allocation33 + $0x190] sm:$0xff]
    %v2637 = vld [vmem:[#allocation33 + $0x198] sm:$0xff]
    %v2638 = vld [vmem:[#allocation33 + $0x1a0] sm:$0xff]
    %v2639 = vld [vmem:[#allocation33 + $0x1a8] sm:$0xff]
    %v2640 = vld [vmem:[#allocation33 + $0x1b0] sm:$0xff]
    %v2641 = vld [vmem:[#allocation33 + $0x1b8] sm:$0xff]
    %v2642 = vld [vmem:[#allocation33 + $0x1c0] sm:$0xff]
    %v2643 = vld [vmem:[#allocation33 + $0x1c8] sm:$0xff]
    %v2644 = vld [vmem:[#allocation33 + $0x1d0] sm:$0xff]
    %v2645 = vld [vmem:[#allocation33 + $0x1d8] sm:$0xff]
    %v2646 = vld [vmem:[#allocation33 + $0x1e0] sm:$0xff]
    %v2647 = vld [vmem:[#allocation33 + $0x1e8] sm:$0xff]
    %v2648 = vld [vmem:[#allocation33 + $0x1f0] sm:$0xff]
    %v2649 = vld [vmem:[#allocation33 + $0x1f8] sm:$0xff]
    %v2650 = vld [vmem:[#allocation35] sm:$0xf]
    %v2651 = vld [vmem:[#allocation36] sm:$0xff]
    %v2652 = vld [vmem:[#allocation36 + $0x8] sm:$0xff]
    %v2653 = vld [vmem:[#allocation36 + $0x10] sm:$0xff]
    %v2654 = vld [vmem:[#allocation36 + $0x18] sm:$0xff]
    %v2655 = vld [vmem:[#allocation36 + $0x20] sm:$0xff]
    %v2656 = vld [vmem:[#allocation36 + $0x28] sm:$0xff]
    %v2657 = vld [vmem:[#allocation36 + $0x30] sm:$0xff]
    %v2658 = vld [vmem:[#allocation36 + $0x38] sm:$0xff]
    %v2659 = vld [vmem:[#allocation36 + $0x40] sm:$0xff]
    %v2660 = vld [vmem:[#allocation36 + $0x48] sm:$0xff]
    %v2661 = vld [vmem:[#allocation36 + $0x50] sm:$0xff]
    %v2662 = vld [vmem:[#allocation36 + $0x58] sm:$0xff]
    %v2663 = vld [vmem:[#allocation36 + $0x60] sm:$0xff]
    %v2664 = vld [vmem:[#allocation36 + $0x68] sm:$0xff]
    %v2665 = vld [vmem:[#allocation36 + $0x70] sm:$0xff]
    %v2666 = vld [vmem:[#allocation36 + $0x78] sm:$0xff]
    %v2667 = vld [vmem:[#allocation36 + $0x80] sm:$0xff]
    %v2668 = vld [vmem:[#allocation36 + $0x88] sm:$0xff]
    %v2669 = vld [vmem:[#allocation36 + $0x90] sm:$0xff]
    %v2670 = vld [vmem:[#allocation36 + $0x98] sm:$0xff]
    %v2671 = vld [vmem:[#allocation36 + $0xa0] sm:$0xff]
    %v2672 = vld [vmem:[#allocation36 + $0xa8] sm:$0xff]
    %v2673 = vld [vmem:[#allocation36 + $0xb0] sm:$0xff]
    %v2674 = vld [vmem:[#allocation36 + $0xb8] sm:$0xff]
    %v2675 = vld [vmem:[#allocation36 + $0xc0] sm:$0xff]
    %v2676 = vld [vmem:[#allocation36 + $0xc8] sm:$0xff]
    %v2677 = vld [vmem:[#allocation36 + $0xd0] sm:$0xff]
    %v2678 = vld [vmem:[#allocation36 + $0xd8] sm:$0xff]
    %v2679 = vld [vmem:[#allocation36 + $0xe0] sm:$0xff]
    %v2680 = vld [vmem:[#allocation36 + $0xe8] sm:$0xff]
    %v2681 = vld [vmem:[#allocation36 + $0xf0] sm:$0xff]
    %v2682 = vld [vmem:[#allocation36 + $0xf8] sm:$0xff]
    %v2683 = vld [vmem:[#allocation36 + $0x100] sm:$0xff]
    %v2684 = vld [vmem:[#allocation36 + $0x108] sm:$0xff]
    %v2685 = vld [vmem:[#allocation36 + $0x110] sm:$0xff]
    %v2686 = vld [vmem:[#allocation36 + $0x118] sm:$0xff]
    %v2687 = vld [vmem:[#allocation36 + $0x120] sm:$0xff]
    %v2688 = vld [vmem:[#allocation36 + $0x128] sm:$0xff]
    %v2689 = vld [vmem:[#allocation36 + $0x130] sm:$0xff]
    %v2690 = vld [vmem:[#allocation36 + $0x138] sm:$0xff]
    %v2691 = vld [vmem:[#allocation36 + $0x140] sm:$0xff]
    %v2692 = vld [vmem:[#allocation36 + $0x148] sm:$0xff]
    %v2693 = vld [vmem:[#allocation36 + $0x150] sm:$0xff]
    %v2694 = vld [vmem:[#allocation36 + $0x158] sm:$0xff]
    %v2695 = vld [vmem:[#allocation36 + $0x160] sm:$0xff]
    %v2696 = vld [vmem:[#allocation36 + $0x168] sm:$0xff]
    %v2697 = vld [vmem:[#allocation36 + $0x170] sm:$0xff]
    %v2698 = vld [vmem:[#allocation36 + $0x178] sm:$0xff]
    %v2699 = vld [vmem:[#allocation36 + $0x180] sm:$0xff]
    %v2700 = vld [vmem:[#allocation36 + $0x188] sm:$0xff]
    %v2701 = vld [vmem:[#allocation36 + $0x190] sm:$0xff]
    %v2702 = vld [vmem:[#allocation36 + $0x198] sm:$0xff]
    %v2703 = vld [vmem:[#allocation36 + $0x1a0] sm:$0xff]
    %v2704 = vld [vmem:[#allocation36 + $0x1a8] sm:$0xff]
    %v2705 = vld [vmem:[#allocation36 + $0x1b0] sm:$0xff]
    %v2706 = vld [vmem:[#allocation36 + $0x1b8] sm:$0xff]
    %v2707 = vld [vmem:[#allocation36 + $0x1c0] sm:$0xff]
    %v2708 = vld [vmem:[#allocation36 + $0x1c8] sm:$0xff]
    %v2709 = vld [vmem:[#allocation36 + $0x1d0] sm:$0xff]
    %v2710 = vld [vmem:[#allocation36 + $0x1d8] sm:$0xff]
    %v2711 = vld [vmem:[#allocation36 + $0x1e0] sm:$0xff]
    %v2712 = vld [vmem:[#allocation36 + $0x1e8] sm:$0xff]
    %v2713 = vld [vmem:[#allocation36 + $0x1f0] sm:$0xff]
    %v2714 = vld [vmem:[#allocation36 + $0x1f8] sm:$0xff]
    %v2715 = vld [vmem:[#allocation38] sm:$0x1]
    %2716 = vadd.xlane.f32.xlu0 %v2511
    %v2717 = vpop.xlane.xlu0 %2716
    %2718 = vadd.xlane.f32.xlu0 %v2512
    %v2719 = vpop.xlane.xlu0 %2718
    %2720 = vadd.xlane.f32.xlu0 %v2513
    %v2721 = vpop.xlane.xlu0 %2720
    %2722 = vadd.xlane.f32.xlu0 %v2514
    %v2723 = vpop.xlane.xlu0 %2722
    %v2724 = vmul.f32 %v2717, %v766
    %v2725 = vmul.f32 %v2719, %v766
    %v2726 = vmul.f32 %v2721, %v766
    %v2727 = vmul.f32 %v2723, %v766
    %v2728 = vsub.f32 %v2511, %v2724
    %v2729 = vsub.f32 %v2512, %v2725
    %v2730 = vsub.f32 %v2513, %v2726
    %v2731 = vsub.f32 %v2514, %v2727
    %v2732 = vmul.f32 %v2728, %v2728
    %v2733 = vmul.f32 %v2729, %v2729
    %v2734 = vmul.f32 %v2730, %v2730
    %v2735 = vmul.f32 %v2731, %v2731
    %2736 = vadd.xlane.f32.xlu0 %v2732
    %v2737 = vpop.xlane.xlu0 %2736
    %2738 = vadd.xlane.f32.xlu0 %v2733
    %v2739 = vpop.xlane.xlu0 %2738
    %2740 = vadd.xlane.f32.xlu0 %v2734
    %v2741 = vpop.xlane.xlu0 %2740
    %2742 = vadd.xlane.f32.xlu0 %v2735
    %v2743 = vpop.xlane.xlu0 %2742
    %v2744 = vmul.f32 %v2737, %v766
    %v2745 = vmul.f32 %v2739, %v766
    %v2746 = vmul.f32 %v2741, %v766
    %v2747 = vmul.f32 %v2743, %v766
    %v2748 = vadd.f32 %v2744, 1e-05
    %v2749 = vadd.f32 %v2745, 1e-05
    %v2750 = vadd.f32 %v2746, 1e-05
    %v2751 = vadd.f32 %v2747, 1e-05
    %v2752 = vrsqrt.pop %v2748
    %v2753 = vrsqrt.pop %v2749
    %v2754 = vrsqrt.pop %v2750
    %v2755 = vrsqrt.pop %v2751
    %v2756 = vmul.f32 %v2728, %v2752
    %v2757 = vmul.f32 %v2729, %v2753
    %v2758 = vmul.f32 %v2730, %v2754
    %v2759 = vmul.f32 %v2731, %v2755
    %v2761 = vlaneseq
    %v2762 = vshrl.u32 %v2761, 7
    %v2763 = vsub.s32 0, %v2762
    %v2764 = vrot.slane %v2516, %v2763
    %v2766 = vmul.f32 %v2756, %v2764
    %v2767 = vmul.f32 %v2757, %v2764
    %v2768 = vmul.f32 %v2758, %v2764
    %v2769 = vmul.f32 %v2759, %v2764
    %v2771 = vlaneseq
    %v2772 = vshrl.u32 %v2771, 7
    %v2773 = vsub.s32 0, %v2772
    %v2774 = vrot.slane %v2517, %v2773
    %v2776 = vadd.f32 %v2766, %v2774
    %v2777 = vadd.f32 %v2767, %v2774
    %v2778 = vadd.f32 %v2768, %v2774
    %v2779 = vadd.f32 %v2769, %v2774
    %v2781 = vlaneseq
    %v2782 = vshrl.u32 %v2781, 7
    %v2783 = vsub.s32 0, %v2782
    %v2784 = vrot.slane %v2566, %v2783
    %v2785 = vlaneseq
    %v2786 = vshrl.u32 %v2785, 7
    %v2787 = vsub.s32 1, %v2786
    %v2788 = vrot.slane %v2566, %v2787
    %v2789 = vlaneseq
    %v2790 = vshrl.u32 %v2789, 7
    %v2791 = vsub.s32 2, %v2790
    %v2792 = vrot.slane %v2566, %v2791
    %2796 = vmatprep.subr.mxu0 %v2519
    %2797 = vmatpush1.msra.mxu0 %v2518
    %2798 = vmatprep.subr.mxu0 %v2522
    %2799 = vmatpush1.msra.mxu0 %v2521
    %2800 = vmatprep.subr.mxu0 %v2525
    %2801 = vmatpush1.msra.mxu0 %v2524
    %2802 = vmatprep.subr.mxu0 %v2528
    %2803 = vmatpush1.msra.mxu0 %v2527
    %2804 = vmatprep.subr.mxu0 %v2531
    %2805 = vmatpush1.msra.mxu0 %v2530
    %2806 = vmatprep.subr.mxu0 %v2534
    %2807 = vmatpush1.msra.mxu0 %v2533
    %2808 = vmatprep.subr.mxu0 %v2537
    %2809 = vmatpush1.msra.mxu0 %v2536
    %2810 = vmatprep.subr.mxu0 %v2540
    %2811 = vmatpush1.msra.mxu0 %v2539
    %2812 = vmatprep.subr.mxu0 %v2543
    %2813 = vmatpush1.msra.mxu0 %v2542
    %2814 = vmatprep.subr.mxu0 %v2546
    %2815 = vmatpush1.msra.mxu0 %v2545
    %2816 = vmatprep.subr.mxu0 %v2549
    %2817 = vmatpush1.msra.mxu0 %v2548
    %2818 = vmatprep.subr.mxu0 %v2552
    %2819 = vmatpush1.msra.mxu0 %v2551
    %2820 = vmatprep.subr.mxu0 %v2555
    %2821 = vmatpush1.msra.mxu0 %v2554
    %2822 = vmatprep.subr.mxu0 %v2558
    %2823 = vmatpush1.msra.mxu0 %v2557
    %2824 = vmatprep.subr.mxu0 %v2561
    %2825 = vmatpush1.msra.mxu0 %v2560
    %2826 = vmatprep.subr.mxu0 %v2564
    %2827 = vmatpush1.msra.mxu0 %v2563
    %2828 = vmatprep.subr.mxu0 0.0
    %2829 = vmatpush1.msra.mxu0 0.0
    %2830 = vmatprep.subr.mxu0 0.0
    %2831 = vmatpush1.msra.mxu0 0.0
    %2832 = vmatprep.subr.mxu0 0.0
    %2833 = vmatpush1.msra.mxu0 0.0
    %2834 = vmatprep.subr.mxu0 0.0
    %2835 = vmatpush1.msra.mxu0 0.0
    %2836 = vmatprep.subr.mxu0 0.0
    %2837 = vmatpush1.msra.mxu0 0.0
    %2838 = vmatprep.subr.mxu0 0.0
    %2839 = vmatpush1.msra.mxu0 0.0
    %2840 = vmatprep.subr.mxu0 0.0
    %2841 = vmatpush1.msra.mxu0 0.0
    %2842 = vmatprep.subr.mxu0 0.0
    %2843 = vmatpush1.msra.mxu0 0.0
    %2844 = vmatprep.subr.mxu0 0.0
    %2845 = vmatpush1.msra.mxu0 0.0
    %2846 = vmatprep.subr.mxu0 0.0
    %2847 = vmatpush1.msra.mxu0 0.0
    %2848 = vmatprep.subr.mxu0 0.0
    %2849 = vmatpush1.msra.mxu0 0.0
    %2850 = vmatprep.subr.mxu0 0.0
    %2851 = vmatpush1.msra.mxu0 0.0
    %2852 = vmatprep.subr.mxu0 0.0
    %2853 = vmatpush1.msra.mxu0 0.0
    %2854 = vmatprep.subr.mxu0 0.0
    %2855 = vmatpush1.msra.mxu0 0.0
    %2856 = vmatprep.subr.mxu0 0.0
    %2857 = vmatpush1.msra.mxu0 0.0
    %2858 = vmatprep.subr.mxu0 0.0
    %2859 = vmatpush1.msra.mxu0 0.0
    %2860 = vmatprep.mubr.f32.mxu0 0.0
    %2861 = vmatmul.mubr.f32.gmra.mrb[0].mxu0 %v2776
    %v2862 = vpop.f32.mrb[0].mxu0
    %v2863 = vadd.f32 %v2784, %v2862
    %v2864 = vpop.f32.mrb[0].mxu0
    %v2865 = vadd.f32 %v2788, %v2864
    %2866 = vmatprep.mubr.f32.mxu0 0.0
    %2867 = vmatmul.mubr.f32.gmra.mrb[0].mxu0 %v2777
    %v2868 = vpop.f32.mrb[0].mxu0
    %v2869 = vadd.f32 %v2784, %v2868
    %v2870 = vpop.f32.mrb[0].mxu0
    %v2871 = vadd.f32 %v2788, %v2870
    %2872 = vmatprep.mubr.f32.mxu0 0.0
    %2873 = vmatmul.mubr.f32.gmra.mrb[0].mxu0 %v2778
    %v2874 = vpop.f32.mrb[0].mxu0
    %v2875 = vadd.f32 %v2784, %v2874
    %v2876 = vpop.f32.mrb[0].mxu0
    %v2877 = vadd.f32 %v2788, %v2876
    %2878 = vmatprep.mubr.f32.mxu0 0.0
    %2879 = vmatmul.mubr.f32.gmra.mrb[0].mxu0 %v2779
    %v2880 = vpop.f32.mrb[0].mxu0
    %v2881 = vadd.f32 %v2784, %v2880
    %v2882 = vpop.f32.mrb[0].mxu0
    %v2883 = vadd.f32 %v2788, %v2882
    %2884 = vdwg.mxu0
    %2885 = vmatprep.subr.mxu0 0.0
    %2886 = vmatpush1.msra.mxu0 %v2520
    %2887 = vmatprep.subr.mxu0 0.0
    %2888 = vmatpush1.msra.mxu0 %v2523
    %2889 = vmatprep.subr.mxu0 0.0
    %2890 = vmatpush1.msra.mxu0 %v2526
    %2891 = vmatprep.subr.mxu0 0.0
    %2892 = vmatpush1.msra.mxu0 %v2529
    %2893 = vmatprep.subr.mxu0 0.0
    %2894 = vmatpush1.msra.mxu0 %v2532
    %2895 = vmatprep.subr.mxu0 0.0
    %2896 = vmatpush1.msra.mxu0 %v2535
    %2897 = vmatprep.subr.mxu0 0.0
    %2898 = vmatpush1.msra.mxu0 %v2538
    %2899 = vmatprep.subr.mxu0 0.0
    %2900 = vmatpush1.msra.mxu0 %v2541
    %2901 = vmatprep.subr.mxu0 0.0
    %2902 = vmatpush1.msra.mxu0 %v2544
    %2903 = vmatprep.subr.mxu0 0.0
    %2904 = vmatpush1.msra.mxu0 %v2547
    %2905 = vmatprep.subr.mxu0 0.0
    %2906 = vmatpush1.msra.mxu0 %v2550
    %2907 = vmatprep.subr.mxu0 0.0
    %2908 = vmatpush1.msra.mxu0 %v2553
    %2909 = vmatprep.subr.mxu0 0.0
    %2910 = vmatpush1.msra.mxu0 %v2556
    %2911 = vmatprep.subr.mxu0 0.0
    %2912 = vmatpush1.msra.mxu0 %v2559
    %2913 = vmatprep.subr.mxu0 0.0
    %2914 = vmatpush1.msra.mxu0 %v2562
    %2915 = vmatprep.subr.mxu0 0.0
    %2916 = vmatpush1.msra.mxu0 %v2565
    %2917 = vmatprep.subr.mxu0 0.0
    %2918 = vmatpush1.msra.mxu0 0.0
    %2919 = vmatprep.subr.mxu0 0.0
    %2920 = vmatpush1.msra.mxu0 0.0
    %2921 = vmatprep.subr.mxu0 0.0
    %2922 = vmatpush1.msra.mxu0 0.0
    %2923 = vmatprep.subr.mxu0 0.0
    %2924 = vmatpush1.msra.mxu0 0.0
    %2925 = vmatprep.subr.mxu0 0.0
    %2926 = vmatpush1.msra.mxu0 0.0
    %2927 = vmatprep.subr.mxu0 0.0
    %2928 = vmatpush1.msra.mxu0 0.0
    %2929 = vmatprep.subr.mxu0 0.0
    %2930 = vmatpush1.msra.mxu0 0.0
    %2931 = vmatprep.subr.mxu0 0.0
    %2932 = vmatpush1.msra.mxu0 0.0
    %2933 = vmatprep.subr.mxu0 0.0
    %2934 = vmatpush1.msra.mxu0 0.0
    %2935 = vmatprep.subr.mxu0 0.0
    %2936 = vmatpush1.msra.mxu0 0.0
    %2937 = vmatprep.subr.mxu0 0.0
    %2938 = vmatpush1.msra.mxu0 0.0
    %2939 = vmatprep.subr.mxu0 0.0
    %2940 = vmatpush1.msra.mxu0 0.0
    %2941 = vmatprep.subr.mxu0 0.0
    %2942 = vmatpush1.msra.mxu0 0.0
    %2943 = vmatprep.subr.mxu0 0.0
    %2944 = vmatpush1.msra.mxu0 0.0
    %2945 = vmatprep.subr.mxu0 0.0
    %2946 = vmatpush1.msra.mxu0 0.0
    %2947 = vmatprep.subr.mxu0 0.0
    %2948 = vmatpush1.msra.mxu0 0.0
    %2949 = vmatprep.mubr.f32.mxu0 0.0
    %2950 = vmatmul.mubr.f32.gmra.mrb[0].mxu0 %v2776
    %v2951 = vpop.f32.mrb[0].mxu0
    %v2952 = vadd.f32 %v2792, %v2951
    %v2953 = vpop.f32.mrb[0].mxu0
    %2954 = vmatprep.mubr.f32.mxu0 0.0
    %2955 = vmatmul.mubr.f32.gmra.mrb[0].mxu0 %v2777
    %v2956 = vpop.f32.mrb[0].mxu0
    %v2957 = vadd.f32 %v2792, %v2956
    %v2958 = vpop.f32.mrb[0].mxu0
    %2959 = vmatprep.mubr.f32.mxu0 0.0
    %2960 = vmatmul.mubr.f32.gmra.mrb[0].mxu0 %v2778
    %v2961 = vpop.f32.mrb[0].mxu0
    %v2962 = vadd.f32 %v2792, %v2961
    %v2963 = vpop.f32.mrb[0].mxu0
    %2964 = vmatprep.mubr.f32.mxu0 0.0
    %2965 = vmatmul.mubr.f32.gmra.mrb[0].mxu0 %v2779
    %v2966 = vpop.f32.mrb[0].mxu0
    %v2967 = vadd.f32 %v2792, %v2966
    %v2968 = vpop.f32.mrb[0].mxu0
    %2969 = vdwg.mxu0
    %v2970 = vlaneseq
    %v2971 = vshrl.u32 %v2970, 7
    %v2972 = vadd.s32 %v2971, 8
    %vm2973 = vcmp.le.s32.totalorder %v2389, %v2971
    %vm2974 = vcmp.le.s32.totalorder %v2389, %v2972
    %v2977 = vunpack.c.l.s4 1966171168
    %v2978 = vunpack.c.0.s8 %v2977
    %v2979 = vlaneseq
    %v2980 = vshrl.u32 %v2979, 7
    %v2981 = vsub.s32 %v2978, %v2980
    %v2982 = vrot.slane %v2515, %v2981
    %v2983 = vcombine.high %v2982, %v2982
    %v2985 = vunpack.c.l.s4 1966171168
    %v2986 = vunpack.c.0.s8 %v2985
    %v2987 = vlaneseq
    %v2988 = vshrl.u32 %v2987, 7
    %v2989 = vsub.s32 %v2986, %v2988
    %v2990 = vrot.slane %v2982, %v2989
    %v2992 = vunpack.c.l.s4 1966171168
    %v2993 = vunpack.c.0.s8 %v2992
    %v2994 = vlaneseq
    %v2995 = vshrl.u32 %v2994, 7
    %v2996 = vsub.s32 %v2993, %v2995
    %v2997 = vrot.slane %v2983, %v2996
    %vm3000 = vcmp.gt.f32.partialorder %v2990, 0.5
    %vm3001 = vcmp.gt.f32.partialorder %v2997, 0.5
    %v3003 = vlaneseq
    %v3004 = vshrl.u32 %v3003, 7
    %v3005 = vsub.s32 0, %v3004
    %v3006 = vrot.slane %v2583, %v3005
    %v3008 = vadd.f32 %v3006, 0.0
    %v3010 = vsel %vm976, %v2863, 0
    %v3013 = vsel %vm976, %v2869, 0
    %v3016 = vsel %vm976, %v2865, 0
    %v3019 = vsel %vm976, %v2871, 0
    %3021 = vmatprep.subr.mxu0 0.0
    %3022 = vmatpush1.xpose.msra.mxu0 %v3016
    %3023 = vmatprep.subr.mxu0 0.0
    %3024 = vmatpush1.xpose.msra.mxu0 %v3019
    %3025 = vmatprep.subr.mxu0 0.0
    %3026 = vmatpush1.xpose.msra.mxu0 0.0
    %3027 = vmatprep.subr.mxu0 0.0
    %3028 = vmatpush1.xpose.msra.mxu0 0.0
    %3029 = vmatprep.subr.mxu0 0.0
    %3030 = vmatpush1.xpose.msra.mxu0 0.0
    %3031 = vmatprep.subr.mxu0 0.0
    %3032 = vmatpush1.xpose.msra.mxu0 0.0
    %3033 = vmatprep.subr.mxu0 0.0
    %3034 = vmatpush1.xpose.msra.mxu0 0.0
    %3035 = vmatprep.subr.mxu0 0.0
    %3036 = vmatpush1.xpose.msra.mxu0 0.0
    %3037 = vmatprep.subr.mxu0 0.0
    %3038 = vmatpush1.xpose.msra.mxu0 0.0
    %3039 = vmatprep.subr.mxu0 0.0
    %3040 = vmatpush1.xpose.msra.mxu0 0.0
    %3041 = vmatprep.subr.mxu0 0.0
    %3042 = vmatpush1.xpose.msra.mxu0 0.0
    %3043 = vmatprep.subr.mxu0 0.0
    %3044 = vmatpush1.xpose.msra.mxu0 0.0
    %3045 = vmatprep.subr.mxu0 0.0
    %3046 = vmatpush1.xpose.msra.mxu0 0.0
    %3047 = vmatprep.subr.mxu0 0.0
    %3048 = vmatpush1.xpose.msra.mxu0 0.0
    %3049 = vmatprep.subr.mxu0 0.0
    %3050 = vmatpush1.xpose.msra.mxu0 0.0
    %3051 = vmatprep.subr.mxu0 0.0
    %3052 = vmatpush1.xpose.msra.mxu0 0.0
    %3053 = vmatprep.subr.mxu0 0.0
    %3054 = vmatpush1.xpose.msra.mxu0 0.0
    %3055 = vmatprep.subr.mxu0 0.0
    %3056 = vmatpush1.xpose.msra.mxu0 0.0
    %3057 = vmatprep.subr.mxu0 0.0
    %3058 = vmatpush1.xpose.msra.mxu0 0.0
    %3059 = vmatprep.subr.mxu0 0.0
    %3060 = vmatpush1.xpose.msra.mxu0 0.0
    %3061 = vmatprep.subr.mxu0 0.0
    %3062 = vmatpush1.xpose.msra.mxu0 0.0
    %3063 = vmatprep.subr.mxu0 0.0
    %3064 = vmatpush1.xpose.msra.mxu0 0.0
    %3065 = vmatprep.subr.mxu0 0.0
    %3066 = vmatpush1.xpose.msra.mxu0 0.0
    %3067 = vmatprep.subr.mxu0 0.0
    %3068 = vmatpush1.xpose.msra.mxu0 0.0
    %3069 = vmatprep.subr.mxu0 0.0
    %3070 = vmatpush1.xpose.msra.mxu0 0.0
    %3071 = vmatprep.subr.mxu0 0.0
    %3072 = vmatpush1.xpose.msra.mxu0 0.0
    %3073 = vmatprep.subr.mxu0 0.0
    %3074 = vmatpush1.xpose.msra.mxu0 0.0
    %3075 = vmatprep.subr.mxu0 0.0
    %3076 = vmatpush1.xpose.msra.mxu0 0.0
    %3077 = vmatprep.subr.mxu0 0.0
    %3078 = vmatpush1.xpose.msra.mxu0 0.0
    %3079 = vmatprep.subr.mxu0 0.0
    %3080 = vmatpush1.xpose.msra.mxu0 0.0
    %3081 = vmatprep.subr.mxu0 0.0
    %3082 = vmatpush1.xpose.msra.mxu0 0.0
    %3083 = vmatprep.subr.mxu0 0.0
    %3084 = vmatpush1.xpose.msra.mxu0 0.0
    %3085 = vmatprep.mubr.f32.mxu0 0.0
    %3086 = vmatmul.mubr.f32.gmra.mrb[0].mxu0 %v3010
    %v3087 = vpop.f32.mrb[0].mxu0
    %v3088 = vadd.f32 0.0, %v3087
    %v3089 = vpop.f32.mrb[0].mxu0
    %3090 = vmatprep.mubr.f32.mxu0 0.0
    %3091 = vmatmul.mubr.f32.gmra.mrb[0].mxu0 %v3013
    %v3092 = vpop.f32.mrb[0].mxu0
    %v3093 = vadd.f32 0.0, %v3092
    %v3094 = vpop.f32.mrb[0].mxu0
    %3095 = vdwg.mxu0
    %v3097 = vsel %vm976, %v2875, 0
    %v3100 = vsel %vm976, %v2881, 0
    %v3103 = vsel %vm976, %v2877, 0
    %v3106 = vsel %vm976, %v2883, 0
    %3108 = vmatprep.subr.mxu0 0.0
    %3109 = vmatpush1.xpose.msra.mxu0 %v3103
    %3110 = vmatprep.subr.mxu0 0.0
    %3111 = vmatpush1.xpose.msra.mxu0 %v3106
    %3112 = vmatprep.subr.mxu0 0.0
    %3113 = vmatpush1.xpose.msra.mxu0 0.0
    %3114 = vmatprep.subr.mxu0 0.0
    %3115 = vmatpush1.xpose.msra.mxu0 0.0
    %3116 = vmatprep.subr.mxu0 0.0
    %3117 = vmatpush1.xpose.msra.mxu0 0.0
    %3118 = vmatprep.subr.mxu0 0.0
    %3119 = vmatpush1.xpose.msra.mxu0 0.0
    %3120 = vmatprep.subr.mxu0 0.0
    %3121 = vmatpush1.xpose.msra.mxu0 0.0
    %3122 = vmatprep.subr.mxu0 0.0
    %3123 = vmatpush1.xpose.msra.mxu0 0.0
    %3124 = vmatprep.subr.mxu0 0.0
    %3125 = vmatpush1.xpose.msra.mxu0 0.0
    %3126 = vmatprep.subr.mxu0 0.0
    %3127 = vmatpush1.xpose.msra.mxu0 0.0
    %3128 = vmatprep.subr.mxu0 0.0
    %3129 = vmatpush1.xpose.msra.mxu0 0.0
    %3130 = vmatprep.subr.mxu0 0.0
    %3131 = vmatpush1.xpose.msra.mxu0 0.0
    %3132 = vmatprep.subr.mxu0 0.0
    %3133 = vmatpush1.xpose.msra.mxu0 0.0
    %3134 = vmatprep.subr.mxu0 0.0
    %3135 = vmatpush1.xpose.msra.mxu0 0.0
    %3136 = vmatprep.subr.mxu0 0.0
    %3137 = vmatpush1.xpose.msra.mxu0 0.0
    %3138 = vmatprep.subr.mxu0 0.0
    %3139 = vmatpush1.xpose.msra.mxu0 0.0
    %3140 = vmatprep.subr.mxu0 0.0
    %3141 = vmatpush1.xpose.msra.mxu0 0.0
    %3142 = vmatprep.subr.mxu0 0.0
    %3143 = vmatpush1.xpose.msra.mxu0 0.0
    %3144 = vmatprep.subr.mxu0 0.0
    %3145 = vmatpush1.xpose.msra.mxu0 0.0
    %3146 = vmatprep.subr.mxu0 0.0
    %3147 = vmatpush1.xpose.msra.mxu0 0.0
    %3148 = vmatprep.subr.mxu0 0.0
    %3149 = vmatpush1.xpose.msra.mxu0 0.0
    %3150 = vmatprep.subr.mxu0 0.0
    %3151 = vmatpush1.xpose.msra.mxu0 0.0
    %3152 = vmatprep.subr.mxu0 0.0
    %3153 = vmatpush1.xpose.msra.mxu0 0.0
    %3154 = vmatprep.subr.mxu0 0.0
    %3155 = vmatpush1.xpose.msra.mxu0 0.0
    %3156 = vmatprep.subr.mxu0 0.0
    %3157 = vmatpush1.xpose.msra.mxu0 0.0
    %3158 = vmatprep.subr.mxu0 0.0
    %3159 = vmatpush1.xpose.msra.mxu0 0.0
    %3160 = vmatprep.subr.mxu0 0.0
    %3161 = vmatpush1.xpose.msra.mxu0 0.0
    %3162 = vmatprep.subr.mxu0 0.0
    %3163 = vmatpush1.xpose.msra.mxu0 0.0
    %3164 = vmatprep.subr.mxu0 0.0
    %3165 = vmatpush1.xpose.msra.mxu0 0.0
    %3166 = vmatprep.subr.mxu0 0.0
    %3167 = vmatpush1.xpose.msra.mxu0 0.0
    %3168 = vmatprep.subr.mxu0 0.0
    %3169 = vmatpush1.xpose.msra.mxu0 0.0
    %3170 = vmatprep.subr.mxu0 0.0
    %3171 = vmatpush1.xpose.msra.mxu0 0.0
    %3172 = vmatprep.mubr.f32.mxu0 0.0
    %3173 = vmatmul.mubr.f32.gmra.mrb[0].mxu0 %v3097
    %v3174 = vpop.f32.mrb[0].mxu0
    %v3175 = vadd.f32 0.0, %v3174
    %v3176 = vpop.f32.mrb[0].mxu0
    %3177 = vmatprep.mubr.f32.mxu0 0.0
    %3178 = vmatmul.mubr.f32.gmra.mrb[0].mxu0 %v3100
    %v3179 = vpop.f32.mrb[0].mxu0
    %v3180 = vadd.f32 0.0, %v3179
    %v3181 = vpop.f32.mrb[0].mxu0
    %3182 = vdwg.mxu0
    %v3183 = vmul.f32 %v3088, 0.125
    %v3184 = vmul.f32 %v3093, 0.125
    %v3185 = vmul.f32 %v3175, 0.125
    %v3186 = vmul.f32 %v3180, 0.125
    %v3187 = vsel %vm3000, 1, 0
    %v3188 = vsel %vm3001, 1, 0
    %v3189 = vlaneseq
    %v3190 = vshrl.u32 %v3189, 7
    %v3191 = vsub.s32 0, %v3190
    %v3192 = vrot.slane %v3187, %v3191
    %v3193 = vlaneseq
    %v3194 = vshrl.u32 %v3193, 7
    %v3195 = vsub.s32 0, %v3194
    %v3196 = vrot.slane %v3188, %v3195
    %vm3197 = vcmp.eq.s32.totalorder %v3192, 1
    %vm3198 = vcmp.eq.s32.totalorder %v3196, 1
    %v3199 = vsel %vm3197, %v3183, -1e+30
    %v3200 = vsel %vm3197, %v3184, -1e+30
    %v3201 = vsel %vm3198, %v3185, -1e+30
    %v3202 = vsel %vm3198, %v3186, -1e+30
    %v3203 = vsel %vm2973, 1, 0
    %v3204 = vsel %vm2974, 1, 0
    %vm3205 = vcmp.eq.s32.totalorder %v3203, 1
    %vm3206 = vcmp.eq.s32.totalorder %v3204, 1
    %v3207 = vsel %vm3205, %v3199, -1e+30
    %v3208 = vsel %vm3206, %v3200, -1e+30
    %v3209 = vsel %vm3205, %v3201, -1e+30
    %v3210 = vsel %vm3206, %v3202, -1e+30
    %vm3211 = vcmask 130048
    %v3212 = vsel %vm3211, %v3207, -inf
    %3213 = vmax.xlane.f32.xlu0 %v3212
    %v3214 = vpop.xlane.xlu0 %3213
    %v3215 = vsel %vm3211, %v3208, -inf
    %3216 = vmax.xlane.f32.xlu0 %v3215
    %v3217 = vpop.xlane.xlu0 %3216
    %v3218 = vsel %vm3211, %v3209, -inf
    %3219 = vmax.xlane.f32.xlu0 %v3218
    %v3220 = vpop.xlane.xlu0 %3219
    %v3221 = vsel %vm3211, %v3210, -inf
    %3222 = vmax.xlane.f32.xlu0 %v3221
    %v3223 = vpop.xlane.xlu0 %3222
    %v3224 = vsub.f32 %v3207, %v3214
    %v3225 = vsub.f32 %v3208, %v3217
    %v3226 = vsub.f32 %v3209, %v3220
    %v3227 = vsub.f32 %v3210, %v3223
    %v3228 = vmul.f32 %v3224, 1.442695
    %v3229 = vpow.pop %v3228
    %v3230 = vmul.f32 %v3225, 1.442695
    %v3231 = vpow.pop %v3230
    %v3232 = vmul.f32 %v3226, 1.442695
    %v3233 = vpow.pop %v3232
    %v3234 = vmul.f32 %v3227, 1.442695
    %v3235 = vpow.pop %v3234
    %v3236 = vsel %vm3197, %v3229, 0.0
    %v3237 = vsel %vm3197, %v3231, 0.0
    %v3238 = vsel %vm3198, %v3233, 0.0
    %v3239 = vsel %vm3198, %v3235, 0.0
    %v3240 = vsel %vm3205, %v3236, 0.0
    %v3241 = vsel %vm3206, %v3237, 0.0
    %v3242 = vsel %vm3205, %v3238, 0.0
    %v3243 = vsel %vm3206, %v3239, 0.0
    %v3244 = vsel %vm3211, %v3240, 0.0
    %3245 = vadd.xlane.f32.xlu0 %v3244
    %v3246 = vpop.xlane.xlu0 %3245
    %v3247 = vsel %vm3211, %v3241, 0.0
    %3248 = vadd.xlane.f32.xlu0 %v3247
    %v3249 = vpop.xlane.xlu0 %3248
    %v3250 = vsel %vm3211, %v3242, 0.0
    %3251 = vadd.xlane.f32.xlu0 %v3250
    %v3252 = vpop.xlane.xlu0 %3251
    %v3253 = vsel %vm3211, %v3243, 0.0
    %3254 = vadd.xlane.f32.xlu0 %v3253
    %v3255 = vpop.xlane.xlu0 %3254
    %v3256 = vmax.f32 %v3246, 1e-20
    %v3257 = vmax.f32 %v3249, 1e-20
    %v3258 = vmax.f32 %v3252, 1e-20
    %v3259 = vmax.f32 %v3255, 1e-20
    %v3260 = vrcp.pop %v3256
    %v3261 = vrcp.pop %v3257
    %v3262 = vrcp.pop %v3258
    %v3263 = vrcp.pop %v3259
    %v3264 = vmul.f32 %v3240, %v3260
    %v3265 = vmul.f32 %v3241, %v3261
    %v3266 = vmul.f32 %v3242, %v3262
    %v3267 = vmul.f32 %v3243, %v3263
    %v3269 = vsel %vm3211, %v3264, 0
    %v3272 = vsel %vm3211, %v3265, 0
    %3274 = vmatprep.subr.mxu0 0.0
    %3275 = vmatpush1.msra.mxu0 %v2952
    %3276 = vmatprep.subr.mxu0 0.0
    %3277 = vmatpush1.msra.mxu0 %v2957
    %3278 = vmatprep.subr.mxu0 0.0
    %3279 = vmatpush1.msra.mxu0 0.0
    %3280 = vmatprep.subr.mxu0 0.0
    %3281 = vmatpush1.msra.mxu0 0.0
    %3282 = vmatprep.subr.mxu0 0.0
    %3283 = vmatpush1.msra.mxu0 0.0
    %3284 = vmatprep.subr.mxu0 0.0
    %3285 = vmatpush1.msra.mxu0 0.0
    %3286 = vmatprep.subr.mxu0 0.0
    %3287 = vmatpush1.msra.mxu0 0.0
    %3288 = vmatprep.subr.mxu0 0.0
    %3289 = vmatpush1.msra.mxu0 0.0
    %3290 = vmatprep.subr.mxu0 0.0
    %3291 = vmatpush1.msra.mxu0 0.0
    %3292 = vmatprep.subr.mxu0 0.0
    %3293 = vmatpush1.msra.mxu0 0.0
    %3294 = vmatprep.subr.mxu0 0.0
    %3295 = vmatpush1.msra.mxu0 0.0
    %3296 = vmatprep.subr.mxu0 0.0
    %3297 = vmatpush1.msra.mxu0 0.0
    %3298 = vmatprep.subr.mxu0 0.0
    %3299 = vmatpush1.msra.mxu0 0.0
    %3300 = vmatprep.subr.mxu0 0.0
    %3301 = vmatpush1.msra.mxu0 0.0
    %3302 = vmatprep.subr.mxu0 0.0
    %3303 = vmatpush1.msra.mxu0 0.0
    %3304 = vmatprep.subr.mxu0 0.0
    %3305 = vmatpush1.msra.mxu0 0.0
    %3306 = vmatprep.subr.mxu0 0.0
    %3307 = vmatpush1.msra.mxu0 0.0
    %3308 = vmatprep.subr.mxu0 0.0
    %3309 = vmatpush1.msra.mxu0 0.0
    %3310 = vmatprep.subr.mxu0 0.0
    %3311 = vmatpush1.msra.mxu0 0.0
    %3312 = vmatprep.subr.mxu0 0.0
    %3313 = vmatpush1.msra.mxu0 0.0
    %3314 = vmatprep.subr.mxu0 0.0
    %3315 = vmatpush1.msra.mxu0 0.0
    %3316 = vmatprep.subr.mxu0 0.0
    %3317 = vmatpush1.msra.mxu0 0.0
    %3318 = vmatprep.subr.mxu0 0.0
    %3319 = vmatpush1.msra.mxu0 0.0
    %3320 = vmatprep.subr.mxu0 0.0
    %3321 = vmatpush1.msra.mxu0 0.0
    %3322 = vmatprep.subr.mxu0 0.0
    %3323 = vmatpush1.msra.mxu0 0.0
    %3324 = vmatprep.subr.mxu0 0.0
    %3325 = vmatpush1.msra.mxu0 0.0
    %3326 = vmatprep.subr.mxu0 0.0
    %3327 = vmatpush1.msra.mxu0 0.0
    %3328 = vmatprep.subr.mxu0 0.0
    %3329 = vmatpush1.msra.mxu0 0.0
    %3330 = vmatprep.subr.mxu0 0.0
    %3331 = vmatpush1.msra.mxu0 0.0
    %3332 = vmatprep.subr.mxu0 0.0
    %3333 = vmatpush1.msra.mxu0 0.0
    %3334 = vmatprep.subr.mxu0 0.0
    %3335 = vmatpush1.msra.mxu0 0.0
    %3336 = vmatprep.subr.mxu0 0.0
    %3337 = vmatpush1.msra.mxu0 0.0
    %3338 = vmatprep.mubr.f32.mxu0 0.0
    %3339 = vmatmul.mubr.f32.gmra.mrb[0].mxu0 %v3269
    %v3340 = vpop.f32.mrb[0].mxu0
    %v3341 = vadd.f32 0.0, %v3340
    %v3342 = vpop.f32.mrb[0].mxu0
    %3343 = vmatprep.mubr.f32.mxu0 0.0
    %3344 = vmatmul.mubr.f32.gmra.mrb[0].mxu0 %v3272
    %v3345 = vpop.f32.mrb[0].mxu0
    %v3346 = vadd.f32 0.0, %v3345
    %v3347 = vpop.f32.mrb[0].mxu0
    %3348 = vdwg.mxu0
    %v3350 = vsel %vm3211, %v3266, 0
    %v3353 = vsel %vm3211, %v3267, 0
    %3355 = vmatprep.subr.mxu0 0.0
    %3356 = vmatpush1.msra.mxu0 %v2962
    %3357 = vmatprep.subr.mxu0 0.0
    %3358 = vmatpush1.msra.mxu0 %v2967
    %3359 = vmatprep.subr.mxu0 0.0
    %3360 = vmatpush1.msra.mxu0 0.0
    %3361 = vmatprep.subr.mxu0 0.0
    %3362 = vmatpush1.msra.mxu0 0.0
    %3363 = vmatprep.subr.mxu0 0.0
    %3364 = vmatpush1.msra.mxu0 0.0
    %3365 = vmatprep.subr.mxu0 0.0
    %3366 = vmatpush1.msra.mxu0 0.0
    %3367 = vmatprep.subr.mxu0 0.0
    %3368 = vmatpush1.msra.mxu0 0.0
    %3369 = vmatprep.subr.mxu0 0.0
    %3370 = vmatpush1.msra.mxu0 0.0
    %3371 = vmatprep.subr.mxu0 0.0
    %3372 = vmatpush1.msra.mxu0 0.0
    %3373 = vmatprep.subr.mxu0 0.0
    %3374 = vmatpush1.msra.mxu0 0.0
    %3375 = vmatprep.subr.mxu0 0.0
    %3376 = vmatpush1.msra.mxu0 0.0
    %3377 = vmatprep.subr.mxu0 0.0
    %3378 = vmatpush1.msra.mxu0 0.0
    %3379 = vmatprep.subr.mxu0 0.0
    %3380 = vmatpush1.msra.mxu0 0.0
    %3381 = vmatprep.subr.mxu0 0.0
    %3382 = vmatpush1.msra.mxu0 0.0
    %3383 = vmatprep.subr.mxu0 0.0
    %3384 = vmatpush1.msra.mxu0 0.0
    %3385 = vmatprep.subr.mxu0 0.0
    %3386 = vmatpush1.msra.mxu0 0.0
    %3387 = vmatprep.subr.mxu0 0.0
    %3388 = vmatpush1.msra.mxu0 0.0
    %3389 = vmatprep.subr.mxu0 0.0
    %3390 = vmatpush1.msra.mxu0 0.0
    %3391 = vmatprep.subr.mxu0 0.0
    %3392 = vmatpush1.msra.mxu0 0.0
    %3393 = vmatprep.subr.mxu0 0.0
    %3394 = vmatpush1.msra.mxu0 0.0
    %3395 = vmatprep.subr.mxu0 0.0
    %3396 = vmatpush1.msra.mxu0 0.0
    %3397 = vmatprep.subr.mxu0 0.0
    %3398 = vmatpush1.msra.mxu0 0.0
    %3399 = vmatprep.subr.mxu0 0.0
    %3400 = vmatpush1.msra.mxu0 0.0
    %3401 = vmatprep.subr.mxu0 0.0
    %3402 = vmatpush1.msra.mxu0 0.0
    %3403 = vmatprep.subr.mxu0 0.0
    %3404 = vmatpush1.msra.mxu0 0.0
    %3405 = vmatprep.subr.mxu0 0.0
    %3406 = vmatpush1.msra.mxu0 0.0
    %3407 = vmatprep.subr.mxu0 0.0
    %3408 = vmatpush1.msra.mxu0 0.0
    %3409 = vmatprep.subr.mxu0 0.0
    %3410 = vmatpush1.msra.mxu0 0.0
    %3411 = vmatprep.subr.mxu0 0.0
    %3412 = vmatpush1.msra.mxu0 0.0
    %3413 = vmatprep.subr.mxu0 0.0
    %3414 = vmatpush1.msra.mxu0 0.0
    %3415 = vmatprep.subr.mxu0 0.0
    %3416 = vmatpush1.msra.mxu0 0.0
    %3417 = vmatprep.subr.mxu0 0.0
    %3418 = vmatpush1.msra.mxu0 0.0
    %3419 = vmatprep.mubr.f32.mxu0 0.0
    %3420 = vmatmul.mubr.f32.gmra.mrb[0].mxu0 %v3350
    %v3421 = vpop.f32.mrb[0].mxu0
    %v3422 = vadd.f32 0.0, %v3421
    %v3423 = vpop.f32.mrb[0].mxu0
    %3424 = vmatprep.mubr.f32.mxu0 0.0
    %3425 = vmatmul.mubr.f32.gmra.mrb[0].mxu0 %v3353
    %v3426 = vpop.f32.mrb[0].mxu0
    %v3427 = vadd.f32 0.0, %v3426
    %v3428 = vpop.f32.mrb[0].mxu0
    %3429 = vdwg.mxu0
    %v3431 = vsel %vm976, %v3341, 0
    %v3434 = vsel %vm976, %v3346, 0
    %v3437 = vsel %vm976, %v3422, 0
    %v3440 = vsel %vm976, %v3427, 0
    %3442 = vmatprep.subr.mxu0 0.0
    %3443 = vmatpush1.msra.mxu0 %v2567
    %3444 = vmatprep.subr.mxu0 0.0
    %3445 = vmatpush1.msra.mxu0 %v2568
    %3446 = vmatprep.subr.mxu0 0.0
    %3447 = vmatpush1.msra.mxu0 %v2569
    %3448 = vmatprep.subr.mxu0 0.0
    %3449 = vmatpush1.msra.mxu0 %v2570
    %3450 = vmatprep.subr.mxu0 0.0
    %3451 = vmatpush1.msra.mxu0 %v2571
    %3452 = vmatprep.subr.mxu0 0.0
    %3453 = vmatpush1.msra.mxu0 %v2572
    %3454 = vmatprep.subr.mxu0 0.0
    %3455 = vmatpush1.msra.mxu0 %v2573
    %3456 = vmatprep.subr.mxu0 0.0
    %3457 = vmatpush1.msra.mxu0 %v2574
    %3458 = vmatprep.subr.mxu0 0.0
    %3459 = vmatpush1.msra.mxu0 0.0
    %3460 = vmatprep.subr.mxu0 0.0
    %3461 = vmatpush1.msra.mxu0 0.0
    %3462 = vmatprep.subr.mxu0 0.0
    %3463 = vmatpush1.msra.mxu0 0.0
    %3464 = vmatprep.subr.mxu0 0.0
    %3465 = vmatpush1.msra.mxu0 0.0
    %3466 = vmatprep.subr.mxu0 0.0
    %3467 = vmatpush1.msra.mxu0 0.0
    %3468 = vmatprep.subr.mxu0 0.0
    %3469 = vmatpush1.msra.mxu0 0.0
    %3470 = vmatprep.subr.mxu0 0.0
    %3471 = vmatpush1.msra.mxu0 0.0
    %3472 = vmatprep.subr.mxu0 0.0
    %3473 = vmatpush1.msra.mxu0 0.0
    %3474 = vmatprep.subr.mxu0 0.0
    %3475 = vmatpush1.msra.mxu0 0.0
    %3476 = vmatprep.subr.mxu0 0.0
    %3477 = vmatpush1.msra.mxu0 0.0
    %3478 = vmatprep.subr.mxu0 0.0
    %3479 = vmatpush1.msra.mxu0 0.0
    %3480 = vmatprep.subr.mxu0 0.0
    %3481 = vmatpush1.msra.mxu0 0.0
    %3482 = vmatprep.subr.mxu0 0.0
    %3483 = vmatpush1.msra.mxu0 0.0
    %3484 = vmatprep.subr.mxu0 0.0
    %3485 = vmatpush1.msra.mxu0 0.0
    %3486 = vmatprep.subr.mxu0 0.0
    %3487 = vmatpush1.msra.mxu0 0.0
    %3488 = vmatprep.subr.mxu0 0.0
    %3489 = vmatpush1.msra.mxu0 0.0
    %3490 = vmatprep.subr.mxu0 0.0
    %3491 = vmatpush1.msra.mxu0 0.0
    %3492 = vmatprep.subr.mxu0 0.0
    %3493 = vmatpush1.msra.mxu0 0.0
    %3494 = vmatprep.subr.mxu0 0.0
    %3495 = vmatpush1.msra.mxu0 0.0
    %3496 = vmatprep.subr.mxu0 0.0
    %3497 = vmatpush1.msra.mxu0 0.0
    %3498 = vmatprep.subr.mxu0 0.0
    %3499 = vmatpush1.msra.mxu0 0.0
    %3500 = vmatprep.subr.mxu0 0.0
    %3501 = vmatpush1.msra.mxu0 0.0
    %3502 = vmatprep.subr.mxu0 0.0
    %3503 = vmatpush1.msra.mxu0 0.0
    %3504 = vmatprep.subr.mxu0 0.0
    %3505 = vmatpush1.msra.mxu0 0.0
    %3506 = vmatprep.mubr.f32.mxu0 0.0
    %3507 = vmatmul.mubr.f32.gmra.mrb[0].mxu0 %v3431
    %v3508 = vpop.f32.mrb[0].mxu0
    %v3509 = vadd.f32 0.0, %v3508
    %v3510 = vpop.f32.mrb[0].mxu0
    %3511 = vmatprep.mubr.f32.mxu0 0.0
    %3512 = vmatmul.mubr.f32.gmra.mrb[0].mxu0 %v3434
    %v3513 = vpop.f32.mrb[0].mxu0
    %v3514 = vadd.f32 0.0, %v3513
    %v3515 = vpop.f32.mrb[0].mxu0
    %3516 = vmatprep.mubr.f32.mxu0 0.0
    %3517 = vmatmul.mubr.f32.gmra.mrb[0].mxu0 %v3437
    %v3518 = vpop.f32.mrb[0].mxu0
    %v3519 = vadd.f32 0.0, %v3518
    %v3520 = vpop.f32.mrb[0].mxu0
    %3521 = vmatprep.mubr.f32.mxu0 0.0
    %3522 = vmatmul.mubr.f32.gmra.mrb[0].mxu0 %v3440
    %v3523 = vpop.f32.mrb[0].mxu0
    %v3524 = vadd.f32 0.0, %v3523
    %v3525 = vpop.f32.mrb[0].mxu0
    %3526 = vdwg.mxu0
    %v3527 = vadd.f32 %v3008, %v3509
    %v3528 = vadd.f32 %v3008, %v3514
    %v3529 = vadd.f32 %v3008, %v3519
    %v3530 = vadd.f32 %v3008, %v3524
    %3531 = vrot.lane.b32.xlu0 %v2863, 64
    %v3532 = vpop.permute.xlu0 %3531
    %3533 = vrot.lane.b32.xlu0 %v2869, 64
    %v3534 = vpop.permute.xlu0 %3533
    %3535 = vrot.lane.b32.xlu0 %v2865, 64
    %v3536 = vpop.permute.xlu0 %3535
    %3537 = vrot.lane.b32.xlu0 %v2871, 64
    %v3538 = vpop.permute.xlu0 %3537
    %v3539 = vsel %vm976, %v3532, 0
    %v3541 = vsel %vm976, %v3534, 0
    %v3543 = vsel %vm976, %v3536, 0
    %v3545 = vsel %vm976, %v3538, 0
    %3547 = vmatprep.subr.mxu0 0.0
    %3548 = vmatpush1.xpose.msra.mxu0 %v3543
    %3549 = vmatprep.subr.mxu0 0.0
    %3550 = vmatpush1.xpose.msra.mxu0 %v3545
    %3551 = vmatprep.subr.mxu0 0.0
    %3552 = vmatpush1.xpose.msra.mxu0 0.0
    %3553 = vmatprep.subr.mxu0 0.0
    %3554 = vmatpush1.xpose.msra.mxu0 0.0
    %3555 = vmatprep.subr.mxu0 0.0
    %3556 = vmatpush1.xpose.msra.mxu0 0.0
    %3557 = vmatprep.subr.mxu0 0.0
    %3558 = vmatpush1.xpose.msra.mxu0 0.0
    %3559 = vmatprep.subr.mxu0 0.0
    %3560 = vmatpush1.xpose.msra.mxu0 0.0
    %3561 = vmatprep.subr.mxu0 0.0
    %3562 = vmatpush1.xpose.msra.mxu0 0.0
    %3563 = vmatprep.subr.mxu0 0.0
    %3564 = vmatpush1.xpose.msra.mxu0 0.0
    %3565 = vmatprep.subr.mxu0 0.0
    %3566 = vmatpush1.xpose.msra.mxu0 0.0
    %3567 = vmatprep.subr.mxu0 0.0
    %3568 = vmatpush1.xpose.msra.mxu0 0.0
    %3569 = vmatprep.subr.mxu0 0.0
    %3570 = vmatpush1.xpose.msra.mxu0 0.0
    %3571 = vmatprep.subr.mxu0 0.0
    %3572 = vmatpush1.xpose.msra.mxu0 0.0
    %3573 = vmatprep.subr.mxu0 0.0
    %3574 = vmatpush1.xpose.msra.mxu0 0.0
    %3575 = vmatprep.subr.mxu0 0.0
    %3576 = vmatpush1.xpose.msra.mxu0 0.0
    %3577 = vmatprep.subr.mxu0 0.0
    %3578 = vmatpush1.xpose.msra.mxu0 0.0
    %3579 = vmatprep.subr.mxu0 0.0
    %3580 = vmatpush1.xpose.msra.mxu0 0.0
    %3581 = vmatprep.subr.mxu0 0.0
    %3582 = vmatpush1.xpose.msra.mxu0 0.0
    %3583 = vmatprep.subr.mxu0 0.0
    %3584 = vmatpush1.xpose.msra.mxu0 0.0
    %3585 = vmatprep.subr.mxu0 0.0
    %3586 = vmatpush1.xpose.msra.mxu0 0.0
    %3587 = vmatprep.subr.mxu0 0.0
    %3588 = vmatpush1.xpose.msra.mxu0 0.0
    %3589 = vmatprep.subr.mxu0 0.0
    %3590 = vmatpush1.xpose.msra.mxu0 0.0
    %3591 = vmatprep.subr.mxu0 0.0
    %3592 = vmatpush1.xpose.msra.mxu0 0.0
    %3593 = vmatprep.subr.mxu0 0.0
    %3594 = vmatpush1.xpose.msra.mxu0 0.0
    %3595 = vmatprep.subr.mxu0 0.0
    %3596 = vmatpush1.xpose.msra.mxu0 0.0
    %3597 = vmatprep.subr.mxu0 0.0
    %3598 = vmatpush1.xpose.msra.mxu0 0.0
    %3599 = vmatprep.subr.mxu0 0.0
    %3600 = vmatpush1.xpose.msra.mxu0 0.0
    %3601 = vmatprep.subr.mxu0 0.0
    %3602 = vmatpush1.xpose.msra.mxu0 0.0
    %3603 = vmatprep.subr.mxu0 0.0
    %3604 = vmatpush1.xpose.msra.mxu0 0.0
    %3605 = vmatprep.subr.mxu0 0.0
    %3606 = vmatpush1.xpose.msra.mxu0 0.0
    %3607 = vmatprep.subr.mxu0 0.0
    %3608 = vmatpush1.xpose.msra.mxu0 0.0
    %3609 = vmatprep.subr.mxu0 0.0
    %3610 = vmatpush1.xpose.msra.mxu0 0.0
    %3611 = vmatprep.mubr.f32.mxu0 0.0
    %3612 = vmatmul.mubr.f32.gmra.mrb[0].mxu0 %v3539
    %v3613 = vpop.f32.mrb[0].mxu0
    %v3614 = vadd.f32 0.0, %v3613
    %v3615 = vpop.f32.mrb[0].mxu0
    %3616 = vmatprep.mubr.f32.mxu0 0.0
    %3617 = vmatmul.mubr.f32.gmra.mrb[0].mxu0 %v3541
    %v3618 = vpop.f32.mrb[0].mxu0
    %v3619 = vadd.f32 0.0, %v3618
    %v3620 = vpop.f32.mrb[0].mxu0
    %3621 = vdwg.mxu0
    %3622 = vrot.lane.b32.xlu0 %v2875, 64
    %v3623 = vpop.permute.xlu0 %3622
    %3624 = vrot.lane.b32.xlu0 %v2881, 64
    %v3625 = vpop.permute.xlu0 %3624
    %3626 = vrot.lane.b32.xlu0 %v2877, 64
    %v3627 = vpop.permute.xlu0 %3626
    %3628 = vrot.lane.b32.xlu0 %v2883, 64
    %v3629 = vpop.permute.xlu0 %3628
    %v3630 = vsel %vm976, %v3623, 0
    %v3632 = vsel %vm976, %v3625, 0
    %v3634 = vsel %vm976, %v3627, 0
    %v3636 = vsel %vm976, %v3629, 0
    %3638 = vmatprep.subr.mxu0 0.0
    %3639 = vmatpush1.xpose.msra.mxu0 %v3634
    %3640 = vmatprep.subr.mxu0 0.0
    %3641 = vmatpush1.xpose.msra.mxu0 %v3636
    %3642 = vmatprep.subr.mxu0 0.0
    %3643 = vmatpush1.xpose.msra.mxu0 0.0
    %3644 = vmatprep.subr.mxu0 0.0
    %3645 = vmatpush1.xpose.msra.mxu0 0.0
    %3646 = vmatprep.subr.mxu0 0.0
    %3647 = vmatpush1.xpose.msra.mxu0 0.0
    %3648 = vmatprep.subr.mxu0 0.0
    %3649 = vmatpush1.xpose.msra.mxu0 0.0
    %3650 = vmatprep.subr.mxu0 0.0
    %3651 = vmatpush1.xpose.msra.mxu0 0.0
    %3652 = vmatprep.subr.mxu0 0.0
    %3653 = vmatpush1.xpose.msra.mxu0 0.0
    %3654 = vmatprep.subr.mxu0 0.0
    %3655 = vmatpush1.xpose.msra.mxu0 0.0
    %3656 = vmatprep.subr.mxu0 0.0
    %3657 = vmatpush1.xpose.msra.mxu0 0.0
    %3658 = vmatprep.subr.mxu0 0.0
    %3659 = vmatpush1.xpose.msra.mxu0 0.0
    %3660 = vmatprep.subr.mxu0 0.0
    %3661 = vmatpush1.xpose.msra.mxu0 0.0
    %3662 = vmatprep.subr.mxu0 0.0
    %3663 = vmatpush1.xpose.msra.mxu0 0.0
    %3664 = vmatprep.subr.mxu0 0.0
    %3665 = vmatpush1.xpose.msra.mxu0 0.0
    %3666 = vmatprep.subr.mxu0 0.0
    %3667 = vmatpush1.xpose.msra.mxu0 0.0
    %3668 = vmatprep.subr.mxu0 0.0
    %3669 = vmatpush1.xpose.msra.mxu0 0.0
    %3670 = vmatprep.subr.mxu0 0.0
    %3671 = vmatpush1.xpose.msra.mxu0 0.0
    %3672 = vmatprep.subr.mxu0 0.0
    %3673 = vmatpush1.xpose.msra.mxu0 0.0
    %3674 = vmatprep.subr.mxu0 0.0
    %3675 = vmatpush1.xpose.msra.mxu0 0.0
    %3676 = vmatprep.subr.mxu0 0.0
    %3677 = vmatpush1.xpose.msra.mxu0 0.0
    %3678 = vmatprep.subr.mxu0 0.0
    %3679 = vmatpush1.xpose.msra.mxu0 0.0
    %3680 = vmatprep.subr.mxu0 0.0
    %3681 = vmatpush1.xpose.msra.mxu0 0.0
    %3682 = vmatprep.subr.mxu0 0.0
    %3683 = vmatpush1.xpose.msra.mxu0 0.0
    %3684 = vmatprep.subr.mxu0 0.0
    %3685 = vmatpush1.xpose.msra.mxu0 0.0
    %3686 = vmatprep.subr.mxu0 0.0
    %3687 = vmatpush1.xpose.msra.mxu0 0.0
    %3688 = vmatprep.subr.mxu0 0.0
    %3689 = vmatpush1.xpose.msra.mxu0 0.0
    %3690 = vmatprep.subr.mxu0 0.0
    %3691 = vmatpush1.xpose.msra.mxu0 0.0
    %3692 = vmatprep.subr.mxu0 0.0
    %3693 = vmatpush1.xpose.msra.mxu0 0.0
    %3694 = vmatprep.subr.mxu0 0.0
    %3695 = vmatpush1.xpose.msra.mxu0 0.0
    %3696 = vmatprep.subr.mxu0 0.0
    %3697 = vmatpush1.xpose.msra.mxu0 0.0
    %3698 = vmatprep.subr.mxu0 0.0
    %3699 = vmatpush1.xpose.msra.mxu0 0.0
    %3700 = vmatprep.subr.mxu0 0.0
    %3701 = vmatpush1.xpose.msra.mxu0 0.0
    %3702 = vmatprep.mubr.f32.mxu0 0.0
    %3703 = vmatmul.mubr.f32.gmra.mrb[0].mxu0 %v3630
    %v3704 = vpop.f32.mrb[0].mxu0
    %v3705 = vadd.f32 0.0, %v3704
    %v3706 = vpop.f32.mrb[0].mxu0
    %3707 = vmatprep.mubr.f32.mxu0 0.0
    %3708 = vmatmul.mubr.f32.gmra.mrb[0].mxu0 %v3632
    %v3709 = vpop.f32.mrb[0].mxu0
    %v3710 = vadd.f32 0.0, %v3709
    %v3711 = vpop.f32.mrb[0].mxu0
    %3712 = vdwg.mxu0
    %v3713 = vmul.f32 %v3614, 0.125
    %v3714 = vmul.f32 %v3619, 0.125
    %v3715 = vmul.f32 %v3705, 0.125
    %v3716 = vmul.f32 %v3710, 0.125
    %v3717 = vsel %vm3197, %v3713, -1e+30
    %v3718 = vsel %vm3197, %v3714, -1e+30
    %v3719 = vsel %vm3198, %v3715, -1e+30
    %v3720 = vsel %vm3198, %v3716, -1e+30
    %v3721 = vsel %vm3205, %v3717, -1e+30
    %v3722 = vsel %vm3206, %v3718, -1e+30
    %v3723 = vsel %vm3205, %v3719, -1e+30
    %v3724 = vsel %vm3206, %v3720, -1e+30
    %v3725 = vsel %vm3211, %v3721, -inf
    %3726 = vmax.xlane.f32.xlu0 %v3725
    %v3727 = vpop.xlane.xlu0 %3726
    %v3728 = vsel %vm3211, %v3722, -inf
    %3729 = vmax.xlane.f32.xlu0 %v3728
    %v3730 = vpop.xlane.xlu0 %3729
    %v3731 = vsel %vm3211, %v3723, -inf
    %3732 = vmax.xlane.f32.xlu0 %v3731
    %v3733 = vpop.xlane.xlu0 %3732
    %v3734 = vsel %vm3211, %v3724, -inf
    %3735 = vmax.xlane.f32.xlu0 %v3734
    %v3736 = vpop.xlane.xlu0 %3735
    %v3737 = vsub.f32 %v3721, %v3727
    %v3738 = vsub.f32 %v3722, %v3730
    %v3739 = vsub.f32 %v3723, %v3733
    %v3740 = vsub.f32 %v3724, %v3736
    %v3741 = vmul.f32 %v3737, 1.442695
    %v3742 = vpow.pop %v3741
    %v3743 = vmul.f32 %v3738, 1.442695
    %v3744 = vpow.pop %v3743
    %v3745 = vmul.f32 %v3739, 1.442695
    %v3746 = vpow.pop %v3745
    %v3747 = vmul.f32 %v3740, 1.442695
    %v3748 = vpow.pop %v3747
    %v3749 = vsel %vm3197, %v3742, 0.0
    %v3750 = vsel %vm3197, %v3744, 0.0
    %v3751 = vsel %vm3198, %v3746, 0.0
    %v3752 = vsel %vm3198, %v3748, 0.0
    %v3753 = vsel %vm3205, %v3749, 0.0
    %v3754 = vsel %vm3206, %v3750, 0.0
    %v3755 = vsel %vm3205, %v3751, 0.0
    %v3756 = vsel %vm3206, %v3752, 0.0
    %v3757 = vsel %vm3211, %v3753, 0.0
    %3758 = vadd.xlane.f32.xlu0 %v3757
    %v3759 = vpop.xlane.xlu0 %3758
    %v3760 = vsel %vm3211, %v3754, 0.0
    %3761 = vadd.xlane.f32.xlu0 %v3760
    %v3762 = vpop.xlane.xlu0 %3761
    %v3763 = vsel %vm3211, %v3755, 0.0
    %3764 = vadd.xlane.f32.xlu0 %v3763
    %v3765 = vpop.xlane.xlu0 %3764
    %v3766 = vsel %vm3211, %v3756, 0.0
    %3767 = vadd.xlane.f32.xlu0 %v3766
    %v3768 = vpop.xlane.xlu0 %3767
    %v3769 = vmax.f32 %v3759, 1e-20
    %v3770 = vmax.f32 %v3762, 1e-20
    %v3771 = vmax.f32 %v3765, 1e-20
    %v3772 = vmax.f32 %v3768, 1e-20
    %v3773 = vrcp.pop %v3769
    %v3774 = vrcp.pop %v3770
    %v3775 = vrcp.pop %v3771
    %v3776 = vrcp.pop %v3772
    %v3777 = vmul.f32 %v3753, %v3773
    %v3778 = vmul.f32 %v3754, %v3774
    %v3779 = vmul.f32 %v3755, %v3775
    %v3780 = vmul.f32 %v3756, %v3776
    %3783 = vrot.lane.b32.xlu0 %v2952, 64
    %v3784 = vpop.permute.xlu0 %3783
    %3785 = vrot.lane.b32.xlu0 %v2957, 64
    %v3786 = vpop.permute.xlu0 %3785
    %v3790 = vsel %vm3211, %v3777, 0
    %v3793 = vsel %vm3211, %v3778, 0
    %3795 = vmatprep.subr.mxu0 0.0
    %3796 = vmatpush1.msra.mxu0 %v3784
    %3797 = vmatprep.subr.mxu0 0.0
    %3798 = vmatpush1.msra.mxu0 %v3786
    %3799 = vmatprep.subr.mxu0 0.0
    %3800 = vmatpush1.msra.mxu0 0.0
    %3801 = vmatprep.subr.mxu0 0.0
    %3802 = vmatpush1.msra.mxu0 0.0
    %3803 = vmatprep.subr.mxu0 0.0
    %3804 = vmatpush1.msra.mxu0 0.0
    %3805 = vmatprep.subr.mxu0 0.0
    %3806 = vmatpush1.msra.mxu0 0.0
    %3807 = vmatprep.subr.mxu0 0.0
    %3808 = vmatpush1.msra.mxu0 0.0
    %3809 = vmatprep.subr.mxu0 0.0
    %3810 = vmatpush1.msra.mxu0 0.0
    %3811 = vmatprep.subr.mxu0 0.0
    %3812 = vmatpush1.msra.mxu0 0.0
    %3813 = vmatprep.subr.mxu0 0.0
    %3814 = vmatpush1.msra.mxu0 0.0
    %3815 = vmatprep.subr.mxu0 0.0
    %3816 = vmatpush1.msra.mxu0 0.0
    %3817 = vmatprep.subr.mxu0 0.0
    %3818 = vmatpush1.msra.mxu0 0.0
    %3819 = vmatprep.subr.mxu0 0.0
    %3820 = vmatpush1.msra.mxu0 0.0
    %3821 = vmatprep.subr.mxu0 0.0
    %3822 = vmatpush1.msra.mxu0 0.0
    %3823 = vmatprep.subr.mxu0 0.0
    %3824 = vmatpush1.msra.mxu0 0.0
    %3825 = vmatprep.subr.mxu0 0.0
    %3826 = vmatpush1.msra.mxu0 0.0
    %3827 = vmatprep.subr.mxu0 0.0
    %3828 = vmatpush1.msra.mxu0 0.0
    %3829 = vmatprep.subr.mxu0 0.0
    %3830 = vmatpush1.msra.mxu0 0.0
    %3831 = vmatprep.subr.mxu0 0.0
    %3832 = vmatpush1.msra.mxu0 0.0
    %3833 = vmatprep.subr.mxu0 0.0
    %3834 = vmatpush1.msra.mxu0 0.0
    %3835 = vmatprep.subr.mxu0 0.0
    %3836 = vmatpush1.msra.mxu0 0.0
    %3837 = vmatprep.subr.mxu0 0.0
    %3838 = vmatpush1.msra.mxu0 0.0
    %3839 = vmatprep.subr.mxu0 0.0
    %3840 = vmatpush1.msra.mxu0 0.0
    %3841 = vmatprep.subr.mxu0 0.0
    %3842 = vmatpush1.msra.mxu0 0.0
    %3843 = vmatprep.subr.mxu0 0.0
    %3844 = vmatpush1.msra.mxu0 0.0
    %3845 = vmatprep.subr.mxu0 0.0
    %3846 = vmatpush1.msra.mxu0 0.0
    %3847 = vmatprep.subr.mxu0 0.0
    %3848 = vmatpush1.msra.mxu0 0.0
    %3849 = vmatprep.subr.mxu0 0.0
    %3850 = vmatpush1.msra.mxu0 0.0
    %3851 = vmatprep.subr.mxu0 0.0
    %3852 = vmatpush1.msra.mxu0 0.0
    %3853 = vmatprep.subr.mxu0 0.0
    %3854 = vmatpush1.msra.mxu0 0.0
    %3855 = vmatprep.subr.mxu0 0.0
    %3856 = vmatpush1.msra.mxu0 0.0
    %3857 = vmatprep.subr.mxu0 0.0
    %3858 = vmatpush1.msra.mxu0 0.0
    %3859 = vmatprep.mubr.f32.mxu0 0.0
    %3860 = vmatmul.mubr.f32.gmra.mrb[0].mxu0 %v3790
    %v3861 = vpop.f32.mrb[0].mxu0
    %v3862 = vadd.f32 0.0, %v3861
    %v3863 = vpop.f32.mrb[0].mxu0
    %3864 = vmatprep.mubr.f32.mxu0 0.0
    %3865 = vmatmul.mubr.f32.gmra.mrb[0].mxu0 %v3793
    %v3866 = vpop.f32.mrb[0].mxu0
    %v3867 = vadd.f32 0.0, %v3866
    %v3868 = vpop.f32.mrb[0].mxu0
    %3869 = vdwg.mxu0
    %3872 = vrot.lane.b32.xlu0 %v2962, 64
    %v3873 = vpop.permute.xlu0 %3872
    %3874 = vrot.lane.b32.xlu0 %v2967, 64
    %v3875 = vpop.permute.xlu0 %3874
    %v3879 = vsel %vm3211, %v3779, 0
    %v3882 = vsel %vm3211, %v3780, 0
    %3884 = vmatprep.subr.mxu0 0.0
    %3885 = vmatpush1.msra.mxu0 %v3873
    %3886 = vmatprep.subr.mxu0 0.0
    %3887 = vmatpush1.msra.mxu0 %v3875
    %3888 = vmatprep.subr.mxu0 0.0
    %3889 = vmatpush1.msra.mxu0 0.0
    %3890 = vmatprep.subr.mxu0 0.0
    %3891 = vmatpush1.msra.mxu0 0.0
    %3892 = vmatprep.subr.mxu0 0.0
    %3893 = vmatpush1.msra.mxu0 0.0
    %3894 = vmatprep.subr.mxu0 0.0
    %3895 = vmatpush1.msra.mxu0 0.0
    %3896 = vmatprep.subr.mxu0 0.0
    %3897 = vmatpush1.msra.mxu0 0.0
    %3898 = vmatprep.subr.mxu0 0.0
    %3899 = vmatpush1.msra.mxu0 0.0
    %3900 = vmatprep.subr.mxu0 0.0
    %3901 = vmatpush1.msra.mxu0 0.0
    %3902 = vmatprep.subr.mxu0 0.0
    %3903 = vmatpush1.msra.mxu0 0.0
    %3904 = vmatprep.subr.mxu0 0.0
    %3905 = vmatpush1.msra.mxu0 0.0
    %3906 = vmatprep.subr.mxu0 0.0
    %3907 = vmatpush1.msra.mxu0 0.0
    %3908 = vmatprep.subr.mxu0 0.0
    %3909 = vmatpush1.msra.mxu0 0.0
    %3910 = vmatprep.subr.mxu0 0.0
    %3911 = vmatpush1.msra.mxu0 0.0
    %3912 = vmatprep.subr.mxu0 0.0
    %3913 = vmatpush1.msra.mxu0 0.0
    %3914 = vmatprep.subr.mxu0 0.0
    %3915 = vmatpush1.msra.mxu0 0.0
    %3916 = vmatprep.subr.mxu0 0.0
    %3917 = vmatpush1.msra.mxu0 0.0
    %3918 = vmatprep.subr.mxu0 0.0
    %3919 = vmatpush1.msra.mxu0 0.0
    %3920 = vmatprep.subr.mxu0 0.0
    %3921 = vmatpush1.msra.mxu0 0.0
    %3922 = vmatprep.subr.mxu0 0.0
    %3923 = vmatpush1.msra.mxu0 0.0
    %3924 = vmatprep.subr.mxu0 0.0
    %3925 = vmatpush1.msra.mxu0 0.0
    %3926 = vmatprep.subr.mxu0 0.0
    %3927 = vmatpush1.msra.mxu0 0.0
    %3928 = vmatprep.subr.mxu0 0.0
    %3929 = vmatpush1.msra.mxu0 0.0
    %3930 = vmatprep.subr.mxu0 0.0
    %3931 = vmatpush1.msra.mxu0 0.0
    %3932 = vmatprep.subr.mxu0 0.0
    %3933 = vmatpush1.msra.mxu0 0.0
    %3934 = vmatprep.subr.mxu0 0.0
    %3935 = vmatpush1.msra.mxu0 0.0
    %3936 = vmatprep.subr.mxu0 0.0
    %3937 = vmatpush1.msra.mxu0 0.0
    %3938 = vmatprep.subr.mxu0 0.0
    %3939 = vmatpush1.msra.mxu0 0.0
    %3940 = vmatprep.subr.mxu0 0.0
    %3941 = vmatpush1.msra.mxu0 0.0
    %3942 = vmatprep.subr.mxu0 0.0
    %3943 = vmatpush1.msra.mxu0 0.0
    %3944 = vmatprep.subr.mxu0 0.0
    %3945 = vmatpush1.msra.mxu0 0.0
    %3946 = vmatprep.subr.mxu0 0.0
    %3947 = vmatpush1.msra.mxu0 0.0
    %3948 = vmatprep.mubr.f32.mxu0 0.0
    %3949 = vmatmul.mubr.f32.gmra.mrb[0].mxu0 %v3879
    %v3950 = vpop.f32.mrb[0].mxu0
    %v3951 = vadd.f32 0.0, %v3950
    %v3952 = vpop.f32.mrb[0].mxu0
    %3953 = vmatprep.mubr.f32.mxu0 0.0
    %3954 = vmatmul.mubr.f32.gmra.mrb[0].mxu0 %v3882
    %v3955 = vpop.f32.mrb[0].mxu0
    %v3956 = vadd.f32 0.0, %v3955
    %v3957 = vpop.f32.mrb[0].mxu0
    %3958 = vdwg.mxu0
    %v3960 = vsel %vm976, %v3862, 0
    %v3963 = vsel %vm976, %v3867, 0
    %v3966 = vsel %vm976, %v3951, 0
    %v3969 = vsel %vm976, %v3956, 0
    %3971 = vmatprep.subr.mxu0 0.0
    %3972 = vmatpush1.msra.mxu0 %v2575
    %3973 = vmatprep.subr.mxu0 0.0
    %3974 = vmatpush1.msra.mxu0 %v2576
    %3975 = vmatprep.subr.mxu0 0.0
    %3976 = vmatpush1.msra.mxu0 %v2577
    %3977 = vmatprep.subr.mxu0 0.0
    %3978 = vmatpush1.msra.mxu0 %v2578
    %3979 = vmatprep.subr.mxu0 0.0
    %3980 = vmatpush1.msra.mxu0 %v2579
    %3981 = vmatprep.subr.mxu0 0.0
    %3982 = vmatpush1.msra.mxu0 %v2580
    %3983 = vmatprep.subr.mxu0 0.0
    %3984 = vmatpush1.msra.mxu0 %v2581
    %3985 = vmatprep.subr.mxu0 0.0
    %3986 = vmatpush1.msra.mxu0 %v2582
    %3987 = vmatprep.subr.mxu0 0.0
    %3988 = vmatpush1.msra.mxu0 0.0
    %3989 = vmatprep.subr.mxu0 0.0
    %3990 = vmatpush1.msra.mxu0 0.0
    %3991 = vmatprep.subr.mxu0 0.0
    %3992 = vmatpush1.msra.mxu0 0.0
    %3993 = vmatprep.subr.mxu0 0.0
    %3994 = vmatpush1.msra.mxu0 0.0
    %3995 = vmatprep.subr.mxu0 0.0
    %3996 = vmatpush1.msra.mxu0 0.0
    %3997 = vmatprep.subr.mxu0 0.0
    %3998 = vmatpush1.msra.mxu0 0.0
    %3999 = vmatprep.subr.mxu0 0.0
    %4000 = vmatpush1.msra.mxu0 0.0
    %4001 = vmatprep.subr.mxu0 0.0
    %4002 = vmatpush1.msra.mxu0 0.0
    %4003 = vmatprep.subr.mxu0 0.0
    %4004 = vmatpush1.msra.mxu0 0.0
    %4005 = vmatprep.subr.mxu0 0.0
    %4006 = vmatpush1.msra.mxu0 0.0
    %4007 = vmatprep.subr.mxu0 0.0
    %4008 = vmatpush1.msra.mxu0 0.0
    %4009 = vmatprep.subr.mxu0 0.0
    %4010 = vmatpush1.msra.mxu0 0.0
    %4011 = vmatprep.subr.mxu0 0.0
    %4012 = vmatpush1.msra.mxu0 0.0
    %4013 = vmatprep.subr.mxu0 0.0
    %4014 = vmatpush1.msra.mxu0 0.0
    %4015 = vmatprep.subr.mxu0 0.0
    %4016 = vmatpush1.msra.mxu0 0.0
    %4017 = vmatprep.subr.mxu0 0.0
    %4018 = vmatpush1.msra.mxu0 0.0
    %4019 = vmatprep.subr.mxu0 0.0
    %4020 = vmatpush1.msra.mxu0 0.0
    %4021 = vmatprep.subr.mxu0 0.0
    %4022 = vmatpush1.msra.mxu0 0.0
    %4023 = vmatprep.subr.mxu0 0.0
    %4024 = vmatpush1.msra.mxu0 0.0
    %4025 = vmatprep.subr.mxu0 0.0
    %4026 = vmatpush1.msra.mxu0 0.0
    %4027 = vmatprep.subr.mxu0 0.0
    %4028 = vmatpush1.msra.mxu0 0.0
    %4029 = vmatprep.subr.mxu0 0.0
    %4030 = vmatpush1.msra.mxu0 0.0
    %4031 = vmatprep.subr.mxu0 0.0
    %4032 = vmatpush1.msra.mxu0 0.0
    %4033 = vmatprep.subr.mxu0 0.0
    %4034 = vmatpush1.msra.mxu0 0.0
    %4035 = vmatprep.mubr.f32.mxu0 0.0
    %4036 = vmatmul.mubr.f32.gmra.mrb[0].mxu0 %v3960
    %v4037 = vpop.f32.mrb[0].mxu0
    %v4038 = vadd.f32 0.0, %v4037
    %v4039 = vpop.f32.mrb[0].mxu0
    %4040 = vmatprep.mubr.f32.mxu0 0.0
    %4041 = vmatmul.mubr.f32.gmra.mrb[0].mxu0 %v3963
    %v4042 = vpop.f32.mrb[0].mxu0
    %v4043 = vadd.f32 0.0, %v4042
    %v4044 = vpop.f32.mrb[0].mxu0
    %4045 = vmatprep.mubr.f32.mxu0 0.0
    %4046 = vmatmul.mubr.f32.gmra.mrb[0].mxu0 %v3966
    %v4047 = vpop.f32.mrb[0].mxu0
    %v4048 = vadd.f32 0.0, %v4047
    %v4049 = vpop.f32.mrb[0].mxu0
    %4050 = vmatprep.mubr.f32.mxu0 0.0
    %4051 = vmatmul.mubr.f32.gmra.mrb[0].mxu0 %v3969
    %v4052 = vpop.f32.mrb[0].mxu0
    %v4053 = vadd.f32 0.0, %v4052
    %v4054 = vpop.f32.mrb[0].mxu0
    %4055 = vdwg.mxu0
    %v4056 = vadd.f32 %v3527, %v4038
    %v4057 = vadd.f32 %v3528, %v4043
    %v4058 = vadd.f32 %v3529, %v4048
    %v4059 = vadd.f32 %v3530, %v4053
    %v4060 = vadd.f32 %v2511, %v4056
    %v4061 = vadd.f32 %v2512, %v4057
    %v4062 = vadd.f32 %v2513, %v4058
    %v4063 = vadd.f32 %v2514, %v4059
    %4064 = vadd.xlane.f32.xlu0 %v4060
    %v4065 = vpop.xlane.xlu0 %4064
    %4066 = vadd.xlane.f32.xlu0 %v4061
    %v4067 = vpop.xlane.xlu0 %4066
    %4068 = vadd.xlane.f32.xlu0 %v4062
    %v4069 = vpop.xlane.xlu0 %4068
    %4070 = vadd.xlane.f32.xlu0 %v4063
    %v4071 = vpop.xlane.xlu0 %4070
    %v4072 = vmul.f32 %v4065, %v766
    %v4073 = vmul.f32 %v4067, %v766
    %v4074 = vmul.f32 %v4069, %v766
    %v4075 = vmul.f32 %v4071, %v766
    %v4076 = vsub.f32 %v4060, %v4072
    %v4077 = vsub.f32 %v4061, %v4073
    %v4078 = vsub.f32 %v4062, %v4074
    %v4079 = vsub.f32 %v4063, %v4075
    %v4080 = vmul.f32 %v4076, %v4076
    %v4081 = vmul.f32 %v4077, %v4077
    %v4082 = vmul.f32 %v4078, %v4078
    %v4083 = vmul.f32 %v4079, %v4079
    %4084 = vadd.xlane.f32.xlu0 %v4080
    %v4085 = vpop.xlane.xlu0 %4084
    %4086 = vadd.xlane.f32.xlu0 %v4081
    %v4087 = vpop.xlane.xlu0 %4086
    %4088 = vadd.xlane.f32.xlu0 %v4082
    %v4089 = vpop.xlane.xlu0 %4088
    %4090 = vadd.xlane.f32.xlu0 %v4083
    %v4091 = vpop.xlane.xlu0 %4090
    %v4092 = vmul.f32 %v4085, %v766
    %v4093 = vmul.f32 %v4087, %v766
    %v4094 = vmul.f32 %v4089, %v766
    %v4095 = vmul.f32 %v4091, %v766
    %v4096 = vadd.f32 %v4092, 1e-05
    %v4097 = vadd.f32 %v4093, 1e-05
    %v4098 = vadd.f32 %v4094, 1e-05
    %v4099 = vadd.f32 %v4095, 1e-05
    %v4100 = vrsqrt.pop %v4096
    %v4101 = vrsqrt.pop %v4097
    %v4102 = vrsqrt.pop %v4098
    %v4103 = vrsqrt.pop %v4099
    %v4104 = vmul.f32 %v4076, %v4100
    %v4105 = vmul.f32 %v4077, %v4101
    %v4106 = vmul.f32 %v4078, %v4102
    %v4107 = vmul.f32 %v4079, %v4103
    %v4109 = vlaneseq
    %v4110 = vshrl.u32 %v4109, 7
    %v4111 = vsub.s32 0, %v4110
    %v4112 = vrot.slane %v2584, %v4111
    %v4114 = vmul.f32 %v4104, %v4112
    %v4115 = vmul.f32 %v4105, %v4112
    %v4116 = vmul.f32 %v4106, %v4112
    %v4117 = vmul.f32 %v4107, %v4112
    %v4119 = vlaneseq
    %v4120 = vshrl.u32 %v4119, 7
    %v4121 = vsub.s32 0, %v4120
    %v4122 = vrot.slane %v2585, %v4121
    %v4124 = vadd.f32 %v4114, %v4122
    %v4125 = vadd.f32 %v4115, %v4122
    %v4126 = vadd.f32 %v4116, %v4122
    %v4127 = vadd.f32 %v4117, %v4122
    %v4129 = vlaneseq
    %v4130 = vshrl.u32 %v4129, 7
    %v4131 = vsub.s32 0, %v4130
    %v4132 = vrot.slane %v2650, %v4131
    %v4133 = vlaneseq
    %v4134 = vshrl.u32 %v4133, 7
    %v4135 = vsub.s32 1, %v4134
    %v4136 = vrot.slane %v2650, %v4135
    %v4137 = vlaneseq
    %v4138 = vshrl.u32 %v4137, 7
    %v4139 = vsub.s32 2, %v4138
    %v4140 = vrot.slane %v2650, %v4139
    %v4141 = vlaneseq
    %v4142 = vshrl.u32 %v4141, 7
    %v4143 = vsub.s32 3, %v4142
    %v4144 = vrot.slane %v2650, %v4143
    %4149 = vmatprep.subr.mxu0 %v2587
    %4150 = vmatpush1.msra.mxu0 %v2586
    %4151 = vmatprep.subr.mxu0 %v2591
    %4152 = vmatpush1.msra.mxu0 %v2590
    %4153 = vmatprep.subr.mxu0 %v2595
    %4154 = vmatpush1.msra.mxu0 %v2594
    %4155 = vmatprep.subr.mxu0 %v2599
    %4156 = vmatpush1.msra.mxu0 %v2598
    %4157 = vmatprep.subr.mxu0 %v2603
    %4158 = vmatpush1.msra.mxu0 %v2602
    %4159 = vmatprep.subr.mxu0 %v2607
    %4160 = vmatpush1.msra.mxu0 %v2606
    %4161 = vmatprep.subr.mxu0 %v2611
    %4162 = vmatpush1.msra.mxu0 %v2610
    %4163 = vmatprep.subr.mxu0 %v2615
    %4164 = vmatpush1.msra.mxu0 %v2614
    %4165 = vmatprep.subr.mxu0 %v2619
    %4166 = vmatpush1.msra.mxu0 %v2618
    %4167 = vmatprep.subr.mxu0 %v2623
    %4168 = vmatpush1.msra.mxu0 %v2622
    %4169 = vmatprep.subr.mxu0 %v2627
    %4170 = vmatpush1.msra.mxu0 %v2626
    %4171 = vmatprep.subr.mxu0 %v2631
    %4172 = vmatpush1.msra.mxu0 %v2630
    %4173 = vmatprep.subr.mxu0 %v2635
    %4174 = vmatpush1.msra.mxu0 %v2634
    %4175 = vmatprep.subr.mxu0 %v2639
    %4176 = vmatpush1.msra.mxu0 %v2638
    %4177 = vmatprep.subr.mxu0 %v2643
    %4178 = vmatpush1.msra.mxu0 %v2642
    %4179 = vmatprep.subr.mxu0 %v2647
    %4180 = vmatpush1.msra.mxu0 %v2646
    %4181 = vmatprep.subr.mxu0 0.0
    %4182 = vmatpush1.msra.mxu0 0.0
    %4183 = vmatprep.subr.mxu0 0.0
    %4184 = vmatpush1.msra.mxu0 0.0
    %4185 = vmatprep.subr.mxu0 0.0
    %4186 = vmatpush1.msra.mxu0 0.0
    %4187 = vmatprep.subr.mxu0 0.0
    %4188 = vmatpush1.msra.mxu0 0.0
    %4189 = vmatprep.subr.mxu0 0.0
    %4190 = vmatpush1.msra.mxu0 0.0
    %4191 = vmatprep.subr.mxu0 0.0
    %4192 = vmatpush1.msra.mxu0 0.0
    %4193 = vmatprep.subr.mxu0 0.0
    %4194 = vmatpush1.msra.mxu0 0.0
    %4195 = vmatprep.subr.mxu0 0.0
    %4196 = vmatpush1.msra.mxu0 0.0
    %4197 = vmatprep.subr.mxu0 0.0
    %4198 = vmatpush1.msra.mxu0 0.0
    %4199 = vmatprep.subr.mxu0 0.0
    %4200 = vmatpush1.msra.mxu0 0.0
    %4201 = vmatprep.subr.mxu0 0.0
    %4202 = vmatpush1.msra.mxu0 0.0
    %4203 = vmatprep.subr.mxu0 0.0
    %4204 = vmatpush1.msra.mxu0 0.0
    %4205 = vmatprep.subr.mxu0 0.0
    %4206 = vmatpush1.msra.mxu0 0.0
    %4207 = vmatprep.subr.mxu0 0.0
    %4208 = vmatpush1.msra.mxu0 0.0
    %4209 = vmatprep.subr.mxu0 0.0
    %4210 = vmatpush1.msra.mxu0 0.0
    %4211 = vmatprep.subr.mxu0 0.0
    %4212 = vmatpush1.msra.mxu0 0.0
    %4213 = vmatprep.mubr.f32.mxu0 0.0
    %4214 = vmatmul.mubr.f32.gmra.mrb[0].mxu0 %v4124
    %v4215 = vpop.f32.mrb[0].mxu0
    %v4216 = vadd.f32 %v4132, %v4215
    %v4217 = vpop.f32.mrb[0].mxu0
    %v4218 = vadd.f32 %v4136, %v4217
    %4219 = vmatprep.mubr.f32.mxu0 0.0
    %4220 = vmatmul.mubr.f32.gmra.mrb[0].mxu0 %v4125
    %v4221 = vpop.f32.mrb[0].mxu0
    %v4222 = vadd.f32 %v4132, %v4221
    %v4223 = vpop.f32.mrb[0].mxu0
    %v4224 = vadd.f32 %v4136, %v4223
    %4225 = vmatprep.mubr.f32.mxu0 0.0
    %4226 = vmatmul.mubr.f32.gmra.mrb[0].mxu0 %v4126
    %v4227 = vpop.f32.mrb[0].mxu0
    %v4228 = vadd.f32 %v4132, %v4227
    %v4229 = vpop.f32.mrb[0].mxu0
    %v4230 = vadd.f32 %v4136, %v4229
    %4231 = vmatprep.mubr.f32.mxu0 0.0
    %4232 = vmatmul.mubr.f32.gmra.mrb[0].mxu0 %v4127
    %v4233 = vpop.f32.mrb[0].mxu0
    %v4234 = vadd.f32 %v4132, %v4233
    %v4235 = vpop.f32.mrb[0].mxu0
    %v4236 = vadd.f32 %v4136, %v4235
    %4237 = vdwg.mxu0
    %4238 = vmatprep.subr.mxu0 %v2589
    %4239 = vmatpush1.msra.mxu0 %v2588
    %4240 = vmatprep.subr.mxu0 %v2593
    %4241 = vmatpush1.msra.mxu0 %v2592
    %4242 = vmatprep.subr.mxu0 %v2597
    %4243 = vmatpush1.msra.mxu0 %v2596
    %4244 = vmatprep.subr.mxu0 %v2601
    %4245 = vmatpush1.msra.mxu0 %v2600
    %4246 = vmatprep.subr.mxu0 %v2605
    %4247 = vmatpush1.msra.mxu0 %v2604
    %4248 = vmatprep.subr.mxu0 %v2609
    %4249 = vmatpush1.msra.mxu0 %v2608
    %4250 = vmatprep.subr.mxu0 %v2613
    %4251 = vmatpush1.msra.mxu0 %v2612
    %4252 = vmatprep.subr.mxu0 %v2617
    %4253 = vmatpush1.msra.mxu0 %v2616
    %4254 = vmatprep.subr.mxu0 %v2621
    %4255 = vmatpush1.msra.mxu0 %v2620
    %4256 = vmatprep.subr.mxu0 %v2625
    %4257 = vmatpush1.msra.mxu0 %v2624
    %4258 = vmatprep.subr.mxu0 %v2629
    %4259 = vmatpush1.msra.mxu0 %v2628
    %4260 = vmatprep.subr.mxu0 %v2633
    %4261 = vmatpush1.msra.mxu0 %v2632
    %4262 = vmatprep.subr.mxu0 %v2637
    %4263 = vmatpush1.msra.mxu0 %v2636
    %4264 = vmatprep.subr.mxu0 %v2641
    %4265 = vmatpush1.msra.mxu0 %v2640
    %4266 = vmatprep.subr.mxu0 %v2645
    %4267 = vmatpush1.msra.mxu0 %v2644
    %4268 = vmatprep.subr.mxu0 %v2649
    %4269 = vmatpush1.msra.mxu0 %v2648
    %4270 = vmatprep.subr.mxu0 0.0
    %4271 = vmatpush1.msra.mxu0 0.0
    %4272 = vmatprep.subr.mxu0 0.0
    %4273 = vmatpush1.msra.mxu0 0.0
    %4274 = vmatprep.subr.mxu0 0.0
    %4275 = vmatpush1.msra.mxu0 0.0
    %4276 = vmatprep.subr.mxu0 0.0
    %4277 = vmatpush1.msra.mxu0 0.0
    %4278 = vmatprep.subr.mxu0 0.0
    %4279 = vmatpush1.msra.mxu0 0.0
    %4280 = vmatprep.subr.mxu0 0.0
    %4281 = vmatpush1.msra.mxu0 0.0
    %4282 = vmatprep.subr.mxu0 0.0
    %4283 = vmatpush1.msra.mxu0 0.0
    %4284 = vmatprep.subr.mxu0 0.0
    %4285 = vmatpush1.msra.mxu0 0.0
    %4286 = vmatprep.subr.mxu0 0.0
    %4287 = vmatpush1.msra.mxu0 0.0
    %4288 = vmatprep.subr.mxu0 0.0
    %4289 = vmatpush1.msra.mxu0 0.0
    %4290 = vmatprep.subr.mxu0 0.0
    %4291 = vmatpush1.msra.mxu0 0.0
    %4292 = vmatprep.subr.mxu0 0.0
    %4293 = vmatpush1.msra.mxu0 0.0
    %4294 = vmatprep.subr.mxu0 0.0
    %4295 = vmatpush1.msra.mxu0 0.0
    %4296 = vmatprep.subr.mxu0 0.0
    %4297 = vmatpush1.msra.mxu0 0.0
    %4298 = vmatprep.subr.mxu0 0.0
    %4299 = vmatpush1.msra.mxu0 0.0
    %4300 = vmatprep.subr.mxu0 0.0
    %4301 = vmatpush1.msra.mxu0 0.0
    %4302 = vmatprep.mubr.f32.mxu0 0.0
    %4303 = vmatmul.mubr.f32.gmra.mrb[0].mxu0 %v4124
    %v4304 = vpop.f32.mrb[0].mxu0
    %v4305 = vadd.f32 %v4140, %v4304
    %v4306 = vpop.f32.mrb[0].mxu0
    %v4307 = vadd.f32 %v4144, %v4306
    %4308 = vmatprep.mubr.f32.mxu0 0.0
    %4309 = vmatmul.mubr.f32.gmra.mrb[0].mxu0 %v4125
    %v4310 = vpop.f32.mrb[0].mxu0
    %v4311 = vadd.f32 %v4140, %v4310
    %v4312 = vpop.f32.mrb[0].mxu0
    %v4313 = vadd.f32 %v4144, %v4312
    %4314 = vmatprep.mubr.f32.mxu0 0.0
    %4315 = vmatmul.mubr.f32.gmra.mrb[0].mxu0 %v4126
    %v4316 = vpop.f32.mrb[0].mxu0
    %v4317 = vadd.f32 %v4140, %v4316
    %v4318 = vpop.f32.mrb[0].mxu0
    %v4319 = vadd.f32 %v4144, %v4318
    %4320 = vmatprep.mubr.f32.mxu0 0.0
    %4321 = vmatmul.mubr.f32.gmra.mrb[0].mxu0 %v4127
    %v4322 = vpop.f32.mrb[0].mxu0
    %v4323 = vadd.f32 %v4140, %v4322
    %v4324 = vpop.f32.mrb[0].mxu0
    %v4325 = vadd.f32 %v4144, %v4324
    %4326 = vdwg.mxu0
    %v4327 = vmul.f32 %v4216, %v4216
    %v4328 = vmul.f32 %v4218, %v4218
    %v4329 = vmul.f32 %v4305, %v4305
    %v4330 = vmul.f32 %v4307, %v4307
    %v4331 = vmul.f32 %v4222, %v4222
    %v4332 = vmul.f32 %v4224, %v4224
    %v4333 = vmul.f32 %v4311, %v4311
    %v4334 = vmul.f32 %v4313, %v4313
    %v4335 = vmul.f32 %v4228, %v4228
    %v4336 = vmul.f32 %v4230, %v4230
    %v4337 = vmul.f32 %v4317, %v4317
    %v4338 = vmul.f32 %v4319, %v4319
    %v4339 = vmul.f32 %v4234, %v4234
    %v4340 = vmul.f32 %v4236, %v4236
    %v4341 = vmul.f32 %v4323, %v4323
    %v4342 = vmul.f32 %v4325, %v4325
    %v4343 = vmul.f32 %v4216, %v4327
    %v4344 = vmul.f32 %v4218, %v4328
    %v4345 = vmul.f32 %v4305, %v4329
    %v4346 = vmul.f32 %v4307, %v4330
    %v4347 = vmul.f32 %v4222, %v4331
    %v4348 = vmul.f32 %v4224, %v4332
    %v4349 = vmul.f32 %v4311, %v4333
    %v4350 = vmul.f32 %v4313, %v4334
    %v4351 = vmul.f32 %v4228, %v4335
    %v4352 = vmul.f32 %v4230, %v4336
    %v4353 = vmul.f32 %v4317, %v4337
    %v4354 = vmul.f32 %v4319, %v4338
    %v4355 = vmul.f32 %v4234, %v4339
    %v4356 = vmul.f32 %v4236, %v4340
    %v4357 = vmul.f32 %v4323, %v4341
    %v4358 = vmul.f32 %v4325, %v4342
    %v4359 = vmul.f32 %v4343, 0.044715
    %v4360 = vmul.f32 %v4344, 0.044715
    %v4361 = vmul.f32 %v4345, 0.044715
    %v4362 = vmul.f32 %v4346, 0.044715
    %v4363 = vmul.f32 %v4347, 0.044715
    %v4364 = vmul.f32 %v4348, 0.044715
    %v4365 = vmul.f32 %v4349, 0.044715
    %v4366 = vmul.f32 %v4350, 0.044715
    %v4367 = vmul.f32 %v4351, 0.044715
    %v4368 = vmul.f32 %v4352, 0.044715
    %v4369 = vmul.f32 %v4353, 0.044715
    %v4370 = vmul.f32 %v4354, 0.044715
    %v4371 = vmul.f32 %v4355, 0.044715
    %v4372 = vmul.f32 %v4356, 0.044715
    %v4373 = vmul.f32 %v4357, 0.044715
    %v4374 = vmul.f32 %v4358, 0.044715
    %v4375 = vadd.f32 %v4216, %v4359
    %v4376 = vadd.f32 %v4218, %v4360
    %v4377 = vadd.f32 %v4305, %v4361
    %v4378 = vadd.f32 %v4307, %v4362
    %v4379 = vadd.f32 %v4222, %v4363
    %v4380 = vadd.f32 %v4224, %v4364
    %v4381 = vadd.f32 %v4311, %v4365
    %v4382 = vadd.f32 %v4313, %v4366
    %v4383 = vadd.f32 %v4228, %v4367
    %v4384 = vadd.f32 %v4230, %v4368
    %v4385 = vadd.f32 %v4317, %v4369
    %v4386 = vadd.f32 %v4319, %v4370
    %v4387 = vadd.f32 %v4234, %v4371
    %v4388 = vadd.f32 %v4236, %v4372
    %v4389 = vadd.f32 %v4323, %v4373
    %v4390 = vadd.f32 %v4325, %v4374
    %v4391 = vmul.f32 %v4375, 0.7978846
    %v4392 = vmul.f32 %v4376, 0.7978846
    %v4393 = vmul.f32 %v4377, 0.7978846
    %v4394 = vmul.f32 %v4378, 0.7978846
    %v4395 = vmul.f32 %v4379, 0.7978846
    %v4396 = vmul.f32 %v4380, 0.7978846
    %v4397 = vmul.f32 %v4381, 0.7978846
    %v4398 = vmul.f32 %v4382, 0.7978846
    %v4399 = vmul.f32 %v4383, 0.7978846
    %v4400 = vmul.f32 %v4384, 0.7978846
    %v4401 = vmul.f32 %v4385, 0.7978846
    %v4402 = vmul.f32 %v4386, 0.7978846
    %v4403 = vmul.f32 %v4387, 0.7978846
    %v4404 = vmul.f32 %v4388, 0.7978846
    %v4405 = vmul.f32 %v4389, 0.7978846
    %v4406 = vmul.f32 %v4390, 0.7978846
    %v4407 = vtanh.pop %v4391
    %v4408 = vtanh.pop %v4392
    %v4409 = vtanh.pop %v4393
    %v4410 = vtanh.pop %v4394
    %v4411 = vtanh.pop %v4395
    %v4412 = vtanh.pop %v4396
    %v4413 = vtanh.pop %v4397
    %v4414 = vtanh.pop %v4398
    %v4415 = vtanh.pop %v4399
    %v4416 = vtanh.pop %v4400
    %v4417 = vtanh.pop %v4401
    %v4418 = vtanh.pop %v4402
    %v4419 = vtanh.pop %v4403
    %v4420 = vtanh.pop %v4404
    %v4421 = vtanh.pop %v4405
    %v4422 = vtanh.pop %v4406
    %v4423 = vadd.f32 %v4407, 1.0
    %v4424 = vadd.f32 %v4408, 1.0
    %v4425 = vadd.f32 %v4409, 1.0
    %v4426 = vadd.f32 %v4410, 1.0
    %v4427 = vadd.f32 %v4411, 1.0
    %v4428 = vadd.f32 %v4412, 1.0
    %v4429 = vadd.f32 %v4413, 1.0
    %v4430 = vadd.f32 %v4414, 1.0
    %v4431 = vadd.f32 %v4415, 1.0
    %v4432 = vadd.f32 %v4416, 1.0
    %v4433 = vadd.f32 %v4417, 1.0
    %v4434 = vadd.f32 %v4418, 1.0
    %v4435 = vadd.f32 %v4419, 1.0
    %v4436 = vadd.f32 %v4420, 1.0
    %v4437 = vadd.f32 %v4421, 1.0
    %v4438 = vadd.f32 %v4422, 1.0
    %v4439 = vmul.f32 %v4423, 0.5
    %v4440 = vmul.f32 %v4424, 0.5
    %v4441 = vmul.f32 %v4425, 0.5
    %v4442 = vmul.f32 %v4426, 0.5
    %v4443 = vmul.f32 %v4427, 0.5
    %v4444 = vmul.f32 %v4428, 0.5
    %v4445 = vmul.f32 %v4429, 0.5
    %v4446 = vmul.f32 %v4430, 0.5
    %v4447 = vmul.f32 %v4431, 0.5
    %v4448 = vmul.f32 %v4432, 0.5
    %v4449 = vmul.f32 %v4433, 0.5
    %v4450 = vmul.f32 %v4434, 0.5
    %v4451 = vmul.f32 %v4435, 0.5
    %v4452 = vmul.f32 %v4436, 0.5
    %v4453 = vmul.f32 %v4437, 0.5
    %v4454 = vmul.f32 %v4438, 0.5
    %v4455 = vmul.f32 %v4216, %v4439
    %v4456 = vmul.f32 %v4218, %v4440
    %v4457 = vmul.f32 %v4305, %v4441
    %v4458 = vmul.f32 %v4307, %v4442
    %v4459 = vmul.f32 %v4222, %v4443
    %v4460 = vmul.f32 %v4224, %v4444
    %v4461 = vmul.f32 %v4311, %v4445
    %v4462 = vmul.f32 %v4313, %v4446
    %v4463 = vmul.f32 %v4228, %v4447
    %v4464 = vmul.f32 %v4230, %v4448
    %v4465 = vmul.f32 %v4317, %v4449
    %v4466 = vmul.f32 %v4319, %v4450
    %v4467 = vmul.f32 %v4234, %v4451
    %v4468 = vmul.f32 %v4236, %v4452
    %v4469 = vmul.f32 %v4323, %v4453
    %v4470 = vmul.f32 %v4325, %v4454
    %v4472 = vlaneseq
    %v4473 = vshrl.u32 %v4472, 7
    %v4474 = vsub.s32 0, %v4473
    %v4475 = vrot.slane %v2715, %v4474
    %4477 = vmatprep.subr.mxu0 0.0
    %4478 = vmatpush1.msra.mxu0 %v2651
    %4479 = vmatprep.subr.mxu0 0.0
    %4480 = vmatpush1.msra.mxu0 %v2652
    %4481 = vmatprep.subr.mxu0 0.0
    %4482 = vmatpush1.msra.mxu0 %v2653
    %4483 = vmatprep.subr.mxu0 0.0
    %4484 = vmatpush1.msra.mxu0 %v2654
    %4485 = vmatprep.subr.mxu0 0.0
    %4486 = vmatpush1.msra.mxu0 %v2655
    %4487 = vmatprep.subr.mxu0 0.0
    %4488 = vmatpush1.msra.mxu0 %v2656
    %4489 = vmatprep.subr.mxu0 0.0
    %4490 = vmatpush1.msra.mxu0 %v2657
    %4491 = vmatprep.subr.mxu0 0.0
    %4492 = vmatpush1.msra.mxu0 %v2658
    %4493 = vmatprep.subr.mxu0 0.0
    %4494 = vmatpush1.msra.mxu0 %v2659
    %4495 = vmatprep.subr.mxu0 0.0
    %4496 = vmatpush1.msra.mxu0 %v2660
    %4497 = vmatprep.subr.mxu0 0.0
    %4498 = vmatpush1.msra.mxu0 %v2661
    %4499 = vmatprep.subr.mxu0 0.0
    %4500 = vmatpush1.msra.mxu0 %v2662
    %4501 = vmatprep.subr.mxu0 0.0
    %4502 = vmatpush1.msra.mxu0 %v2663
    %4503 = vmatprep.subr.mxu0 0.0
    %4504 = vmatpush1.msra.mxu0 %v2664
    %4505 = vmatprep.subr.mxu0 0.0
    %4506 = vmatpush1.msra.mxu0 %v2665
    %4507 = vmatprep.subr.mxu0 0.0
    %4508 = vmatpush1.msra.mxu0 %v2666
    %4509 = vmatprep.subr.mxu0 0.0
    %4510 = vmatpush1.msra.mxu0 %v2667
    %4511 = vmatprep.subr.mxu0 0.0
    %4512 = vmatpush1.msra.mxu0 %v2668
    %4513 = vmatprep.subr.mxu0 0.0
    %4514 = vmatpush1.msra.mxu0 %v2669
    %4515 = vmatprep.subr.mxu0 0.0
    %4516 = vmatpush1.msra.mxu0 %v2670
    %4517 = vmatprep.subr.mxu0 0.0
    %4518 = vmatpush1.msra.mxu0 %v2671
    %4519 = vmatprep.subr.mxu0 0.0
    %4520 = vmatpush1.msra.mxu0 %v2672
    %4521 = vmatprep.subr.mxu0 0.0
    %4522 = vmatpush1.msra.mxu0 %v2673
    %4523 = vmatprep.subr.mxu0 0.0
    %4524 = vmatpush1.msra.mxu0 %v2674
    %4525 = vmatprep.subr.mxu0 0.0
    %4526 = vmatpush1.msra.mxu0 %v2675
    %4527 = vmatprep.subr.mxu0 0.0
    %4528 = vmatpush1.msra.mxu0 %v2676
    %4529 = vmatprep.subr.mxu0 0.0
    %4530 = vmatpush1.msra.mxu0 %v2677
    %4531 = vmatprep.subr.mxu0 0.0
    %4532 = vmatpush1.msra.mxu0 %v2678
    %4533 = vmatprep.subr.mxu0 0.0
    %4534 = vmatpush1.msra.mxu0 %v2679
    %4535 = vmatprep.subr.mxu0 0.0
    %4536 = vmatpush1.msra.mxu0 %v2680
    %4537 = vmatprep.subr.mxu0 0.0
    %4538 = vmatpush1.msra.mxu0 %v2681
    %4539 = vmatprep.subr.mxu0 0.0
    %4540 = vmatpush1.msra.mxu0 %v2682
    %4541 = vmatprep.mubr.f32.mxu0 %v4456
    %4542 = vmatmul.mubr.f32.gmra.mrb[0].mxu0 %v4455
    %v4543 = vpop.f32.mrb[0].mxu0
    %v4544 = vadd.f32 %v4475, %v4543
    %v4545 = vpop.f32.mrb[0].mxu0
    %4546 = vmatprep.mubr.f32.mxu0 %v4460
    %4547 = vmatmul.mubr.f32.gmra.mrb[0].mxu0 %v4459
    %v4548 = vpop.f32.mrb[0].mxu0
    %v4549 = vadd.f32 %v4475, %v4548
    %v4550 = vpop.f32.mrb[0].mxu0
    %4551 = vmatprep.mubr.f32.mxu0 %v4464
    %4552 = vmatmul.mubr.f32.gmra.mrb[0].mxu0 %v4463
    %v4553 = vpop.f32.mrb[0].mxu0
    %v4554 = vadd.f32 %v4475, %v4553
    %v4555 = vpop.f32.mrb[0].mxu0
    %4556 = vmatprep.mubr.f32.mxu0 %v4468
    %4557 = vmatmul.mubr.f32.gmra.mrb[0].mxu0 %v4467
    %v4558 = vpop.f32.mrb[0].mxu0
    %v4559 = vadd.f32 %v4475, %v4558
    %v4560 = vpop.f32.mrb[0].mxu0
    %4561 = vdwg.mxu0
    %4562 = vmatprep.subr.mxu0 0.0
    %4563 = vmatpush1.msra.mxu0 %v2683
    %4564 = vmatprep.subr.mxu0 0.0
    %4565 = vmatpush1.msra.mxu0 %v2684
    %4566 = vmatprep.subr.mxu0 0.0
    %4567 = vmatpush1.msra.mxu0 %v2685
    %4568 = vmatprep.subr.mxu0 0.0
    %4569 = vmatpush1.msra.mxu0 %v2686
    %4570 = vmatprep.subr.mxu0 0.0
    %4571 = vmatpush1.msra.mxu0 %v2687
    %4572 = vmatprep.subr.mxu0 0.0
    %4573 = vmatpush1.msra.mxu0 %v2688
    %4574 = vmatprep.subr.mxu0 0.0
    %4575 = vmatpush1.msra.mxu0 %v2689
    %4576 = vmatprep.subr.mxu0 0.0
    %4577 = vmatpush1.msra.mxu0 %v2690
    %4578 = vmatprep.subr.mxu0 0.0
    %4579 = vmatpush1.msra.mxu0 %v2691
    %4580 = vmatprep.subr.mxu0 0.0
    %4581 = vmatpush1.msra.mxu0 %v2692
    %4582 = vmatprep.subr.mxu0 0.0
    %4583 = vmatpush1.msra.mxu0 %v2693
    %4584 = vmatprep.subr.mxu0 0.0
    %4585 = vmatpush1.msra.mxu0 %v2694
    %4586 = vmatprep.subr.mxu0 0.0
    %4587 = vmatpush1.msra.mxu0 %v2695
    %4588 = vmatprep.subr.mxu0 0.0
    %4589 = vmatpush1.msra.mxu0 %v2696
    %4590 = vmatprep.subr.mxu0 0.0
    %4591 = vmatpush1.msra.mxu0 %v2697
    %4592 = vmatprep.subr.mxu0 0.0
    %4593 = vmatpush1.msra.mxu0 %v2698
    %4594 = vmatprep.subr.mxu0 0.0
    %4595 = vmatpush1.msra.mxu0 %v2699
    %4596 = vmatprep.subr.mxu0 0.0
    %4597 = vmatpush1.msra.mxu0 %v2700
    %4598 = vmatprep.subr.mxu0 0.0
    %4599 = vmatpush1.msra.mxu0 %v2701
    %4600 = vmatprep.subr.mxu0 0.0
    %4601 = vmatpush1.msra.mxu0 %v2702
    %4602 = vmatprep.subr.mxu0 0.0
    %4603 = vmatpush1.msra.mxu0 %v2703
    %4604 = vmatprep.subr.mxu0 0.0
    %4605 = vmatpush1.msra.mxu0 %v2704
    %4606 = vmatprep.subr.mxu0 0.0
    %4607 = vmatpush1.msra.mxu0 %v2705
    %4608 = vmatprep.subr.mxu0 0.0
    %4609 = vmatpush1.msra.mxu0 %v2706
    %4610 = vmatprep.subr.mxu0 0.0
    %4611 = vmatpush1.msra.mxu0 %v2707
    %4612 = vmatprep.subr.mxu0 0.0
    %4613 = vmatpush1.msra.mxu0 %v2708
    %4614 = vmatprep.subr.mxu0 0.0
    %4615 = vmatpush1.msra.mxu0 %v2709
    %4616 = vmatprep.subr.mxu0 0.0
    %4617 = vmatpush1.msra.mxu0 %v2710
    %4618 = vmatprep.subr.mxu0 0.0
    %4619 = vmatpush1.msra.mxu0 %v2711
    %4620 = vmatprep.subr.mxu0 0.0
    %4621 = vmatpush1.msra.mxu0 %v2712
    %4622 = vmatprep.subr.mxu0 0.0
    %4623 = vmatpush1.msra.mxu0 %v2713
    %4624 = vmatprep.subr.mxu0 0.0
    %4625 = vmatpush1.msra.mxu0 %v2714
    %4626 = vmatprep.mubr.f32.mxu0 %v4458
    %4627 = vmatmul.mubr.f32.gmra.mrb[0].mxu0 %v4457
    %v4628 = vpop.f32.mrb[0].mxu0
    %v4629 = vadd.f32 %v4544, %v4628
    %v4630 = vpop.f32.mrb[0].mxu0
    %4631 = vmatprep.mubr.f32.mxu0 %v4462
    %4632 = vmatmul.mubr.f32.gmra.mrb[0].mxu0 %v4461
    %v4633 = vpop.f32.mrb[0].mxu0
    %v4634 = vadd.f32 %v4549, %v4633
    %v4635 = vpop.f32.mrb[0].mxu0
    %4636 = vmatprep.mubr.f32.mxu0 %v4466
    %4637 = vmatmul.mubr.f32.gmra.mrb[0].mxu0 %v4465
    %v4638 = vpop.f32.mrb[0].mxu0
    %v4639 = vadd.f32 %v4554, %v4638
    %v4640 = vpop.f32.mrb[0].mxu0
    %4641 = vmatprep.mubr.f32.mxu0 %v4470
    %4642 = vmatmul.mubr.f32.gmra.mrb[0].mxu0 %v4469
    %v4643 = vpop.f32.mrb[0].mxu0
    %v4644 = vadd.f32 %v4559, %v4643
    %v4645 = vpop.f32.mrb[0].mxu0
    %4646 = vdwg.mxu0
    %v4647 = vadd.f32 %v4060, %v4629
    %v4648 = vadd.f32 %v4061, %v4634
    %v4649 = vadd.f32 %v4062, %v4639
    %v4650 = vadd.f32 %v4063, %v4644
    %v4651 = vld [vmem:[%s73] sm:$0x1]
    %v4652 = vld [vmem:[%s75] sm:$0x1]
    %4653 = vadd.xlane.f32.xlu0 %v4647
    %v4654 = vpop.xlane.xlu0 %4653
    %4655 = vadd.xlane.f32.xlu0 %v4648
    %v4656 = vpop.xlane.xlu0 %4655
    %4657 = vadd.xlane.f32.xlu0 %v4649
    %v4658 = vpop.xlane.xlu0 %4657
    %4659 = vadd.xlane.f32.xlu0 %v4650
    %v4660 = vpop.xlane.xlu0 %4659
    %v4661 = vmul.f32 %v4654, %v766
    %v4662 = vmul.f32 %v4656, %v766
    %v4663 = vmul.f32 %v4658, %v766
    %v4664 = vmul.f32 %v4660, %v766
    %v4665 = vsub.f32 %v4647, %v4661
    %v4666 = vsub.f32 %v4648, %v4662
    %v4667 = vsub.f32 %v4649, %v4663
    %v4668 = vsub.f32 %v4650, %v4664
    %v4669 = vmul.f32 %v4665, %v4665
    %v4670 = vmul.f32 %v4666, %v4666
    %v4671 = vmul.f32 %v4667, %v4667
    %v4672 = vmul.f32 %v4668, %v4668
    %4673 = vadd.xlane.f32.xlu0 %v4669
    %v4674 = vpop.xlane.xlu0 %4673
    %4675 = vadd.xlane.f32.xlu0 %v4670
    %v4676 = vpop.xlane.xlu0 %4675
    %4677 = vadd.xlane.f32.xlu0 %v4671
    %v4678 = vpop.xlane.xlu0 %4677
    %4679 = vadd.xlane.f32.xlu0 %v4672
    %v4680 = vpop.xlane.xlu0 %4679
    %v4681 = vmul.f32 %v4674, %v766
    %v4682 = vmul.f32 %v4676, %v766
    %v4683 = vmul.f32 %v4678, %v766
    %v4684 = vmul.f32 %v4680, %v766
    %v4685 = vadd.f32 %v4681, 1e-05
    %v4686 = vadd.f32 %v4682, 1e-05
    %v4687 = vadd.f32 %v4683, 1e-05
    %v4688 = vadd.f32 %v4684, 1e-05
    %v4689 = vrsqrt.pop %v4685
    %v4690 = vrsqrt.pop %v4686
    %v4691 = vrsqrt.pop %v4687
    %v4692 = vrsqrt.pop %v4688
    %v4693 = vmul.f32 %v4665, %v4689
    %v4694 = vmul.f32 %v4666, %v4690
    %v4695 = vmul.f32 %v4667, %v4691
    %v4696 = vmul.f32 %v4668, %v4692
    %v4698 = vlaneseq
    %v4699 = vshrl.u32 %v4698, 7
    %v4700 = vsub.s32 0, %v4699
    %v4701 = vrot.slane %v4651, %v4700
    %v4703 = vmul.f32 %v4693, %v4701
    %v4704 = vmul.f32 %v4694, %v4701
    %v4705 = vmul.f32 %v4695, %v4701
    %v4706 = vmul.f32 %v4696, %v4701
    %v4708 = vlaneseq
    %v4709 = vshrl.u32 %v4708, 7
    %v4710 = vsub.s32 0, %v4709
    %v4711 = vrot.slane %v4652, %v4710
    %v4713 = vadd.f32 %v4703, %v4711
    %v4714 = vadd.f32 %v4704, %v4711
    %v4715 = vadd.f32 %v4705, %v4711
    %v4716 = vadd.f32 %v4706, %v4711
    %v4717 = vld [vmem:[#allocation39] sm:$0xff]
    %v4718 = vld [vmem:[#allocation39 + $0x8] sm:$0xff]
    %v4719 = vld [vmem:[#allocation39 + $0x10] sm:$0xff]
    %v4720 = vld [vmem:[#allocation39 + $0x18] sm:$0xff]
    %v4721 = vld [vmem:[#allocation39 + $0x20] sm:$0xff]
    %v4722 = vld [vmem:[#allocation39 + $0x28] sm:$0xff]
    %v4723 = vld [vmem:[#allocation39 + $0x30] sm:$0xff]
    %v4724 = vld [vmem:[#allocation39 + $0x38] sm:$0xff]
    %v4725 = vld [vmem:[#allocation39 + $0x40] sm:$0xff]
    %v4726 = vld [vmem:[#allocation39 + $0x48] sm:$0xff]
    %v4727 = vld [vmem:[#allocation39 + $0x50] sm:$0xff]
    %v4728 = vld [vmem:[#allocation39 + $0x58] sm:$0xff]
    %v4729 = vld [vmem:[#allocation39 + $0x60] sm:$0xff]
    %v4730 = vld [vmem:[#allocation39 + $0x68] sm:$0xff]
    %v4731 = vld [vmem:[#allocation39 + $0x70] sm:$0xff]
    %v4732 = vld [vmem:[#allocation39 + $0x78] sm:$0xff]
    %v4733 = vld [vmem:[%s79] sm:$0x1]
    %v4735 = vlaneseq
    %v4736 = vshrl.u32 %v4735, 7
    %v4737 = vsub.s32 0, %v4736
    %v4738 = vrot.slane %v4733, %v4737
    %4740 = vmatprep.subr.mxu0 0.0
    %4741 = vmatpush1.msra.mxu0 %v4717
    %4742 = vmatprep.subr.mxu0 0.0
    %4743 = vmatpush1.msra.mxu0 %v4718
    %4744 = vmatprep.subr.mxu0 0.0
    %4745 = vmatpush1.msra.mxu0 %v4719
    %4746 = vmatprep.subr.mxu0 0.0
    %4747 = vmatpush1.msra.mxu0 %v4720
    %4748 = vmatprep.subr.mxu0 0.0
    %4749 = vmatpush1.msra.mxu0 %v4721
    %4750 = vmatprep.subr.mxu0 0.0
    %4751 = vmatpush1.msra.mxu0 %v4722
    %4752 = vmatprep.subr.mxu0 0.0
    %4753 = vmatpush1.msra.mxu0 %v4723
    %4754 = vmatprep.subr.mxu0 0.0
    %4755 = vmatpush1.msra.mxu0 %v4724
    %4756 = vmatprep.subr.mxu0 0.0
    %4757 = vmatpush1.msra.mxu0 %v4725
    %4758 = vmatprep.subr.mxu0 0.0
    %4759 = vmatpush1.msra.mxu0 %v4726
    %4760 = vmatprep.subr.mxu0 0.0
    %4761 = vmatpush1.msra.mxu0 %v4727
    %4762 = vmatprep.subr.mxu0 0.0
    %4763 = vmatpush1.msra.mxu0 %v4728
    %4764 = vmatprep.subr.mxu0 0.0
    %4765 = vmatpush1.msra.mxu0 %v4729
    %4766 = vmatprep.subr.mxu0 0.0
    %4767 = vmatpush1.msra.mxu0 %v4730
    %4768 = vmatprep.subr.mxu0 0.0
    %4769 = vmatpush1.msra.mxu0 %v4731
    %4770 = vmatprep.subr.mxu0 0.0
    %4771 = vmatpush1.msra.mxu0 %v4732
    %4772 = vmatprep.subr.mxu0 0.0
    %4773 = vmatpush1.msra.mxu0 0.0
    %4774 = vmatprep.subr.mxu0 0.0
    %4775 = vmatpush1.msra.mxu0 0.0
    %4776 = vmatprep.subr.mxu0 0.0
    %4777 = vmatpush1.msra.mxu0 0.0
    %4778 = vmatprep.subr.mxu0 0.0
    %4779 = vmatpush1.msra.mxu0 0.0
    %4780 = vmatprep.subr.mxu0 0.0
    %4781 = vmatpush1.msra.mxu0 0.0
    %4782 = vmatprep.subr.mxu0 0.0
    %4783 = vmatpush1.msra.mxu0 0.0
    %4784 = vmatprep.subr.mxu0 0.0
    %4785 = vmatpush1.msra.mxu0 0.0
    %4786 = vmatprep.subr.mxu0 0.0
    %4787 = vmatpush1.msra.mxu0 0.0
    %4788 = vmatprep.subr.mxu0 0.0
    %4789 = vmatpush1.msra.mxu0 0.0
    %4790 = vmatprep.subr.mxu0 0.0
    %4791 = vmatpush1.msra.mxu0 0.0
    %4792 = vmatprep.subr.mxu0 0.0
    %4793 = vmatpush1.msra.mxu0 0.0
    %4794 = vmatprep.subr.mxu0 0.0
    %4795 = vmatpush1.msra.mxu0 0.0
    %4796 = vmatprep.subr.mxu0 0.0
    %4797 = vmatpush1.msra.mxu0 0.0
    %4798 = vmatprep.subr.mxu0 0.0
    %4799 = vmatpush1.msra.mxu0 0.0
    %4800 = vmatprep.subr.mxu0 0.0
    %4801 = vmatpush1.msra.mxu0 0.0
    %4802 = vmatprep.subr.mxu0 0.0
    %4803 = vmatpush1.msra.mxu0 0.0
    %4804 = vmatprep.mubr.f32.mxu0 0.0
    %4805 = vmatmul.mubr.f32.gmra.mrb[0].mxu0 %v4713
    %v4806 = vpop.f32.mrb[0].mxu0
    %v4807 = vadd.f32 %v4738, %v4806
    %v4808 = vpop.f32.mrb[0].mxu0
    %4809 = vmatprep.mubr.f32.mxu0 0.0
    %4810 = vmatmul.mubr.f32.gmra.mrb[0].mxu0 %v4714
    %v4811 = vpop.f32.mrb[0].mxu0
    %v4812 = vadd.f32 %v4738, %v4811
    %v4813 = vpop.f32.mrb[0].mxu0
    %4814 = vmatprep.mubr.f32.mxu0 0.0
    %4815 = vmatmul.mubr.f32.gmra.mrb[0].mxu0 %v4715
    %v4816 = vpop.f32.mrb[0].mxu0
    %v4817 = vadd.f32 %v4738, %v4816
    %v4818 = vpop.f32.mrb[0].mxu0
    %4819 = vmatprep.mubr.f32.mxu0 0.0
    %4820 = vmatmul.mubr.f32.gmra.mrb[0].mxu0 %v4716
    %v4821 = vpop.f32.mrb[0].mxu0
    %v4822 = vadd.f32 %v4738, %v4821
    %v4823 = vpop.f32.mrb[0].mxu0
    %4824 = vdwg.mxu0
    %4825 = vst [vmem:[#allocation41] sm:$0xff] %v4807
    %4826 = vst [vmem:[#allocation41 + $0x8] sm:$0xff] %v4812
    %4827 = vst [vmem:[#allocation41 + $0x10] sm:$0xff] %v4817
    %4828 = vst [vmem:[#allocation41 + $0x18] sm:$0xff] %v4822
    // Predicated region
    $region258: #{alm_forward.1} parent=1 // pred_check
      _
    $region259: #{alm_forward.1} parent=1 // pred_check_branch
      %4830 = sbr.rel (0) target = $region261
    $region260: #{alm_forward.1} parent=1 // pred_region
      %s4832 = ssub.s32 512, 512
      %4833 = vsyncadd [#allocation5], %s4832
      %s4834 = sshll.u32 [#allocation41], 4
      %s4835 = int_to_ptr.vmem [resolvable:$true] %s4834
      %4840 = dma.vmem_to_hbm [thread:$0]  %s4835, 512, %s81, [#allocation5], 128, 128, 8
    $region261: #{alm_forward.1} parent=1 // pred_fallthru
      _
    // Predicated region
    $region262: #{alm_forward.1} parent=1 // pred_check
      _
    $region263: #{alm_forward.1} parent=1 // pred_check_branch
      %4842 = sbr.rel (0) target = $region265
    $region264: #{alm_forward.1} parent=1 // pred_region
      %4843 = dma.done [#allocation5], 512
    $region265: #{alm_forward.1} parent=1 // pred_fallthru
      _
    %4844 = vsyncpa [#allocation4], 1
    %4845 = vsyncpa [#allocation7], 1
    %4846 = vsyncpa [#allocation10], 1
    %4847 = vsyncpa [#allocation13], 1
    %4848 = vsyncpa [#allocation16], 1
    %4849 = vsyncpa [#allocation19], 1
    %4850 = vsyncpa [#allocation22], 1
    %4851 = vsyncpa [#allocation25], 1
    %4852 = vsyncpa [#allocation28], 1
    %4853 = vsyncpa [#allocation31], 1
    %4854 = vsyncpa [#allocation34], 1
    %4855 = vsyncpa [#allocation37], 1
    %4856 = vsyncpa [#allocation40], 1
    %4857 = vsyncpa [#allocation5], 1

</llo_original>
